<compile_context>
chip_gen: v6e
topology: v6e:2x2x1
jax: 0.10.0
libtpu: 0.0.40
codegen_flags: <defaults>
</compile_context>

<pallas_src>
import jax
import jax.numpy as jnp
from jax import lax
from jax.experimental import pallas as pl
from jax.experimental.pallas import tpu as pltpu


# ----------------------------------------------------------------------------
# Kernel
# ----------------------------------------------------------------------------
def gru_kernel(tok_ref, emb_ref, wih_ref, whh_ref, bih_ref, bhh_ref,
               wfc_ref, bfc_ref, out_ref):
    TB = out_ref.shape[0]             # batch rows in this block
    T = tok_ref.shape[0] // TB        # sequence length (tokens are (TB*T, 1))
    V = emb_ref.shape[0]              # padded vocab
    H = whh_ref.shape[0]              # padded hidden (lane-aligned, e.g. 128)
    H3 = whh_ref.shape[1]             # 3 * H, gate layout [r | z | n]

    # ---- hoisted input path: all timesteps in one MXU pass -------------------
    # Fused embedding->gate table: P[v, :] = emb[v] @ W_ih          (V, 3H)
    P = jnp.dot(emb_ref[...], wih_ref[...], preferred_element_type=jnp.float32)

    # In-kernel one-hot (VMEM only); rows are batch-major: row = b*T + t.
    tok = tok_ref[...]                                             # (TB*T, 1) i32
    oh = (tok == lax.broadcasted_iota(jnp.int32, (TB * T, V), 1)
          ).astype(jnp.float32)                                    # (TB*T, V)

    # Input gate pre-activations for every timestep, b_ih folded in once.
    gx_all = (jnp.dot(oh, P, preferred_element_type=jnp.float32)
              + bih_ref[...]).reshape(TB, T, H3)                   # (TB, T, 3H)

    # ---- hoisted loop invariants ---------------------------------------------
    whh = whh_ref[...]
    bhh_b = jnp.broadcast_to(bhh_ref[...], (TB, H3))               # broadcast once

    # ---- serial recurrence: only h @ W_hh per step (statically unrolled) -----
    h = jnp.zeros((TB, H), dtype=jnp.float32)
    for t in range(T):                                             # static unroll
        gx = gx_all[:, t, :]                                       # static slice
        gh = jnp.dot(h, whh, preferred_element_type=jnp.float32) + bhh_b
        r = jax.nn.sigmoid(gx[:, 0 * H:1 * H] + gh[:, 0 * H:1 * H])
        z = jax.nn.sigmoid(gx[:, 1 * H:2 * H] + gh[:, 1 * H:2 * H])
        n = jnp.tanh(gx[:, 2 * H:3 * H] + r * gh[:, 2 * H:3 * H])
        h = (1.0 - z) * n + z * h

    # ---- final classifier: lane-dense (TB, C_pad) store -----------------------
    out_ref[...] = (jnp.dot(h, wfc_ref[...], preferred_element_type=jnp.float32)
                    + bfc_ref[...])


# ----------------------------------------------------------------------------
# Wrapper: pad to TPU-friendly shapes, grid over batch, slice padding back off.
# ----------------------------------------------------------------------------
def _round_up(x, m):
    return (x + m - 1) // m * m


def _pad_to(x, shape):
    return jnp.pad(x, [(0, s - d) for s, d in zip(shape, x.shape)])


def name_gru_forward(tokens, params, *, batch_block=8):
    """tokens: (B, T) int32.  Returns (B, n_classes) float32 logits."""
    emb, wih, whh, bih, bhh, wfc, bfc = params
    B, T = tokens.shape
    V, E = emb.shape
    H = whh.shape[0]
    C = wfc.shape[1]

    # Padded sizes: lane dims to 128 (gate slices / logits lane-aligned),
    # batch to a multiple of the sublane-aligned batch block.
    H_pad = _round_up(H, 128)
    V_pad = _round_up(V, 128)
    C_pad = _round_up(C, 128)
    B_pad = _round_up(B, batch_block)

    def pad_gated(w, lead_pad):
        # (K, 3H) -> (K_pad, 3*H_pad) with per-gate zero padding (layout [r|z|n]).
        k = w.shape[0]
        w3 = w.reshape(k, 3, H)
        out = jnp.zeros((lead_pad, 3, H_pad), w.dtype).at[:k, :, :H].set(w3)
        return out.reshape(lead_pad, 3 * H_pad)

    emb_p = _pad_to(emb, (V_pad, E))
    wih_p = pad_gated(wih, E)
    whh_p = pad_gated(whh, H_pad)
    bih_p = pad_gated(bih, 1)
    bhh_p = pad_gated(bhh, 1)
    wfc_p = _pad_to(wfc, (H_pad, C_pad))
    bfc_p = _pad_to(bfc, (1, C_pad))

    # Pad batch with token 0 (= padding_idx) and flatten to (B_pad*T, 1) int32
    # so each batch block's tokens are a contiguous sublane-aligned slab.
    tok_p = _pad_to(tokens, (B_pad, T)).reshape(B_pad * T, 1)

    grid = (B_pad // batch_block,)
    rep = lambda i: (0, 0)   # weights replicated across batch blocks

    out_padded = pl.pallas_call(
        gru_kernel,
        out_shape=jax.ShapeDtypeStruct((B_pad, C_pad), jnp.float32),
        grid=grid,
        in_specs=[
            pl.BlockSpec((batch_block * T, 1), lambda i: (i, 0)),   # tokens
            pl.BlockSpec((V_pad, E), rep),                          # embedding
            pl.BlockSpec((E, 3 * H_pad), rep),                      # W_ih
            pl.BlockSpec((H_pad, 3 * H_pad), rep),                  # W_hh
            pl.BlockSpec((1, 3 * H_pad), rep),                      # b_ih
            pl.BlockSpec((1, 3 * H_pad), rep),                      # b_hh
            pl.BlockSpec((H_pad, C_pad), rep),                      # W_fc
            pl.BlockSpec((1, C_pad), rep),                          # b_fc
        ],
        out_specs=pl.BlockSpec((batch_block, C_pad), lambda i: (i, 0)),
        compiler_params=pltpu.CompilerParams(
            dimension_semantics=("parallel",)),
    )(tok_p, emb_p, wih_p, whh_p, bih_p, bhh_p, wfc_p, bfc_p)

    return out_padded[:B, :C]


# ----------------------------------------------------------------------------
# Params + pure-JAX reference (mirrors torch nn.GRU, gate order r, z, n)
# ----------------------------------------------------------------------------
def init_params(key, vocab_size, embed_dim=10, hidden_dim=16, n_classes=2):
    ks = jax.random.split(key, 7)
    s = 0.1
    emb = s * jax.random.normal(ks[0], (vocab_size, embed_dim), jnp.float32)
    emb = emb.at[0].set(0.0)                              # padding_idx=0
    wih = s * jax.random.normal(ks[1], (embed_dim, 3 * hidden_dim), jnp.float32)
    whh = s * jax.random.normal(ks[2], (hidden_dim, 3 * hidden_dim), jnp.float32)
    bih = s * jax.random.normal(ks[3], (1, 3 * hidden_dim), jnp.float32)
    bhh = s * jax.random.normal(ks[4], (1, 3 * hidden_dim), jnp.float32)
    wfc = s * jax.random.normal(ks[5], (hidden_dim, n_classes), jnp.float32)
    bfc = s * jax.random.normal(ks[6], (1, n_classes), jnp.float32)
    return emb, wih, whh, bih, bhh, wfc, bfc


def reference_forward(tokens, params):
    emb, wih, whh, bih, bhh, wfc, bfc = params
    x = emb[tokens]                                       # (B, T, E)
    B, T, _ = x.shape
    H = whh.shape[0]
    h = jnp.zeros((B, H), jnp.float32)
    for t in range(T):
        gx = x[:, t] @ wih + bih
        gh = h @ whh + bhh
        r = jax.nn.sigmoid(gx[:, :H] + gh[:, :H])
        z = jax.nn.sigmoid(gx[:, H:2 * H] + gh[:, H:2 * H])
        n = jnp.tanh(gx[:, 2 * H:] + r * gh[:, 2 * H:])
        h = (1.0 - z) * n + z * h
    return h @ wfc + bfc


if __name__ == "__main__":
    data = [('Ivanov', 0), ('Petrov', 0), ('Sidorov', 0),
            ('Smith', 1), ('Johnson', 1), ('Williams', 1)]
    chars = sorted(set(''.join(name for name, _ in data)))   # sorted for determinism
    stoi = {ch: i + 1 for i, ch in enumerate(chars)}
    vocab_size = len(stoi) + 1

    max_len = max(len(name) for name, _ in data)              # T = 8
    tokens = jnp.array(
        [[stoi[c] for c in name] + [0] * (max_len - len(name)) for name, _ in data],
        dtype=jnp.int32)                                      # (B=6, T=8)

    params = init_params(jax.random.PRNGKey(0), vocab_size,
                         embed_dim=10, hidden_dim=16, n_classes=2)

    out = jax.block_until_ready(name_gru_forward(tokens, params))
    ref = reference_forward(tokens, params)

    assert out.shape == (tokens.shape[0], 2)
    assert jnp.allclose(out, ref, atol=1e-4, rtol=1e-4), (out, ref)
    print("KERNEL_OK")
</pallas_src>

<mosaic_0001>
module attributes {stable_mosaic.version = 11 : i64} {
  func.func @gru_kernel(%arg0: i32, %arg1: memref<64x1xi32, #tpu.memory_space<vmem>>, %arg2: memref<128x10xf32, #tpu.memory_space<vmem>>, %arg3: memref<10x384xf32, #tpu.memory_space<vmem>>, %arg4: memref<128x384xf32, #tpu.memory_space<vmem>>, %arg5: memref<1x384xf32, #tpu.memory_space<vmem>>, %arg6: memref<1x384xf32, #tpu.memory_space<vmem>>, %arg7: memref<128x128xf32, #tpu.memory_space<vmem>>, %arg8: memref<1x128xf32, #tpu.memory_space<vmem>>, %arg9: memref<8x128xf32, #tpu.memory_space<vmem>>) attributes {dimension_semantics = [#tpu.dimension_semantics<parallel>], iteration_bounds = array<i64: 1>, scalar_prefetch = 0 : i64, scratch_operands = 0 : i64, tpu.core_type = #tpu.core_type<tc>, window_params = [{transform_indices = @transform_0, window_bounds = array<i64: 64, 1>}, {pipeline_mode = #tpu.pipeline_mode<synchronous>, transform_indices = @transform_1, window_bounds = array<i64: 128, 10>}, {pipeline_mode = #tpu.pipeline_mode<synchronous>, transform_indices = @transform_2, window_bounds = array<i64: 10, 384>}, {pipeline_mode = #tpu.pipeline_mode<synchronous>, transform_indices = @transform_3, window_bounds = array<i64: 128, 384>}, {pipeline_mode = #tpu.pipeline_mode<synchronous>, transform_indices = @transform_4, window_bounds = array<i64: 1, 384>}, {pipeline_mode = #tpu.pipeline_mode<synchronous>, transform_indices = @transform_5, window_bounds = array<i64: 1, 384>}, {pipeline_mode = #tpu.pipeline_mode<synchronous>, transform_indices = @transform_6, window_bounds = array<i64: 128, 128>}, {pipeline_mode = #tpu.pipeline_mode<synchronous>, transform_indices = @transform_7, window_bounds = array<i64: 1, 128>}, {transform_indices = @transform_8, window_bounds = array<i64: 8, 128>}]} {
    %c0 = arith.constant 0 : index
    %c0_0 = arith.constant 0 : index
    %0 = vector.load %arg2[%c0, %c0_0] : memref<128x10xf32, #tpu.memory_space<vmem>>, vector<128x10xf32>
    %c0_1 = arith.constant 0 : index
    %c0_2 = arith.constant 0 : index
    %1 = vector.load %arg3[%c0_1, %c0_2] : memref<10x384xf32, #tpu.memory_space<vmem>>, vector<10x384xf32>
    %cst = arith.constant dense<0.000000e+00> : vector<128x384xf32>
    %2 = tpu.matmul %0, %1, %cst {dimension_numbers = #tpu.dot_dimension_numbers<[1], [0], [0], [1], [0, 0, 1, 1], [], []>} : vector<128x10xf32>, vector<10x384xf32>, vector<128x384xf32> -> vector<128x384xf32>
    %c0_3 = arith.constant 0 : index
    %c0_4 = arith.constant 0 : index
    %3 = vector.load %arg1[%c0_3, %c0_4] : memref<64x1xi32, #tpu.memory_space<vmem>>, vector<64x1xi32>
    %4 = tpu.iota {dimensions = array<i32: 1>} : vector<64x128xi32>
    %5 = vector.broadcast %3 : vector<64x1xi32> to vector<64x128xi32>
    %6 = arith.cmpi eq, %5, %4 : vector<64x128xi32>
    %7 = arith.extui %6 : vector<64x128xi1> to vector<64x128xi32>
    %8 = arith.sitofp %7 : vector<64x128xi32> to vector<64x128xf32>
    %cst_5 = arith.constant dense<0.000000e+00> : vector<64x384xf32>
    %9 = tpu.matmul %8, %2, %cst_5 {dimension_numbers = #tpu.dot_dimension_numbers<[1], [0], [0], [1], [0, 0, 1, 1], [], []>} : vector<64x128xf32>, vector<128x384xf32>, vector<64x384xf32> -> vector<64x384xf32>
    %c0_6 = arith.constant 0 : index
    %c0_7 = arith.constant 0 : index
    %10 = vector.load %arg5[%c0_6, %c0_7] : memref<1x384xf32, #tpu.memory_space<vmem>>, vector<1x384xf32>
    %11 = vector.broadcast %10 : vector<1x384xf32> to vector<64x384xf32>
    %12 = arith.addf %9, %11 : vector<64x384xf32>
    %13 = vector.shape_cast %12 : vector<64x384xf32> to vector<8x8x384xf32>
    %c0_8 = arith.constant 0 : index
    %c0_9 = arith.constant 0 : index
    %14 = vector.load %arg4[%c0_8, %c0_9] : memref<128x384xf32, #tpu.memory_space<vmem>>, vector<128x384xf32>
    %c0_10 = arith.constant 0 : index
    %c0_11 = arith.constant 0 : index
    %15 = vector.load %arg6[%c0_10, %c0_11] : memref<1x384xf32, #tpu.memory_space<vmem>>, vector<1x384xf32>
    %16 = vector.shape_cast %15 : vector<1x384xf32> to vector<1x384xf32>
    %17 = vector.broadcast %16 : vector<1x384xf32> to vector<8x384xf32>
    %cst_12 = arith.constant 0.000000e+00 : f32
    %18 = vector.broadcast %cst_12 : f32 to vector<8x128xf32>
    %19 = vector.extract_strided_slice %13 {offsets = [0, 0, 0], sizes = [8, 1, 384], strides = [1, 1, 1]} : vector<8x8x384xf32> to vector<8x1x384xf32>
    %20 = vector.shape_cast %19 : vector<8x1x384xf32> to vector<8x384xf32>
    %cst_13 = arith.constant dense<0.000000e+00> : vector<8x384xf32>
    %21 = tpu.matmul %18, %14, %cst_13 {dimension_numbers = #tpu.dot_dimension_numbers<[1], [0], [0], [1], [0, 0, 1, 1], [], []>} : vector<8x128xf32>, vector<128x384xf32>, vector<8x384xf32> -> vector<8x384xf32>
    %22 = arith.addf %21, %17 : vector<8x384xf32>
    %23 = vector.extract_strided_slice %20 {offsets = [0, 0], sizes = [8, 128], strides = [1, 1]} : vector<8x384xf32> to vector<8x128xf32>
    %24 = vector.extract_strided_slice %22 {offsets = [0, 0], sizes = [8, 128], strides = [1, 1]} : vector<8x384xf32> to vector<8x128xf32>
    %25 = arith.addf %23, %24 : vector<8x128xf32>
    %26 = arith.negf %25 : vector<8x128xf32>
    %27 = math.exp %26 : vector<8x128xf32>
    %cst_14 = arith.constant 1.000000e+00 : f32
    %28 = vector.broadcast %cst_14 : f32 to vector<8x128xf32>
    %29 = arith.addf %28, %27 : vector<8x128xf32>
    %30 = arith.divf %28, %29 : vector<8x128xf32>
    %31 = vector.extract_strided_slice %20 {offsets = [0, 128], sizes = [8, 128], strides = [1, 1]} : vector<8x384xf32> to vector<8x128xf32>
    %32 = vector.extract_strided_slice %22 {offsets = [0, 128], sizes = [8, 128], strides = [1, 1]} : vector<8x384xf32> to vector<8x128xf32>
    %33 = arith.addf %31, %32 : vector<8x128xf32>
    %34 = arith.negf %33 : vector<8x128xf32>
    %35 = math.exp %34 : vector<8x128xf32>
    %cst_15 = arith.constant 1.000000e+00 : f32
    %36 = vector.broadcast %cst_15 : f32 to vector<8x128xf32>
    %37 = arith.addf %36, %35 : vector<8x128xf32>
    %38 = arith.divf %36, %37 : vector<8x128xf32>
    %39 = vector.extract_strided_slice %20 {offsets = [0, 256], sizes = [8, 128], strides = [1, 1]} : vector<8x384xf32> to vector<8x128xf32>
    %40 = vector.extract_strided_slice %22 {offsets = [0, 256], sizes = [8, 128], strides = [1, 1]} : vector<8x384xf32> to vector<8x128xf32>
    %41 = arith.mulf %30, %40 : vector<8x128xf32>
    %42 = arith.addf %39, %41 : vector<8x128xf32>
    %43 = math.tanh %42 : vector<8x128xf32>
    %cst_16 = arith.constant 1.000000e+00 : f32
    %44 = vector.broadcast %cst_16 : f32 to vector<8x128xf32>
    %45 = arith.subf %44, %38 : vector<8x128xf32>
    %46 = arith.mulf %45, %43 : vector<8x128xf32>
    %47 = arith.mulf %38, %18 : vector<8x128xf32>
    %48 = arith.addf %46, %47 : vector<8x128xf32>
    %49 = vector.extract_strided_slice %13 {offsets = [0, 1, 0], sizes = [8, 1, 384], strides = [1, 1, 1]} : vector<8x8x384xf32> to vector<8x1x384xf32>
    %50 = vector.shape_cast %49 : vector<8x1x384xf32> to vector<8x384xf32>
    %cst_17 = arith.constant dense<0.000000e+00> : vector<8x384xf32>
    %51 = tpu.matmul %48, %14, %cst_17 {dimension_numbers = #tpu.dot_dimension_numbers<[1], [0], [0], [1], [0, 0, 1, 1], [], []>} : vector<8x128xf32>, vector<128x384xf32>, vector<8x384xf32> -> vector<8x384xf32>
    %52 = arith.addf %51, %17 : vector<8x384xf32>
    %53 = vector.extract_strided_slice %50 {offsets = [0, 0], sizes = [8, 128], strides = [1, 1]} : vector<8x384xf32> to vector<8x128xf32>
    %54 = vector.extract_strided_slice %52 {offsets = [0, 0], sizes = [8, 128], strides = [1, 1]} : vector<8x384xf32> to vector<8x128xf32>
    %55 = arith.addf %53, %54 : vector<8x128xf32>
    %56 = arith.negf %55 : vector<8x128xf32>
    %57 = math.exp %56 : vector<8x128xf32>
    %cst_18 = arith.constant 1.000000e+00 : f32
    %58 = vector.broadcast %cst_18 : f32 to vector<8x128xf32>
    %59 = arith.addf %58, %57 : vector<8x128xf32>
    %60 = arith.divf %58, %59 : vector<8x128xf32>
    %61 = vector.extract_strided_slice %50 {offsets = [0, 128], sizes = [8, 128], strides = [1, 1]} : vector<8x384xf32> to vector<8x128xf32>
    %62 = vector.extract_strided_slice %52 {offsets = [0, 128], sizes = [8, 128], strides = [1, 1]} : vector<8x384xf32> to vector<8x128xf32>
    %63 = arith.addf %61, %62 : vector<8x128xf32>
    %64 = arith.negf %63 : vector<8x128xf32>
    %65 = math.exp %64 : vector<8x128xf32>
    %cst_19 = arith.constant 1.000000e+00 : f32
    %66 = vector.broadcast %cst_19 : f32 to vector<8x128xf32>
    %67 = arith.addf %66, %65 : vector<8x128xf32>
    %68 = arith.divf %66, %67 : vector<8x128xf32>
    %69 = vector.extract_strided_slice %50 {offsets = [0, 256], sizes = [8, 128], strides = [1, 1]} : vector<8x384xf32> to vector<8x128xf32>
    %70 = vector.extract_strided_slice %52 {offsets = [0, 256], sizes = [8, 128], strides = [1, 1]} : vector<8x384xf32> to vector<8x128xf32>
    %71 = arith.mulf %60, %70 : vector<8x128xf32>
    %72 = arith.addf %69, %71 : vector<8x128xf32>
    %73 = math.tanh %72 : vector<8x128xf32>
    %cst_20 = arith.constant 1.000000e+00 : f32
    %74 = vector.broadcast %cst_20 : f32 to vector<8x128xf32>
    %75 = arith.subf %74, %68 : vector<8x128xf32>
    %76 = arith.mulf %75, %73 : vector<8x128xf32>
    %77 = arith.mulf %68, %48 : vector<8x128xf32>
    %78 = arith.addf %76, %77 : vector<8x128xf32>
    %79 = vector.extract_strided_slice %13 {offsets = [0, 2, 0], sizes = [8, 1, 384], strides = [1, 1, 1]} : vector<8x8x384xf32> to vector<8x1x384xf32>
    %80 = vector.shape_cast %79 : vector<8x1x384xf32> to vector<8x384xf32>
    %cst_21 = arith.constant dense<0.000000e+00> : vector<8x384xf32>
    %81 = tpu.matmul %78, %14, %cst_21 {dimension_numbers = #tpu.dot_dimension_numbers<[1], [0], [0], [1], [0, 0, 1, 1], [], []>} : vector<8x128xf32>, vector<128x384xf32>, vector<8x384xf32> -> vector<8x384xf32>
    %82 = arith.addf %81, %17 : vector<8x384xf32>
    %83 = vector.extract_strided_slice %80 {offsets = [0, 0], sizes = [8, 128], strides = [1, 1]} : vector<8x384xf32> to vector<8x128xf32>
    %84 = vector.extract_strided_slice %82 {offsets = [0, 0], sizes = [8, 128], strides = [1, 1]} : vector<8x384xf32> to vector<8x128xf32>
    %85 = arith.addf %83, %84 : vector<8x128xf32>
    %86 = arith.negf %85 : vector<8x128xf32>
    %87 = math.exp %86 : vector<8x128xf32>
    %cst_22 = arith.constant 1.000000e+00 : f32
    %88 = vector.broadcast %cst_22 : f32 to vector<8x128xf32>
    %89 = arith.addf %88, %87 : vector<8x128xf32>
    %90 = arith.divf %88, %89 : vector<8x128xf32>
    %91 = vector.extract_strided_slice %80 {offsets = [0, 128], sizes = [8, 128], strides = [1, 1]} : vector<8x384xf32> to vector<8x128xf32>
    %92 = vector.extract_strided_slice %82 {offsets = [0, 128], sizes = [8, 128], strides = [1, 1]} : vector<8x384xf32> to vector<8x128xf32>
    %93 = arith.addf %91, %92 : vector<8x128xf32>
    %94 = arith.negf %93 : vector<8x128xf32>
    %95 = math.exp %94 : vector<8x128xf32>
    %cst_23 = arith.constant 1.000000e+00 : f32
    %96 = vector.broadcast %cst_23 : f32 to vector<8x128xf32>
    %97 = arith.addf %96, %95 : vector<8x128xf32>
    %98 = arith.divf %96, %97 : vector<8x128xf32>
    %99 = vector.extract_strided_slice %80 {offsets = [0, 256], sizes = [8, 128], strides = [1, 1]} : vector<8x384xf32> to vector<8x128xf32>
    %100 = vector.extract_strided_slice %82 {offsets = [0, 256], sizes = [8, 128], strides = [1, 1]} : vector<8x384xf32> to vector<8x128xf32>
    %101 = arith.mulf %90, %100 : vector<8x128xf32>
    %102 = arith.addf %99, %101 : vector<8x128xf32>
    %103 = math.tanh %102 : vector<8x128xf32>
    %cst_24 = arith.constant 1.000000e+00 : f32
    %104 = vector.broadcast %cst_24 : f32 to vector<8x128xf32>
    %105 = arith.subf %104, %98 : vector<8x128xf32>
    %106 = arith.mulf %105, %103 : vector<8x128xf32>
    %107 = arith.mulf %98, %78 : vector<8x128xf32>
    %108 = arith.addf %106, %107 : vector<8x128xf32>
    %109 = vector.extract_strided_slice %13 {offsets = [0, 3, 0], sizes = [8, 1, 384], strides = [1, 1, 1]} : vector<8x8x384xf32> to vector<8x1x384xf32>
    %110 = vector.shape_cast %109 : vector<8x1x384xf32> to vector<8x384xf32>
    %cst_25 = arith.constant dense<0.000000e+00> : vector<8x384xf32>
    %111 = tpu.matmul %108, %14, %cst_25 {dimension_numbers = #tpu.dot_dimension_numbers<[1], [0], [0], [1], [0, 0, 1, 1], [], []>} : vector<8x128xf32>, vector<128x384xf32>, vector<8x384xf32> -> vector<8x384xf32>
    %112 = arith.addf %111, %17 : vector<8x384xf32>
    %113 = vector.extract_strided_slice %110 {offsets = [0, 0], sizes = [8, 128], strides = [1, 1]} : vector<8x384xf32> to vector<8x128xf32>
    %114 = vector.extract_strided_slice %112 {offsets = [0, 0], sizes = [8, 128], strides = [1, 1]} : vector<8x384xf32> to vector<8x128xf32>
    %115 = arith.addf %113, %114 : vector<8x128xf32>
    %116 = arith.negf %115 : vector<8x128xf32>
    %117 = math.exp %116 : vector<8x128xf32>
    %cst_26 = arith.constant 1.000000e+00 : f32
    %118 = vector.broadcast %cst_26 : f32 to vector<8x128xf32>
    %119 = arith.addf %118, %117 : vector<8x128xf32>
    %120 = arith.divf %118, %119 : vector<8x128xf32>
    %121 = vector.extract_strided_slice %110 {offsets = [0, 128], sizes = [8, 128], strides = [1, 1]} : vector<8x384xf32> to vector<8x128xf32>
    %122 = vector.extract_strided_slice %112 {offsets = [0, 128], sizes = [8, 128], strides = [1, 1]} : vector<8x384xf32> to vector<8x128xf32>
    %123 = arith.addf %121, %122 : vector<8x128xf32>
    %124 = arith.negf %123 : vector<8x128xf32>
    %125 = math.exp %124 : vector<8x128xf32>
    %cst_27 = arith.constant 1.000000e+00 : f32
    %126 = vector.broadcast %cst_27 : f32 to vector<8x128xf32>
    %127 = arith.addf %126, %125 : vector<8x128xf32>
    %128 = arith.divf %126, %127 : vector<8x128xf32>
    %129 = vector.extract_strided_slice %110 {offsets = [0, 256], sizes = [8, 128], strides = [1, 1]} : vector<8x384xf32> to vector<8x128xf32>
    %130 = vector.extract_strided_slice %112 {offsets = [0, 256], sizes = [8, 128], strides = [1, 1]} : vector<8x384xf32> to vector<8x128xf32>
    %131 = arith.mulf %120, %130 : vector<8x128xf32>
    %132 = arith.addf %129, %131 : vector<8x128xf32>
    %133 = math.tanh %132 : vector<8x128xf32>
    %cst_28 = arith.constant 1.000000e+00 : f32
    %134 = vector.broadcast %cst_28 : f32 to vector<8x128xf32>
    %135 = arith.subf %134, %128 : vector<8x128xf32>
    %136 = arith.mulf %135, %133 : vector<8x128xf32>
    %137 = arith.mulf %128, %108 : vector<8x128xf32>
    %138 = arith.addf %136, %137 : vector<8x128xf32>
    %139 = vector.extract_strided_slice %13 {offsets = [0, 4, 0], sizes = [8, 1, 384], strides = [1, 1, 1]} : vector<8x8x384xf32> to vector<8x1x384xf32>
    %140 = vector.shape_cast %139 : vector<8x1x384xf32> to vector<8x384xf32>
    %cst_29 = arith.constant dense<0.000000e+00> : vector<8x384xf32>
    %141 = tpu.matmul %138, %14, %cst_29 {dimension_numbers = #tpu.dot_dimension_numbers<[1], [0], [0], [1], [0, 0, 1, 1], [], []>} : vector<8x128xf32>, vector<128x384xf32>, vector<8x384xf32> -> vector<8x384xf32>
    %142 = arith.addf %141, %17 : vector<8x384xf32>
    %143 = vector.extract_strided_slice %140 {offsets = [0, 0], sizes = [8, 128], strides = [1, 1]} : vector<8x384xf32> to vector<8x128xf32>
    %144 = vector.extract_strided_slice %142 {offsets = [0, 0], sizes = [8, 128], strides = [1, 1]} : vector<8x384xf32> to vector<8x128xf32>
    %145 = arith.addf %143, %144 : vector<8x128xf32>
    %146 = arith.negf %145 : vector<8x128xf32>
    %147 = math.exp %146 : vector<8x128xf32>
    %cst_30 = arith.constant 1.000000e+00 : f32
    %148 = vector.broadcast %cst_30 : f32 to vector<8x128xf32>
    %149 = arith.addf %148, %147 : vector<8x128xf32>
    %150 = arith.divf %148, %149 : vector<8x128xf32>
    %151 = vector.extract_strided_slice %140 {offsets = [0, 128], sizes = [8, 128], strides = [1, 1]} : vector<8x384xf32> to vector<8x128xf32>
    %152 = vector.extract_strided_slice %142 {offsets = [0, 128], sizes = [8, 128], strides = [1, 1]} : vector<8x384xf32> to vector<8x128xf32>
    %153 = arith.addf %151, %152 : vector<8x128xf32>
    %154 = arith.negf %153 : vector<8x128xf32>
    %155 = math.exp %154 : vector<8x128xf32>
    %cst_31 = arith.constant 1.000000e+00 : f32
    %156 = vector.broadcast %cst_31 : f32 to vector<8x128xf32>
    %157 = arith.addf %156, %155 : vector<8x128xf32>
    %158 = arith.divf %156, %157 : vector<8x128xf32>
    %159 = vector.extract_strided_slice %140 {offsets = [0, 256], sizes = [8, 128], strides = [1, 1]} : vector<8x384xf32> to vector<8x128xf32>
    %160 = vector.extract_strided_slice %142 {offsets = [0, 256], sizes = [8, 128], strides = [1, 1]} : vector<8x384xf32> to vector<8x128xf32>
    %161 = arith.mulf %150, %160 : vector<8x128xf32>
    %162 = arith.addf %159, %161 : vector<8x128xf32>
    %163 = math.tanh %162 : vector<8x128xf32>
    %cst_32 = arith.constant 1.000000e+00 : f32
    %164 = vector.broadcast %cst_32 : f32 to vector<8x128xf32>
    %165 = arith.subf %164, %158 : vector<8x128xf32>
    %166 = arith.mulf %165, %163 : vector<8x128xf32>
    %167 = arith.mulf %158, %138 : vector<8x128xf32>
    %168 = arith.addf %166, %167 : vector<8x128xf32>
    %169 = vector.extract_strided_slice %13 {offsets = [0, 5, 0], sizes = [8, 1, 384], strides = [1, 1, 1]} : vector<8x8x384xf32> to vector<8x1x384xf32>
    %170 = vector.shape_cast %169 : vector<8x1x384xf32> to vector<8x384xf32>
    %cst_33 = arith.constant dense<0.000000e+00> : vector<8x384xf32>
    %171 = tpu.matmul %168, %14, %cst_33 {dimension_numbers = #tpu.dot_dimension_numbers<[1], [0], [0], [1], [0, 0, 1, 1], [], []>} : vector<8x128xf32>, vector<128x384xf32>, vector<8x384xf32> -> vector<8x384xf32>
    %172 = arith.addf %171, %17 : vector<8x384xf32>
    %173 = vector.extract_strided_slice %170 {offsets = [0, 0], sizes = [8, 128], strides = [1, 1]} : vector<8x384xf32> to vector<8x128xf32>
    %174 = vector.extract_strided_slice %172 {offsets = [0, 0], sizes = [8, 128], strides = [1, 1]} : vector<8x384xf32> to vector<8x128xf32>
    %175 = arith.addf %173, %174 : vector<8x128xf32>
    %176 = arith.negf %175 : vector<8x128xf32>
    %177 = math.exp %176 : vector<8x128xf32>
    %cst_34 = arith.constant 1.000000e+00 : f32
    %178 = vector.broadcast %cst_34 : f32 to vector<8x128xf32>
    %179 = arith.addf %178, %177 : vector<8x128xf32>
    %180 = arith.divf %178, %179 : vector<8x128xf32>
    %181 = vector.extract_strided_slice %170 {offsets = [0, 128], sizes = [8, 128], strides = [1, 1]} : vector<8x384xf32> to vector<8x128xf32>
    %182 = vector.extract_strided_slice %172 {offsets = [0, 128], sizes = [8, 128], strides = [1, 1]} : vector<8x384xf32> to vector<8x128xf32>
    %183 = arith.addf %181, %182 : vector<8x128xf32>
    %184 = arith.negf %183 : vector<8x128xf32>
    %185 = math.exp %184 : vector<8x128xf32>
    %cst_35 = arith.constant 1.000000e+00 : f32
    %186 = vector.broadcast %cst_35 : f32 to vector<8x128xf32>
    %187 = arith.addf %186, %185 : vector<8x128xf32>
    %188 = arith.divf %186, %187 : vector<8x128xf32>
    %189 = vector.extract_strided_slice %170 {offsets = [0, 256], sizes = [8, 128], strides = [1, 1]} : vector<8x384xf32> to vector<8x128xf32>
    %190 = vector.extract_strided_slice %172 {offsets = [0, 256], sizes = [8, 128], strides = [1, 1]} : vector<8x384xf32> to vector<8x128xf32>
    %191 = arith.mulf %180, %190 : vector<8x128xf32>
    %192 = arith.addf %189, %191 : vector<8x128xf32>
    %193 = math.tanh %192 : vector<8x128xf32>
    %cst_36 = arith.constant 1.000000e+00 : f32
    %194 = vector.broadcast %cst_36 : f32 to vector<8x128xf32>
    %195 = arith.subf %194, %188 : vector<8x128xf32>
    %196 = arith.mulf %195, %193 : vector<8x128xf32>
    %197 = arith.mulf %188, %168 : vector<8x128xf32>
    %198 = arith.addf %196, %197 : vector<8x128xf32>
    %199 = vector.extract_strided_slice %13 {offsets = [0, 6, 0], sizes = [8, 1, 384], strides = [1, 1, 1]} : vector<8x8x384xf32> to vector<8x1x384xf32>
    %200 = vector.shape_cast %199 : vector<8x1x384xf32> to vector<8x384xf32>
    %cst_37 = arith.constant dense<0.000000e+00> : vector<8x384xf32>
    %201 = tpu.matmul %198, %14, %cst_37 {dimension_numbers = #tpu.dot_dimension_numbers<[1], [0], [0], [1], [0, 0, 1, 1], [], []>} : vector<8x128xf32>, vector<128x384xf32>, vector<8x384xf32> -> vector<8x384xf32>
    %202 = arith.addf %201, %17 : vector<8x384xf32>
    %203 = vector.extract_strided_slice %200 {offsets = [0, 0], sizes = [8, 128], strides = [1, 1]} : vector<8x384xf32> to vector<8x128xf32>
    %204 = vector.extract_strided_slice %202 {offsets = [0, 0], sizes = [8, 128], strides = [1, 1]} : vector<8x384xf32> to vector<8x128xf32>
    %205 = arith.addf %203, %204 : vector<8x128xf32>
    %206 = arith.negf %205 : vector<8x128xf32>
    %207 = math.exp %206 : vector<8x128xf32>
    %cst_38 = arith.constant 1.000000e+00 : f32
    %208 = vector.broadcast %cst_38 : f32 to vector<8x128xf32>
    %209 = arith.addf %208, %207 : vector<8x128xf32>
    %210 = arith.divf %208, %209 : vector<8x128xf32>
    %211 = vector.extract_strided_slice %200 {offsets = [0, 128], sizes = [8, 128], strides = [1, 1]} : vector<8x384xf32> to vector<8x128xf32>
    %212 = vector.extract_strided_slice %202 {offsets = [0, 128], sizes = [8, 128], strides = [1, 1]} : vector<8x384xf32> to vector<8x128xf32>
    %213 = arith.addf %211, %212 : vector<8x128xf32>
    %214 = arith.negf %213 : vector<8x128xf32>
    %215 = math.exp %214 : vector<8x128xf32>
    %cst_39 = arith.constant 1.000000e+00 : f32
    %216 = vector.broadcast %cst_39 : f32 to vector<8x128xf32>
    %217 = arith.addf %216, %215 : vector<8x128xf32>
    %218 = arith.divf %216, %217 : vector<8x128xf32>
    %219 = vector.extract_strided_slice %200 {offsets = [0, 256], sizes = [8, 128], strides = [1, 1]} : vector<8x384xf32> to vector<8x128xf32>
    %220 = vector.extract_strided_slice %202 {offsets = [0, 256], sizes = [8, 128], strides = [1, 1]} : vector<8x384xf32> to vector<8x128xf32>
    %221 = arith.mulf %210, %220 : vector<8x128xf32>
    %222 = arith.addf %219, %221 : vector<8x128xf32>
    %223 = math.tanh %222 : vector<8x128xf32>
    %cst_40 = arith.constant 1.000000e+00 : f32
    %224 = vector.broadcast %cst_40 : f32 to vector<8x128xf32>
    %225 = arith.subf %224, %218 : vector<8x128xf32>
    %226 = arith.mulf %225, %223 : vector<8x128xf32>
    %227 = arith.mulf %218, %198 : vector<8x128xf32>
    %228 = arith.addf %226, %227 : vector<8x128xf32>
    %229 = vector.extract_strided_slice %13 {offsets = [0, 7, 0], sizes = [8, 1, 384], strides = [1, 1, 1]} : vector<8x8x384xf32> to vector<8x1x384xf32>
    %230 = vector.shape_cast %229 : vector<8x1x384xf32> to vector<8x384xf32>
    %cst_41 = arith.constant dense<0.000000e+00> : vector<8x384xf32>
    %231 = tpu.matmul %228, %14, %cst_41 {dimension_numbers = #tpu.dot_dimension_numbers<[1], [0], [0], [1], [0, 0, 1, 1], [], []>} : vector<8x128xf32>, vector<128x384xf32>, vector<8x384xf32> -> vector<8x384xf32>
    %232 = arith.addf %231, %17 : vector<8x384xf32>
    %233 = vector.extract_strided_slice %230 {offsets = [0, 0], sizes = [8, 128], strides = [1, 1]} : vector<8x384xf32> to vector<8x128xf32>
    %234 = vector.extract_strided_slice %232 {offsets = [0, 0], sizes = [8, 128], strides = [1, 1]} : vector<8x384xf32> to vector<8x128xf32>
    %235 = arith.addf %233, %234 : vector<8x128xf32>
    %236 = arith.negf %235 : vector<8x128xf32>
    %237 = math.exp %236 : vector<8x128xf32>
    %cst_42 = arith.constant 1.000000e+00 : f32
    %238 = vector.broadcast %cst_42 : f32 to vector<8x128xf32>
    %239 = arith.addf %238, %237 : vector<8x128xf32>
    %240 = arith.divf %238, %239 : vector<8x128xf32>
    %241 = vector.extract_strided_slice %230 {offsets = [0, 128], sizes = [8, 128], strides = [1, 1]} : vector<8x384xf32> to vector<8x128xf32>
    %242 = vector.extract_strided_slice %232 {offsets = [0, 128], sizes = [8, 128], strides = [1, 1]} : vector<8x384xf32> to vector<8x128xf32>
    %243 = arith.addf %241, %242 : vector<8x128xf32>
    %244 = arith.negf %243 : vector<8x128xf32>
    %245 = math.exp %244 : vector<8x128xf32>
    %cst_43 = arith.constant 1.000000e+00 : f32
    %246 = vector.broadcast %cst_43 : f32 to vector<8x128xf32>
    %247 = arith.addf %246, %245 : vector<8x128xf32>
    %248 = arith.divf %246, %247 : vector<8x128xf32>
    %249 = vector.extract_strided_slice %230 {offsets = [0, 256], sizes = [8, 128], strides = [1, 1]} : vector<8x384xf32> to vector<8x128xf32>
    %250 = vector.extract_strided_slice %232 {offsets = [0, 256], sizes = [8, 128], strides = [1, 1]} : vector<8x384xf32> to vector<8x128xf32>
    %251 = arith.mulf %240, %250 : vector<8x128xf32>
    %252 = arith.addf %249, %251 : vector<8x128xf32>
    %253 = math.tanh %252 : vector<8x128xf32>
    %cst_44 = arith.constant 1.000000e+00 : f32
    %254 = vector.broadcast %cst_44 : f32 to vector<8x128xf32>
    %255 = arith.subf %254, %248 : vector<8x128xf32>
    %256 = arith.mulf %255, %253 : vector<8x128xf32>
    %257 = arith.mulf %248, %228 : vector<8x128xf32>
    %258 = arith.addf %256, %257 : vector<8x128xf32>
    %c0_45 = arith.constant 0 : index
    %c0_46 = arith.constant 0 : index
    %259 = vector.load %arg7[%c0_45, %c0_46] : memref<128x128xf32, #tpu.memory_space<vmem>>, vector<128x128xf32>
    %cst_47 = arith.constant dense<0.000000e+00> : vector<8x128xf32>
    %260 = tpu.matmul %258, %259, %cst_47 {dimension_numbers = #tpu.dot_dimension_numbers<[1], [0], [0], [1], [0, 0, 1, 1], [], []>} : vector<8x128xf32>, vector<128x128xf32>, vector<8x128xf32> -> vector<8x128xf32>
    %c0_48 = arith.constant 0 : index
    %c0_49 = arith.constant 0 : index
    %261 = vector.load %arg8[%c0_48, %c0_49] : memref<1x128xf32, #tpu.memory_space<vmem>>, vector<1x128xf32>
    %262 = vector.broadcast %261 : vector<1x128xf32> to vector<8x128xf32>
    %263 = arith.addf %260, %262 : vector<8x128xf32>
    %c0_50 = arith.constant 0 : index
    %c0_51 = arith.constant 0 : index
    %264 = vector.load %arg9[%c0_50, %c0_51] : memref<8x128xf32, #tpu.memory_space<vmem>>, vector<8x128xf32>
    tpu.vector_store %arg9[%c0_50, %c0_51], %263 {strides = array<i32>} : memref<8x128xf32, #tpu.memory_space<vmem>>, vector<8x128xf32>,
    return
  }
  func.func @transform_0(%arg0: i32) -> (i32, i32) {
    %c0_i32 = arith.constant 0 : i32
    %c0_i32_0 = arith.constant 0 : i32
    return %arg0, %c0_i32 : i32, i32
  }
  func.func @transform_1(%arg0: i32) -> (i32, i32) {
    %c0_i32 = arith.constant 0 : i32
    %c0_i32_0 = arith.constant 0 : i32
    %c0_i32_1 = arith.constant 0 : i32
    return %c0_i32, %c0_i32_0 : i32, i32
  }
  func.func @transform_2(%arg0: i32) -> (i32, i32) {
    %c0_i32 = arith.constant 0 : i32
    %c0_i32_0 = arith.constant 0 : i32
    %c0_i32_1 = arith.constant 0 : i32
    return %c0_i32, %c0_i32_0 : i32, i32
  }
  func.func @transform_3(%arg0: i32) -> (i32, i32) {
    %c0_i32 = arith.constant 0 : i32
    %c0_i32_0 = arith.constant 0 : i32
    %c0_i32_1 = arith.constant 0 : i32
    return %c0_i32, %c0_i32_0 : i32, i32
  }
  func.func @transform_4(%arg0: i32) -> (i32, i32) {
    %c0_i32 = arith.constant 0 : i32
    %c0_i32_0 = arith.constant 0 : i32
    %c0_i32_1 = arith.constant 0 : i32
    return %c0_i32, %c0_i32_0 : i32, i32
  }
  func.func @transform_5(%arg0: i32) -> (i32, i32) {
    %c0_i32 = arith.constant 0 : i32
    %c0_i32_0 = arith.constant 0 : i32
    %c0_i32_1 = arith.constant 0 : i32
    return %c0_i32, %c0_i32_0 : i32, i32
  }
  func.func @transform_6(%arg0: i32) -> (i32, i32) {
    %c0_i32 = arith.constant 0 : i32
    %c0_i32_0 = arith.constant 0 : i32
    %c0_i32_1 = arith.constant 0 : i32
    return %c0_i32, %c0_i32_0 : i32, i32
  }
  func.func @transform_7(%arg0: i32) -> (i32, i32) {
    %c0_i32 = arith.constant 0 : i32
    %c0_i32_0 = arith.constant 0 : i32
    %c0_i32_1 = arith.constant 0 : i32
    return %c0_i32, %c0_i32_0 : i32, i32
  }
  func.func @transform_8(%arg0: i32) -> (i32, i32) {
    %c0_i32 = arith.constant 0 : i32
    %c0_i32_0 = arith.constant 0 : i32
    return %arg0, %c0_i32 : i32, i32
  }
}

</mosaic_0001>

<llo_original>
// kernel: tpu_custom_call.1
$region0: #{tpu_custom_call.1}
  #allocation0 [shape = 'u32[]', space=smem, size = 0x4, offset = 0x4, fixed_abs, tag = 'smem constant byte address 0x4 - core index']
  #allocation1 [shape = 'u32[144,128]{1,0:T(1,128)}', space=vmem, size = 0x12000, scoped, tag = 'internal scratch']
  %s0 = inlined_call_operand.vmem [shape: s32[64,1], index: 0, kind: input, shape index: {}]
  %s1 = inlined_call_operand.vmem [shape: f32[128,10], index: 1, kind: input, shape index: {}]
  %s2 = inlined_call_operand.vmem [shape: f32[10,384], index: 2, kind: input, shape index: {}]
  %s3 = inlined_call_operand.hbm [shape: f32[128,384], index: 3, kind: input, shape index: {}]
  %s4 = inlined_call_operand.vmem [shape: f32[1,384], index: 4, kind: input, shape index: {}]
  %s5 = inlined_call_operand.vmem [shape: f32[1,384], index: 5, kind: input, shape index: {}]
  %s6 = inlined_call_operand.vmem [shape: f32[128,128], index: 6, kind: input, shape index: {}]
  %s7 = inlined_call_operand.vmem [shape: f32[1,128], index: 7, kind: input, shape index: {}]
  %s8 = inlined_call_operand.hbm [shape: f32[8,128], index: 8, kind: output, shape index: {}]
  %s9 = sld [smem:[#allocation0]]
  $region46: #{tpu_custom_call.1} parent=0
    _
  %s11 = ssub.s32 1, %s9
  %s12 = scalar_select 0, %s11, %s9
  $region1: #{tpu_custom_call.1} parent=0
    #allocation2 [shape = 'u8[196608]{0}', space=vmem, size = 0x30000, scoped, tag = 'input window, operand 3, single buffered']
    #allocation3 [shape = 's32[1]{0}', space=sflag, size = 0x4, scoped, tag = 'scoped memory for tpu_custom_call.1']
    #allocation4 [shape = 's32[1]{0}', space=sflag, size = 0x4, scoped, tag = 'scoped memory for tpu_custom_call.1']
    #allocation5 [shape = 'u8[4096]{0}', space=vmem, size = 0x1000, scoped, tag = 'output window, operand 0, single buffered']
    %13 = vsyncpa [#allocation3], 0
    %14 = vsyncpa [#allocation4], 0
    // Predicated region
    $region2: #{tpu_custom_call.1} parent=1 // pred_check
      _
    $region3: #{tpu_custom_call.1} parent=1 // pred_check_branch
      %16 = sbr.rel (0) target = $region5
    $region4: #{tpu_custom_call.1} parent=1 // pred_region
      _
    $region5: #{tpu_custom_call.1} parent=1 // pred_fallthru
      _
    // Predicated region
    $region6: #{tpu_custom_call.1} parent=1 // pred_check
      _
    $region7: #{tpu_custom_call.1} parent=1 // pred_check_branch
      %18 = sbr.rel (0) target = $region9
    $region8: #{tpu_custom_call.1} parent=1 // pred_region
      _
    $region9: #{tpu_custom_call.1} parent=1 // pred_fallthru
      _
    // Predicated region
    $region10: #{tpu_custom_call.1} parent=1 // pred_check
      _
    $region11: #{tpu_custom_call.1} parent=1 // pred_check_branch
      %20 = sbr.rel (0) target = $region13
    $region12: #{tpu_custom_call.1} parent=1 // pred_region
      _
    $region13: #{tpu_custom_call.1} parent=1 // pred_fallthru
      _
    // Predicated region
    $region14: #{tpu_custom_call.1} parent=1 // pred_check
      _
    $region15: #{tpu_custom_call.1} parent=1 // pred_check_branch
      %22 = sbr.rel (0) target = $region17
    $region16: #{tpu_custom_call.1} parent=1 // pred_region
      %s24 = ssub.s32 6144, 6144
      %25 = vsyncadd [#allocation3], %s24
      %s26 = sshll.u32 [#allocation2], 4
      %s27 = int_to_ptr.vmem [resolvable:$true] %s26
      %32 = dma.hbm_to_vmem [thread:$0]  %s3, 6144, %s27, [#allocation3], 384, 384, 24
    $region17: #{tpu_custom_call.1} parent=1 // pred_fallthru
      _
    // Predicated region
    $region18: #{tpu_custom_call.1} parent=1 // pred_check
      _
    $region19: #{tpu_custom_call.1} parent=1 // pred_check_branch
      %34 = sbr.rel (0) target = $region21
    $region20: #{tpu_custom_call.1} parent=1 // pred_region
      _
    $region21: #{tpu_custom_call.1} parent=1 // pred_fallthru
      _
    // Predicated region
    $region22: #{tpu_custom_call.1} parent=1 // pred_check
      _
    $region23: #{tpu_custom_call.1} parent=1 // pred_check_branch
      %36 = sbr.rel (0) target = $region25
    $region24: #{tpu_custom_call.1} parent=1 // pred_region
      _
    $region25: #{tpu_custom_call.1} parent=1 // pred_fallthru
      _
    // Predicated region
    $region26: #{tpu_custom_call.1} parent=1 // pred_check
      _
    $region27: #{tpu_custom_call.1} parent=1 // pred_check_branch
      %38 = sbr.rel (0) target = $region29
    $region28: #{tpu_custom_call.1} parent=1 // pred_region
      _
    $region29: #{tpu_custom_call.1} parent=1 // pred_fallthru
      _
    // Predicated region
    $region30: #{tpu_custom_call.1} parent=1 // pred_check
      _
    $region31: #{tpu_custom_call.1} parent=1 // pred_check_branch
      %40 = sbr.rel (0) target = $region33
    $region32: #{tpu_custom_call.1} parent=1 // pred_region
      _
    $region33: #{tpu_custom_call.1} parent=1 // pred_fallthru
      _
    // Predicated region
    $region34: #{tpu_custom_call.1} parent=1 // pred_check
      _
    $region35: #{tpu_custom_call.1} parent=1 // pred_check_branch
      %42 = sbr.rel (0) target = $region37
    $region36: #{tpu_custom_call.1} parent=1 // pred_region
      %43 = dma.done [#allocation3], 6144
    $region37: #{tpu_custom_call.1} parent=1 // pred_fallthru
      _
    %v44 = vld [vmem:[%s1] sm:$0xff]
    %v45 = vld [vmem:[%s1 + $0x8] sm:$0xff]
    %v46 = vld [vmem:[%s1 + $0x10] sm:$0xff]
    %v47 = vld [vmem:[%s1 + $0x18] sm:$0xff]
    %v48 = vld [vmem:[%s1 + $0x20] sm:$0xff]
    %v49 = vld [vmem:[%s1 + $0x28] sm:$0xff]
    %v50 = vld [vmem:[%s1 + $0x30] sm:$0xff]
    %v51 = vld [vmem:[%s1 + $0x38] sm:$0xff]
    %v52 = vld [vmem:[%s1 + $0x40] sm:$0xff]
    %v53 = vld [vmem:[%s1 + $0x48] sm:$0xff]
    %v54 = vld [vmem:[%s1 + $0x50] sm:$0xff]
    %v55 = vld [vmem:[%s1 + $0x58] sm:$0xff]
    %v56 = vld [vmem:[%s1 + $0x60] sm:$0xff]
    %v57 = vld [vmem:[%s1 + $0x68] sm:$0xff]
    %v58 = vld [vmem:[%s1 + $0x70] sm:$0xff]
    %v59 = vld [vmem:[%s1 + $0x78] sm:$0xff]
    %v60 = vld [vmem:[%s2] sm:$0xff]
    %v61 = vld [vmem:[%s2 + $0x8] sm:$0xff]
    %v62 = vld [vmem:[%s2 + $0x10] sm:$0xff]
    %v63 = vld [vmem:[%s2 + $0x18] sm:$0x3]
    %v64 = vld [vmem:[%s2 + $0x20] sm:$0x3]
    %v65 = vld [vmem:[%s2 + $0x28] sm:$0x3]
    %vm66 = vcmask 80896
    %v68 = vsel %vm66, %v44, 0
    %v71 = vsel %vm66, %v45, 0
    %v74 = vsel %vm66, %v46, 0
    %v77 = vsel %vm66, %v47, 0
    %v80 = vsel %vm66, %v48, 0
    %v83 = vsel %vm66, %v49, 0
    %v86 = vsel %vm66, %v50, 0
    %v89 = vsel %vm66, %v51, 0
    %v92 = vsel %vm66, %v52, 0
    %v95 = vsel %vm66, %v53, 0
    %v98 = vsel %vm66, %v54, 0
    %v101 = vsel %vm66, %v55, 0
    %v104 = vsel %vm66, %v56, 0
    %v107 = vsel %vm66, %v57, 0
    %v110 = vsel %vm66, %v58, 0
    %v113 = vsel %vm66, %v59, 0
    %vm115 = vcmask 1041408
    %v117 = vsel %vm115, %v63, 0
    %v120 = vsel %vm115, %v64, 0
    %v123 = vsel %vm115, %v65, 0
    %125 = vmatprep.subr.mxu0 0.0
    %126 = vmatpush1.msra.mxu0 0.0
    %127 = vmatprep.subr.mxu0 0.0
    %128 = vmatpush1.msra.mxu0 0.0
    %129 = vmatprep.subr.mxu0 0.0
    %130 = vmatpush1.msra.mxu0 0.0
    %131 = vmatprep.subr.mxu0 0.0
    %132 = vmatpush1.msra.mxu0 0.0
    %133 = vmatprep.subr.mxu0 0.0
    %134 = vmatpush1.msra.mxu0 0.0
    %135 = vmatprep.subr.mxu0 0.0
    %136 = vmatpush1.msra.mxu0 0.0
    %137 = vmatprep.subr.mxu0 0.0
    %138 = vmatpush1.msra.mxu0 0.0
    %139 = vmatprep.subr.mxu0 0.0
    %140 = vmatpush1.msra.mxu0 0.0
    %141 = vmatprep.subr.mxu0 0.0
    %142 = vmatpush1.msra.mxu0 0.0
    %143 = vmatprep.subr.mxu0 0.0
    %144 = vmatpush1.msra.mxu0 0.0
    %145 = vmatprep.subr.mxu0 0.0
    %146 = vmatpush1.msra.mxu0 0.0
    %147 = vmatprep.subr.mxu0 0.0
    %148 = vmatpush1.msra.mxu0 0.0
    %149 = vmatprep.subr.mxu0 0.0
    %150 = vmatpush1.msra.mxu0 0.0
    %151 = vmatprep.subr.mxu0 0.0
    %152 = vmatpush1.msra.mxu0 0.0
    %153 = vmatprep.subr.mxu0 %v120
    %154 = vmatpush1.msra.mxu0 %v117
    %155 = vmatprep.subr.mxu0 %v61
    %156 = vmatpush1.msra.mxu0 %v60
    %157 = vmatprep.subr.mxu0 0.0
    %158 = vmatpush2.msra.mxu0 0.0
    %159 = vmatprep.subr.mxu0 0.0
    %160 = vmatpush2.msra.mxu0 0.0
    %161 = vmatprep.subr.mxu0 0.0
    %162 = vmatpush2.msra.mxu0 0.0
    %163 = vmatprep.subr.mxu0 0.0
    %164 = vmatpush2.msra.mxu0 0.0
    %165 = vmatprep.subr.mxu0 0.0
    %166 = vmatpush2.msra.mxu0 0.0
    %167 = vmatprep.subr.mxu0 0.0
    %168 = vmatpush2.msra.mxu0 0.0
    %169 = vmatprep.subr.mxu0 0.0
    %170 = vmatpush2.msra.mxu0 0.0
    %171 = vmatprep.subr.mxu0 0.0
    %172 = vmatpush2.msra.mxu0 0.0
    %173 = vmatprep.subr.mxu0 0.0
    %174 = vmatpush2.msra.mxu0 0.0
    %175 = vmatprep.subr.mxu0 0.0
    %176 = vmatpush2.msra.mxu0 0.0
    %177 = vmatprep.subr.mxu0 0.0
    %178 = vmatpush2.msra.mxu0 0.0
    %179 = vmatprep.subr.mxu0 0.0
    %180 = vmatpush2.msra.mxu0 0.0
    %181 = vmatprep.subr.mxu0 0.0
    %182 = vmatpush2.msra.mxu0 0.0
    %183 = vmatprep.subr.mxu0 0.0
    %184 = vmatpush2.msra.mxu0 0.0
    %185 = vmatprep.subr.mxu0 0.0
    %186 = vmatpush2.msra.mxu0 0.0
    %187 = vmatprep.subr.mxu0 0.0
    %188 = vmatpush2.msra.mxu0 0.0
    %189 = vmatprep.mubr.f32.mxu0 0.0
    %190 = vmatmul.mubr.f32.gmra.mxu0 %v68
    %v191 = vpop.f32.mrf.mxu0
    %v192 = vadd.f32 0.0, %v191
    %v193 = vpop.f32.mrf.mxu0
    %v194 = vadd.f32 0.0, %v193
    %195 = vmatprep.mubr.f32.mxu0 0.0
    %196 = vmatmul.mubr.f32.gmra.mxu0 %v71
    %v197 = vpop.f32.mrf.mxu0
    %v198 = vadd.f32 0.0, %v197
    %v199 = vpop.f32.mrf.mxu0
    %v200 = vadd.f32 0.0, %v199
    %201 = vmatprep.mubr.f32.mxu0 0.0
    %202 = vmatmul.mubr.f32.gmra.mxu0 %v74
    %v203 = vpop.f32.mrf.mxu0
    %v204 = vadd.f32 0.0, %v203
    %v205 = vpop.f32.mrf.mxu0
    %v206 = vadd.f32 0.0, %v205
    %207 = vmatprep.mubr.f32.mxu0 0.0
    %208 = vmatmul.mubr.f32.gmra.mxu0 %v77
    %v209 = vpop.f32.mrf.mxu0
    %v210 = vadd.f32 0.0, %v209
    %v211 = vpop.f32.mrf.mxu0
    %v212 = vadd.f32 0.0, %v211
    %213 = vmatprep.mubr.f32.mxu0 0.0
    %214 = vmatmul.mubr.f32.gmra.mxu0 %v80
    %v215 = vpop.f32.mrf.mxu0
    %v216 = vadd.f32 0.0, %v215
    %v217 = vpop.f32.mrf.mxu0
    %v218 = vadd.f32 0.0, %v217
    %219 = vmatprep.mubr.f32.mxu0 0.0
    %220 = vmatmul.mubr.f32.gmra.mxu0 %v83
    %v221 = vpop.f32.mrf.mxu0
    %v222 = vadd.f32 0.0, %v221
    %v223 = vpop.f32.mrf.mxu0
    %v224 = vadd.f32 0.0, %v223
    %225 = vmatprep.mubr.f32.mxu0 0.0
    %226 = vmatmul.mubr.f32.gmra.mxu0 %v86
    %v227 = vpop.f32.mrf.mxu0
    %v228 = vadd.f32 0.0, %v227
    %v229 = vpop.f32.mrf.mxu0
    %v230 = vadd.f32 0.0, %v229
    %231 = vmatprep.mubr.f32.mxu0 0.0
    %232 = vmatmul.mubr.f32.gmra.mxu0 %v89
    %v233 = vpop.f32.mrf.mxu0
    %v234 = vadd.f32 0.0, %v233
    %v235 = vpop.f32.mrf.mxu0
    %v236 = vadd.f32 0.0, %v235
    %237 = vmatprep.mubr.f32.mxu0 0.0
    %238 = vmatmul.mubr.f32.gmra.mxu0 %v92
    %v239 = vpop.f32.mrf.mxu0
    %v240 = vadd.f32 0.0, %v239
    %v241 = vpop.f32.mrf.mxu0
    %v242 = vadd.f32 0.0, %v241
    %243 = vmatprep.mubr.f32.mxu0 0.0
    %244 = vmatmul.mubr.f32.gmra.mxu0 %v95
    %v245 = vpop.f32.mrf.mxu0
    %v246 = vadd.f32 0.0, %v245
    %v247 = vpop.f32.mrf.mxu0
    %v248 = vadd.f32 0.0, %v247
    %249 = vmatprep.mubr.f32.mxu0 0.0
    %250 = vmatmul.mubr.f32.gmra.mxu0 %v98
    %v251 = vpop.f32.mrf.mxu0
    %v252 = vadd.f32 0.0, %v251
    %v253 = vpop.f32.mrf.mxu0
    %v254 = vadd.f32 0.0, %v253
    %255 = vmatprep.mubr.f32.mxu0 0.0
    %256 = vmatmul.mubr.f32.gmra.mxu0 %v101
    %v257 = vpop.f32.mrf.mxu0
    %v258 = vadd.f32 0.0, %v257
    %v259 = vpop.f32.mrf.mxu0
    %v260 = vadd.f32 0.0, %v259
    %261 = vmatprep.mubr.f32.mxu0 0.0
    %262 = vmatmul.mubr.f32.gmra.mxu0 %v104
    %v263 = vpop.f32.mrf.mxu0
    %v264 = vadd.f32 0.0, %v263
    %v265 = vpop.f32.mrf.mxu0
    %v266 = vadd.f32 0.0, %v265
    %267 = vmatprep.mubr.f32.mxu0 0.0
    %268 = vmatmul.mubr.f32.gmra.mxu0 %v107
    %v269 = vpop.f32.mrf.mxu0
    %v270 = vadd.f32 0.0, %v269
    %v271 = vpop.f32.mrf.mxu0
    %v272 = vadd.f32 0.0, %v271
    %273 = vmatprep.mubr.f32.mxu0 0.0
    %274 = vmatmul.mubr.f32.gmra.mxu0 %v110
    %v275 = vpop.f32.mrf.mxu0
    %v276 = vadd.f32 0.0, %v275
    %v277 = vpop.f32.mrf.mxu0
    %v278 = vadd.f32 0.0, %v277
    %279 = vmatprep.mubr.f32.mxu0 0.0
    %280 = vmatmul.mubr.f32.gmra.mxu0 %v113
    %v281 = vpop.f32.mrf.mxu0
    %v282 = vadd.f32 0.0, %v281
    %v283 = vpop.f32.mrf.mxu0
    %v284 = vadd.f32 0.0, %v283
    %285 = vdwg.mxu0
    %286 = vmatprep.subr.mxu0 0.0
    %287 = vmatpush1.msra.mxu0 0.0
    %288 = vmatprep.subr.mxu0 0.0
    %289 = vmatpush1.msra.mxu0 0.0
    %290 = vmatprep.subr.mxu0 0.0
    %291 = vmatpush1.msra.mxu0 0.0
    %292 = vmatprep.subr.mxu0 0.0
    %293 = vmatpush1.msra.mxu0 0.0
    %294 = vmatprep.subr.mxu0 0.0
    %295 = vmatpush1.msra.mxu0 0.0
    %296 = vmatprep.subr.mxu0 0.0
    %297 = vmatpush1.msra.mxu0 0.0
    %298 = vmatprep.subr.mxu0 0.0
    %299 = vmatpush1.msra.mxu0 0.0
    %300 = vmatprep.subr.mxu0 0.0
    %301 = vmatpush1.msra.mxu0 0.0
    %302 = vmatprep.subr.mxu0 0.0
    %303 = vmatpush1.msra.mxu0 0.0
    %304 = vmatprep.subr.mxu0 0.0
    %305 = vmatpush1.msra.mxu0 0.0
    %306 = vmatprep.subr.mxu0 0.0
    %307 = vmatpush1.msra.mxu0 0.0
    %308 = vmatprep.subr.mxu0 0.0
    %309 = vmatpush1.msra.mxu0 0.0
    %310 = vmatprep.subr.mxu0 0.0
    %311 = vmatpush1.msra.mxu0 0.0
    %312 = vmatprep.subr.mxu0 0.0
    %313 = vmatpush1.msra.mxu0 0.0
    %314 = vmatprep.subr.mxu0 0.0
    %315 = vmatpush1.msra.mxu0 %v123
    %316 = vmatprep.subr.mxu0 0.0
    %317 = vmatpush1.msra.mxu0 %v62
    %318 = vmatprep.subr.mxu0 0.0
    %319 = vmatpush2.msra.mxu0 0.0
    %320 = vmatprep.subr.mxu0 0.0
    %321 = vmatpush2.msra.mxu0 0.0
    %322 = vmatprep.subr.mxu0 0.0
    %323 = vmatpush2.msra.mxu0 0.0
    %324 = vmatprep.subr.mxu0 0.0
    %325 = vmatpush2.msra.mxu0 0.0
    %326 = vmatprep.subr.mxu0 0.0
    %327 = vmatpush2.msra.mxu0 0.0
    %328 = vmatprep.subr.mxu0 0.0
    %329 = vmatpush2.msra.mxu0 0.0
    %330 = vmatprep.subr.mxu0 0.0
    %331 = vmatpush2.msra.mxu0 0.0
    %332 = vmatprep.subr.mxu0 0.0
    %333 = vmatpush2.msra.mxu0 0.0
    %334 = vmatprep.subr.mxu0 0.0
    %335 = vmatpush2.msra.mxu0 0.0
    %336 = vmatprep.subr.mxu0 0.0
    %337 = vmatpush2.msra.mxu0 0.0
    %338 = vmatprep.subr.mxu0 0.0
    %339 = vmatpush2.msra.mxu0 0.0
    %340 = vmatprep.subr.mxu0 0.0
    %341 = vmatpush2.msra.mxu0 0.0
    %342 = vmatprep.subr.mxu0 0.0
    %343 = vmatpush2.msra.mxu0 0.0
    %344 = vmatprep.subr.mxu0 0.0
    %345 = vmatpush2.msra.mxu0 0.0
    %346 = vmatprep.subr.mxu0 0.0
    %347 = vmatpush2.msra.mxu0 0.0
    %348 = vmatprep.subr.mxu0 0.0
    %349 = vmatpush2.msra.mxu0 0.0
    %350 = vmatprep.mubr.f32.mxu0 0.0
    %351 = vmatmul.mubr.f32.gmra.mxu0 %v68
    %v352 = vpop.f32.mrf.mxu0
    %v353 = vadd.f32 0.0, %v352
    %v354 = vpop.f32.mrf.mxu0
    %355 = vmatprep.mubr.f32.mxu0 0.0
    %356 = vmatmul.mubr.f32.gmra.mxu0 %v71
    %v357 = vpop.f32.mrf.mxu0
    %v358 = vadd.f32 0.0, %v357
    %v359 = vpop.f32.mrf.mxu0
    %360 = vmatprep.mubr.f32.mxu0 0.0
    %361 = vmatmul.mubr.f32.gmra.mxu0 %v74
    %v362 = vpop.f32.mrf.mxu0
    %v363 = vadd.f32 0.0, %v362
    %v364 = vpop.f32.mrf.mxu0
    %365 = vmatprep.mubr.f32.mxu0 0.0
    %366 = vmatmul.mubr.f32.gmra.mxu0 %v77
    %v367 = vpop.f32.mrf.mxu0
    %v368 = vadd.f32 0.0, %v367
    %v369 = vpop.f32.mrf.mxu0
    %370 = vmatprep.mubr.f32.mxu0 0.0
    %371 = vmatmul.mubr.f32.gmra.mxu0 %v80
    %v372 = vpop.f32.mrf.mxu0
    %v373 = vadd.f32 0.0, %v372
    %v374 = vpop.f32.mrf.mxu0
    %375 = vmatprep.mubr.f32.mxu0 0.0
    %376 = vmatmul.mubr.f32.gmra.mxu0 %v83
    %v377 = vpop.f32.mrf.mxu0
    %v378 = vadd.f32 0.0, %v377
    %v379 = vpop.f32.mrf.mxu0
    %380 = vmatprep.mubr.f32.mxu0 0.0
    %381 = vmatmul.mubr.f32.gmra.mxu0 %v86
    %v382 = vpop.f32.mrf.mxu0
    %v383 = vadd.f32 0.0, %v382
    %v384 = vpop.f32.mrf.mxu0
    %385 = vmatprep.mubr.f32.mxu0 0.0
    %386 = vmatmul.mubr.f32.gmra.mxu0 %v89
    %v387 = vpop.f32.mrf.mxu0
    %v388 = vadd.f32 0.0, %v387
    %v389 = vpop.f32.mrf.mxu0
    %390 = vmatprep.mubr.f32.mxu0 0.0
    %391 = vmatmul.mubr.f32.gmra.mxu0 %v92
    %v392 = vpop.f32.mrf.mxu0
    %v393 = vadd.f32 0.0, %v392
    %v394 = vpop.f32.mrf.mxu0
    %395 = vmatprep.mubr.f32.mxu0 0.0
    %396 = vmatmul.mubr.f32.gmra.mxu0 %v95
    %v397 = vpop.f32.mrf.mxu0
    %v398 = vadd.f32 0.0, %v397
    %v399 = vpop.f32.mrf.mxu0
    %400 = vmatprep.mubr.f32.mxu0 0.0
    %401 = vmatmul.mubr.f32.gmra.mxu0 %v98
    %v402 = vpop.f32.mrf.mxu0
    %v403 = vadd.f32 0.0, %v402
    %v404 = vpop.f32.mrf.mxu0
    %405 = vmatprep.mubr.f32.mxu0 0.0
    %406 = vmatmul.mubr.f32.gmra.mxu0 %v101
    %v407 = vpop.f32.mrf.mxu0
    %v408 = vadd.f32 0.0, %v407
    %v409 = vpop.f32.mrf.mxu0
    %410 = vmatprep.mubr.f32.mxu0 0.0
    %411 = vmatmul.mubr.f32.gmra.mxu0 %v104
    %v412 = vpop.f32.mrf.mxu0
    %v413 = vadd.f32 0.0, %v412
    %v414 = vpop.f32.mrf.mxu0
    %415 = vmatprep.mubr.f32.mxu0 0.0
    %416 = vmatmul.mubr.f32.gmra.mxu0 %v107
    %v417 = vpop.f32.mrf.mxu0
    %v418 = vadd.f32 0.0, %v417
    %v419 = vpop.f32.mrf.mxu0
    %420 = vmatprep.mubr.f32.mxu0 0.0
    %421 = vmatmul.mubr.f32.gmra.mxu0 %v110
    %v422 = vpop.f32.mrf.mxu0
    %v423 = vadd.f32 0.0, %v422
    %v424 = vpop.f32.mrf.mxu0
    %425 = vmatprep.mubr.f32.mxu0 0.0
    %426 = vmatmul.mubr.f32.gmra.mxu0 %v113
    %v427 = vpop.f32.mrf.mxu0
    %v428 = vadd.f32 0.0, %v427
    %v429 = vpop.f32.mrf.mxu0
    %430 = vdwg.mxu0
    %v431 = vld [vmem:[%s0] sm:$0xff]
    %v432 = vld [vmem:[%s0 + $0x8] sm:$0xff]
    %v433 = vld [vmem:[%s0 + $0x10] sm:$0xff]
    %v434 = vld [vmem:[%s0 + $0x18] sm:$0xff]
    %v435 = vld [vmem:[%s0 + $0x20] sm:$0xff]
    %v436 = vld [vmem:[%s0 + $0x28] sm:$0xff]
    %v437 = vld [vmem:[%s0 + $0x30] sm:$0xff]
    %v438 = vld [vmem:[%s0 + $0x38] sm:$0xff]
    %v439 = vlaneseq
    %v440 = vand.u32 %v439, 127
    %441 = vset.pattern.permute.xlu0 0
    %442 = vperm.xlu0 %441, %v431
    %v443 = vpop.permute.xlu0 %442
    %444 = vset.pattern.permute.xlu0 0
    %445 = vperm.xlu0 %444, %v432
    %v446 = vpop.permute.xlu0 %445
    %447 = vset.pattern.permute.xlu0 0
    %448 = vperm.xlu0 %447, %v433
    %v449 = vpop.permute.xlu0 %448
    %450 = vset.pattern.permute.xlu0 0
    %451 = vperm.xlu0 %450, %v434
    %v452 = vpop.permute.xlu0 %451
    %453 = vset.pattern.permute.xlu0 0
    %454 = vperm.xlu0 %453, %v435
    %v455 = vpop.permute.xlu0 %454
    %456 = vset.pattern.permute.xlu0 0
    %457 = vperm.xlu0 %456, %v436
    %v458 = vpop.permute.xlu0 %457
    %459 = vset.pattern.permute.xlu0 0
    %460 = vperm.xlu0 %459, %v437
    %v461 = vpop.permute.xlu0 %460
    %462 = vset.pattern.permute.xlu0 0
    %463 = vperm.xlu0 %462, %v438
    %v464 = vpop.permute.xlu0 %463
    %vm465 = vcmp.eq.s32.totalorder %v443, %v440
    %vm466 = vcmp.eq.s32.totalorder %v446, %v440
    %vm467 = vcmp.eq.s32.totalorder %v449, %v440
    %vm468 = vcmp.eq.s32.totalorder %v452, %v440
    %vm469 = vcmp.eq.s32.totalorder %v455, %v440
    %vm470 = vcmp.eq.s32.totalorder %v458, %v440
    %vm471 = vcmp.eq.s32.totalorder %v461, %v440
    %vm472 = vcmp.eq.s32.totalorder %v464, %v440
    %v473 = vsel %vm465, 1, 0
    %v474 = vsel %vm466, 1, 0
    %v475 = vsel %vm467, 1, 0
    %v476 = vsel %vm468, 1, 0
    %v477 = vsel %vm469, 1, 0
    %v478 = vsel %vm470, 1, 0
    %v479 = vsel %vm471, 1, 0
    %v480 = vsel %vm472, 1, 0
    %v481 = vcvt.s32.f32 %v473
    %v482 = vcvt.s32.f32 %v474
    %v483 = vcvt.s32.f32 %v475
    %v484 = vcvt.s32.f32 %v476
    %v485 = vcvt.s32.f32 %v477
    %v486 = vcvt.s32.f32 %v478
    %v487 = vcvt.s32.f32 %v479
    %v488 = vcvt.s32.f32 %v480
    %v489 = vld [vmem:[%s4] sm:$0x7]
    %v491 = vlaneseq
    %v492 = vshrl.u32 %v491, 7
    %v493 = vsub.s32 0, %v492
    %v494 = vrot.slane %v489, %v493
    %v495 = vlaneseq
    %v496 = vshrl.u32 %v495, 7
    %v497 = vsub.s32 1, %v496
    %v498 = vrot.slane %v489, %v497
    %v499 = vlaneseq
    %v500 = vshrl.u32 %v499, 7
    %v501 = vsub.s32 2, %v500
    %v502 = vrot.slane %v489, %v501
    %506 = vmatprep.subr.mxu0 %v284
    %507 = vmatpush1.msra.mxu0 %v282
    %508 = vmatprep.subr.mxu0 %v278
    %509 = vmatpush1.msra.mxu0 %v276
    %510 = vmatprep.subr.mxu0 %v272
    %511 = vmatpush1.msra.mxu0 %v270
    %512 = vmatprep.subr.mxu0 %v266
    %513 = vmatpush1.msra.mxu0 %v264
    %514 = vmatprep.subr.mxu0 %v260
    %515 = vmatpush1.msra.mxu0 %v258
    %516 = vmatprep.subr.mxu0 %v254
    %517 = vmatpush1.msra.mxu0 %v252
    %518 = vmatprep.subr.mxu0 %v248
    %519 = vmatpush1.msra.mxu0 %v246
    %520 = vmatprep.subr.mxu0 %v242
    %521 = vmatpush1.msra.mxu0 %v240
    %522 = vmatprep.subr.mxu0 %v236
    %523 = vmatpush1.msra.mxu0 %v234
    %524 = vmatprep.subr.mxu0 %v230
    %525 = vmatpush1.msra.mxu0 %v228
    %526 = vmatprep.subr.mxu0 %v224
    %527 = vmatpush1.msra.mxu0 %v222
    %528 = vmatprep.subr.mxu0 %v218
    %529 = vmatpush1.msra.mxu0 %v216
    %530 = vmatprep.subr.mxu0 %v212
    %531 = vmatpush1.msra.mxu0 %v210
    %532 = vmatprep.subr.mxu0 %v206
    %533 = vmatpush1.msra.mxu0 %v204
    %534 = vmatprep.subr.mxu0 %v200
    %535 = vmatpush1.msra.mxu0 %v198
    %536 = vmatprep.subr.mxu0 %v194
    %537 = vmatpush1.msra.mxu0 %v192
    %538 = vmatprep.subr.mxu0 0.0
    %539 = vmatpush2.msra.mxu0 0.0
    %540 = vmatprep.subr.mxu0 0.0
    %541 = vmatpush2.msra.mxu0 0.0
    %542 = vmatprep.subr.mxu0 0.0
    %543 = vmatpush2.msra.mxu0 0.0
    %544 = vmatprep.subr.mxu0 0.0
    %545 = vmatpush2.msra.mxu0 0.0
    %546 = vmatprep.subr.mxu0 0.0
    %547 = vmatpush2.msra.mxu0 0.0
    %548 = vmatprep.subr.mxu0 0.0
    %549 = vmatpush2.msra.mxu0 0.0
    %550 = vmatprep.subr.mxu0 0.0
    %551 = vmatpush2.msra.mxu0 0.0
    %552 = vmatprep.subr.mxu0 0.0
    %553 = vmatpush2.msra.mxu0 0.0
    %554 = vmatprep.subr.mxu0 0.0
    %555 = vmatpush2.msra.mxu0 0.0
    %556 = vmatprep.subr.mxu0 0.0
    %557 = vmatpush2.msra.mxu0 0.0
    %558 = vmatprep.subr.mxu0 0.0
    %559 = vmatpush2.msra.mxu0 0.0
    %560 = vmatprep.subr.mxu0 0.0
    %561 = vmatpush2.msra.mxu0 0.0
    %562 = vmatprep.subr.mxu0 0.0
    %563 = vmatpush2.msra.mxu0 0.0
    %564 = vmatprep.subr.mxu0 0.0
    %565 = vmatpush2.msra.mxu0 0.0
    %566 = vmatprep.subr.mxu0 0.0
    %567 = vmatpush2.msra.mxu0 0.0
    %568 = vmatprep.subr.mxu0 0.0
    %569 = vmatpush2.msra.mxu0 0.0
    %570 = vmatprep.mubr.f32.mxu0 0.0
    %571 = vmatmul.mubr.f32.gmra.mxu0 %v481
    %v572 = vpop.f32.mrf.mxu0
    %v573 = vadd.f32 %v494, %v572
    %v574 = vpop.f32.mrf.mxu0
    %v575 = vadd.f32 %v498, %v574
    %576 = vmatprep.mubr.f32.mxu0 0.0
    %577 = vmatmul.mubr.f32.gmra.mxu0 %v482
    %v578 = vpop.f32.mrf.mxu0
    %v579 = vadd.f32 %v494, %v578
    %v580 = vpop.f32.mrf.mxu0
    %v581 = vadd.f32 %v498, %v580
    %582 = vmatprep.mubr.f32.mxu0 0.0
    %583 = vmatmul.mubr.f32.gmra.mxu0 %v483
    %v584 = vpop.f32.mrf.mxu0
    %v585 = vadd.f32 %v494, %v584
    %v586 = vpop.f32.mrf.mxu0
    %v587 = vadd.f32 %v498, %v586
    %588 = vmatprep.mubr.f32.mxu0 0.0
    %589 = vmatmul.mubr.f32.gmra.mxu0 %v484
    %v590 = vpop.f32.mrf.mxu0
    %v591 = vadd.f32 %v494, %v590
    %v592 = vpop.f32.mrf.mxu0
    %v593 = vadd.f32 %v498, %v592
    %594 = vmatprep.mubr.f32.mxu0 0.0
    %595 = vmatmul.mubr.f32.gmra.mxu0 %v485
    %v596 = vpop.f32.mrf.mxu0
    %v597 = vadd.f32 %v494, %v596
    %v598 = vpop.f32.mrf.mxu0
    %v599 = vadd.f32 %v498, %v598
    %600 = vmatprep.mubr.f32.mxu0 0.0
    %601 = vmatmul.mubr.f32.gmra.mxu0 %v486
    %v602 = vpop.f32.mrf.mxu0
    %v603 = vadd.f32 %v494, %v602
    %v604 = vpop.f32.mrf.mxu0
    %v605 = vadd.f32 %v498, %v604
    %606 = vmatprep.mubr.f32.mxu0 0.0
    %607 = vmatmul.mubr.f32.gmra.mxu0 %v487
    %v608 = vpop.f32.mrf.mxu0
    %v609 = vadd.f32 %v494, %v608
    %v610 = vpop.f32.mrf.mxu0
    %v611 = vadd.f32 %v498, %v610
    %612 = vmatprep.mubr.f32.mxu0 0.0
    %613 = vmatmul.mubr.f32.gmra.mxu0 %v488
    %v614 = vpop.f32.mrf.mxu0
    %v615 = vadd.f32 %v494, %v614
    %v616 = vpop.f32.mrf.mxu0
    %v617 = vadd.f32 %v498, %v616
    %618 = vdwg.mxu0
    %619 = vmatprep.subr.mxu0 0.0
    %620 = vmatpush1.msra.mxu0 %v428
    %621 = vmatprep.subr.mxu0 0.0
    %622 = vmatpush1.msra.mxu0 %v423
    %623 = vmatprep.subr.mxu0 0.0
    %624 = vmatpush1.msra.mxu0 %v418
    %625 = vmatprep.subr.mxu0 0.0
    %626 = vmatpush1.msra.mxu0 %v413
    %627 = vmatprep.subr.mxu0 0.0
    %628 = vmatpush1.msra.mxu0 %v408
    %629 = vmatprep.subr.mxu0 0.0
    %630 = vmatpush1.msra.mxu0 %v403
    %631 = vmatprep.subr.mxu0 0.0
    %632 = vmatpush1.msra.mxu0 %v398
    %633 = vmatprep.subr.mxu0 0.0
    %634 = vmatpush1.msra.mxu0 %v393
    %635 = vmatprep.subr.mxu0 0.0
    %636 = vmatpush1.msra.mxu0 %v388
    %637 = vmatprep.subr.mxu0 0.0
    %638 = vmatpush1.msra.mxu0 %v383
    %639 = vmatprep.subr.mxu0 0.0
    %640 = vmatpush1.msra.mxu0 %v378
    %641 = vmatprep.subr.mxu0 0.0
    %642 = vmatpush1.msra.mxu0 %v373
    %643 = vmatprep.subr.mxu0 0.0
    %644 = vmatpush1.msra.mxu0 %v368
    %645 = vmatprep.subr.mxu0 0.0
    %646 = vmatpush1.msra.mxu0 %v363
    %647 = vmatprep.subr.mxu0 0.0
    %648 = vmatpush1.msra.mxu0 %v358
    %649 = vmatprep.subr.mxu0 0.0
    %650 = vmatpush1.msra.mxu0 %v353
    %651 = vmatprep.subr.mxu0 0.0
    %652 = vmatpush2.msra.mxu0 0.0
    %653 = vmatprep.subr.mxu0 0.0
    %654 = vmatpush2.msra.mxu0 0.0
    %655 = vmatprep.subr.mxu0 0.0
    %656 = vmatpush2.msra.mxu0 0.0
    %657 = vmatprep.subr.mxu0 0.0
    %658 = vmatpush2.msra.mxu0 0.0
    %659 = vmatprep.subr.mxu0 0.0
    %660 = vmatpush2.msra.mxu0 0.0
    %661 = vmatprep.subr.mxu0 0.0
    %662 = vmatpush2.msra.mxu0 0.0
    %663 = vmatprep.subr.mxu0 0.0
    %664 = vmatpush2.msra.mxu0 0.0
    %665 = vmatprep.subr.mxu0 0.0
    %666 = vmatpush2.msra.mxu0 0.0
    %667 = vmatprep.subr.mxu0 0.0
    %668 = vmatpush2.msra.mxu0 0.0
    %669 = vmatprep.subr.mxu0 0.0
    %670 = vmatpush2.msra.mxu0 0.0
    %671 = vmatprep.subr.mxu0 0.0
    %672 = vmatpush2.msra.mxu0 0.0
    %673 = vmatprep.subr.mxu0 0.0
    %674 = vmatpush2.msra.mxu0 0.0
    %675 = vmatprep.subr.mxu0 0.0
    %676 = vmatpush2.msra.mxu0 0.0
    %677 = vmatprep.subr.mxu0 0.0
    %678 = vmatpush2.msra.mxu0 0.0
    %679 = vmatprep.subr.mxu0 0.0
    %680 = vmatpush2.msra.mxu0 0.0
    %681 = vmatprep.subr.mxu0 0.0
    %682 = vmatpush2.msra.mxu0 0.0
    %683 = vmatprep.mubr.f32.mxu0 0.0
    %684 = vmatmul.mubr.f32.gmra.mxu0 %v481
    %v685 = vpop.f32.mrf.mxu0
    %v686 = vadd.f32 %v502, %v685
    %v687 = vpop.f32.mrf.mxu0
    %688 = vmatprep.mubr.f32.mxu0 0.0
    %689 = vmatmul.mubr.f32.gmra.mxu0 %v482
    %v690 = vpop.f32.mrf.mxu0
    %v691 = vadd.f32 %v502, %v690
    %v692 = vpop.f32.mrf.mxu0
    %693 = vmatprep.mubr.f32.mxu0 0.0
    %694 = vmatmul.mubr.f32.gmra.mxu0 %v483
    %v695 = vpop.f32.mrf.mxu0
    %v696 = vadd.f32 %v502, %v695
    %v697 = vpop.f32.mrf.mxu0
    %698 = vmatprep.mubr.f32.mxu0 0.0
    %699 = vmatmul.mubr.f32.gmra.mxu0 %v484
    %v700 = vpop.f32.mrf.mxu0
    %v701 = vadd.f32 %v502, %v700
    %v702 = vpop.f32.mrf.mxu0
    %703 = vmatprep.mubr.f32.mxu0 0.0
    %704 = vmatmul.mubr.f32.gmra.mxu0 %v485
    %v705 = vpop.f32.mrf.mxu0
    %v706 = vadd.f32 %v502, %v705
    %v707 = vpop.f32.mrf.mxu0
    %708 = vmatprep.mubr.f32.mxu0 0.0
    %709 = vmatmul.mubr.f32.gmra.mxu0 %v486
    %v710 = vpop.f32.mrf.mxu0
    %v711 = vadd.f32 %v502, %v710
    %v712 = vpop.f32.mrf.mxu0
    %713 = vmatprep.mubr.f32.mxu0 0.0
    %714 = vmatmul.mubr.f32.gmra.mxu0 %v487
    %v715 = vpop.f32.mrf.mxu0
    %v716 = vadd.f32 %v502, %v715
    %v717 = vpop.f32.mrf.mxu0
    %718 = vmatprep.mubr.f32.mxu0 0.0
    %719 = vmatmul.mubr.f32.gmra.mxu0 %v488
    %v720 = vpop.f32.mrf.mxu0
    %v721 = vadd.f32 %v502, %v720
    %v722 = vpop.f32.mrf.mxu0
    %723 = vdwg.mxu0
    %v724 = vld [vmem:[#allocation2] sm:$0xff]
    %v725 = vld [vmem:[#allocation2 + $0x8] sm:$0xff]
    %v726 = vld [vmem:[#allocation2 + $0x10] sm:$0xff]
    %v727 = vld [vmem:[#allocation2 + $0x18] sm:$0xff]
    %v728 = vld [vmem:[#allocation2 + $0x20] sm:$0xff]
    %v729 = vld [vmem:[#allocation2 + $0x28] sm:$0xff]
    %v730 = vld [vmem:[#allocation2 + $0x30] sm:$0xff]
    %v731 = vld [vmem:[#allocation2 + $0x38] sm:$0xff]
    %v732 = vld [vmem:[#allocation2 + $0x40] sm:$0xff]
    %v733 = vld [vmem:[#allocation2 + $0x48] sm:$0xff]
    %v734 = vld [vmem:[#allocation2 + $0x50] sm:$0xff]
    %v735 = vld [vmem:[#allocation2 + $0x58] sm:$0xff]
    %v736 = vld [vmem:[#allocation2 + $0x60] sm:$0xff]
    %v737 = vld [vmem:[#allocation2 + $0x68] sm:$0xff]
    %v738 = vld [vmem:[#allocation2 + $0x70] sm:$0xff]
    %v739 = vld [vmem:[#allocation2 + $0x78] sm:$0xff]
    %v740 = vld [vmem:[#allocation2 + $0x80] sm:$0xff]
    %v741 = vld [vmem:[#allocation2 + $0x88] sm:$0xff]
    %v742 = vld [vmem:[#allocation2 + $0x90] sm:$0xff]
    %v743 = vld [vmem:[#allocation2 + $0x98] sm:$0xff]
    %v744 = vld [vmem:[#allocation2 + $0xa0] sm:$0xff]
    %v745 = vld [vmem:[#allocation2 + $0xa8] sm:$0xff]
    %v746 = vld [vmem:[#allocation2 + $0xb0] sm:$0xff]
    %v747 = vld [vmem:[#allocation2 + $0xb8] sm:$0xff]
    %v748 = vld [vmem:[#allocation2 + $0xc0] sm:$0xff]
    %v749 = vld [vmem:[#allocation2 + $0xc8] sm:$0xff]
    %v750 = vld [vmem:[#allocation2 + $0xd0] sm:$0xff]
    %v751 = vld [vmem:[#allocation2 + $0xd8] sm:$0xff]
    %v752 = vld [vmem:[#allocation2 + $0xe0] sm:$0xff]
    %v753 = vld [vmem:[#allocation2 + $0xe8] sm:$0xff]
    %v754 = vld [vmem:[#allocation2 + $0xf0] sm:$0xff]
    %v755 = vld [vmem:[#allocation2 + $0xf8] sm:$0xff]
    %v756 = vld [vmem:[#allocation2 + $0x100] sm:$0xff]
    %v757 = vld [vmem:[#allocation2 + $0x108] sm:$0xff]
    %v758 = vld [vmem:[#allocation2 + $0x110] sm:$0xff]
    %v759 = vld [vmem:[#allocation2 + $0x118] sm:$0xff]
    %v760 = vld [vmem:[#allocation2 + $0x120] sm:$0xff]
    %v761 = vld [vmem:[#allocation2 + $0x128] sm:$0xff]
    %v762 = vld [vmem:[#allocation2 + $0x130] sm:$0xff]
    %v763 = vld [vmem:[#allocation2 + $0x138] sm:$0xff]
    %v764 = vld [vmem:[#allocation2 + $0x140] sm:$0xff]
    %v765 = vld [vmem:[#allocation2 + $0x148] sm:$0xff]
    %v766 = vld [vmem:[#allocation2 + $0x150] sm:$0xff]
    %v767 = vld [vmem:[#allocation2 + $0x158] sm:$0xff]
    %v768 = vld [vmem:[#allocation2 + $0x160] sm:$0xff]
    %v769 = vld [vmem:[#allocation2 + $0x168] sm:$0xff]
    %v770 = vld [vmem:[#allocation2 + $0x170] sm:$0xff]
    %v771 = vld [vmem:[#allocation2 + $0x178] sm:$0xff]
    %v772 = vld [vmem:[%s5] sm:$0x7]
    %v774 = vlaneseq
    %v775 = vshrl.u32 %v774, 7
    %v776 = vsub.s32 0, %v775
    %v777 = vrot.slane %v772, %v776
    %v778 = vlaneseq
    %v779 = vshrl.u32 %v778, 7
    %v780 = vsub.s32 1, %v779
    %v781 = vrot.slane %v772, %v780
    %v782 = vlaneseq
    %v783 = vshrl.u32 %v782, 7
    %v784 = vsub.s32 2, %v783
    %v785 = vrot.slane %v772, %v784
    %789 = vmatprep.subr.mxu0 %v770
    %790 = vmatpush1.msra.mxu0 %v769
    %791 = vmatprep.subr.mxu0 %v767
    %792 = vmatpush1.msra.mxu0 %v766
    %793 = vmatprep.subr.mxu0 %v764
    %794 = vmatpush1.msra.mxu0 %v763
    %795 = vmatprep.subr.mxu0 %v761
    %796 = vmatpush1.msra.mxu0 %v760
    %797 = vmatprep.subr.mxu0 %v758
    %798 = vmatpush1.msra.mxu0 %v757
    %799 = vmatprep.subr.mxu0 %v755
    %800 = vmatpush1.msra.mxu0 %v754
    %801 = vmatprep.subr.mxu0 %v752
    %802 = vmatpush1.msra.mxu0 %v751
    %803 = vmatprep.subr.mxu0 %v749
    %804 = vmatpush1.msra.mxu0 %v748
    %805 = vmatprep.subr.mxu0 %v746
    %806 = vmatpush1.msra.mxu0 %v745
    %807 = vmatprep.subr.mxu0 %v743
    %808 = vmatpush1.msra.mxu0 %v742
    %809 = vmatprep.subr.mxu0 %v740
    %810 = vmatpush1.msra.mxu0 %v739
    %811 = vmatprep.subr.mxu0 %v737
    %812 = vmatpush1.msra.mxu0 %v736
    %813 = vmatprep.subr.mxu0 %v734
    %814 = vmatpush1.msra.mxu0 %v733
    %815 = vmatprep.subr.mxu0 %v731
    %816 = vmatpush1.msra.mxu0 %v730
    %817 = vmatprep.subr.mxu0 %v728
    %818 = vmatpush1.msra.mxu0 %v727
    %819 = vmatprep.subr.mxu0 %v725
    %820 = vmatpush1.msra.mxu0 %v724
    %821 = vmatprep.subr.mxu0 0.0
    %822 = vmatpush2.msra.mxu0 0.0
    %823 = vmatprep.subr.mxu0 0.0
    %824 = vmatpush2.msra.mxu0 0.0
    %825 = vmatprep.subr.mxu0 0.0
    %826 = vmatpush2.msra.mxu0 0.0
    %827 = vmatprep.subr.mxu0 0.0
    %828 = vmatpush2.msra.mxu0 0.0
    %829 = vmatprep.subr.mxu0 0.0
    %830 = vmatpush2.msra.mxu0 0.0
    %831 = vmatprep.subr.mxu0 0.0
    %832 = vmatpush2.msra.mxu0 0.0
    %833 = vmatprep.subr.mxu0 0.0
    %834 = vmatpush2.msra.mxu0 0.0
    %835 = vmatprep.subr.mxu0 0.0
    %836 = vmatpush2.msra.mxu0 0.0
    %837 = vmatprep.subr.mxu0 0.0
    %838 = vmatpush2.msra.mxu0 0.0
    %839 = vmatprep.subr.mxu0 0.0
    %840 = vmatpush2.msra.mxu0 0.0
    %841 = vmatprep.subr.mxu0 0.0
    %842 = vmatpush2.msra.mxu0 0.0
    %843 = vmatprep.subr.mxu0 0.0
    %844 = vmatpush2.msra.mxu0 0.0
    %845 = vmatprep.subr.mxu0 0.0
    %846 = vmatpush2.msra.mxu0 0.0
    %847 = vmatprep.subr.mxu0 0.0
    %848 = vmatpush2.msra.mxu0 0.0
    %849 = vmatprep.subr.mxu0 0.0
    %850 = vmatpush2.msra.mxu0 0.0
    %851 = vmatprep.subr.mxu0 0.0
    %852 = vmatpush2.msra.mxu0 0.0
    %853 = vmatprep.mubr.f32.mxu0 0.0
    %854 = vmatmul.mubr.f32.gmra.mxu0 0.0
    %v855 = vpop.f32.mrf.mxu0
    %v856 = vadd.f32 %v777, %v855
    %v857 = vpop.f32.mrf.mxu0
    %v858 = vadd.f32 %v781, %v857
    %859 = vdwg.mxu0
    %860 = vmatprep.subr.mxu0 0.0
    %861 = vmatpush1.msra.mxu0 %v771
    %862 = vmatprep.subr.mxu0 0.0
    %863 = vmatpush1.msra.mxu0 %v768
    %864 = vmatprep.subr.mxu0 0.0
    %865 = vmatpush1.msra.mxu0 %v765
    %866 = vmatprep.subr.mxu0 0.0
    %867 = vmatpush1.msra.mxu0 %v762
    %868 = vmatprep.subr.mxu0 0.0
    %869 = vmatpush1.msra.mxu0 %v759
    %870 = vmatprep.subr.mxu0 0.0
    %871 = vmatpush1.msra.mxu0 %v756
    %872 = vmatprep.subr.mxu0 0.0
    %873 = vmatpush1.msra.mxu0 %v753
    %874 = vmatprep.subr.mxu0 0.0
    %875 = vmatpush1.msra.mxu0 %v750
    %876 = vmatprep.subr.mxu0 0.0
    %877 = vmatpush1.msra.mxu0 %v747
    %878 = vmatprep.subr.mxu0 0.0
    %879 = vmatpush1.msra.mxu0 %v744
    %880 = vmatprep.subr.mxu0 0.0
    %881 = vmatpush1.msra.mxu0 %v741
    %882 = vmatprep.subr.mxu0 0.0
    %883 = vmatpush1.msra.mxu0 %v738
    %884 = vmatprep.subr.mxu0 0.0
    %885 = vmatpush1.msra.mxu0 %v735
    %886 = vmatprep.subr.mxu0 0.0
    %887 = vmatpush1.msra.mxu0 %v732
    %888 = vmatprep.subr.mxu0 0.0
    %889 = vmatpush1.msra.mxu0 %v729
    %890 = vmatprep.subr.mxu0 0.0
    %891 = vmatpush1.msra.mxu0 %v726
    %892 = vmatprep.subr.mxu0 0.0
    %893 = vmatpush2.msra.mxu0 0.0
    %894 = vmatprep.subr.mxu0 0.0
    %895 = vmatpush2.msra.mxu0 0.0
    %896 = vmatprep.subr.mxu0 0.0
    %897 = vmatpush2.msra.mxu0 0.0
    %898 = vmatprep.subr.mxu0 0.0
    %899 = vmatpush2.msra.mxu0 0.0
    %900 = vmatprep.subr.mxu0 0.0
    %901 = vmatpush2.msra.mxu0 0.0
    %902 = vmatprep.subr.mxu0 0.0
    %903 = vmatpush2.msra.mxu0 0.0
    %904 = vmatprep.subr.mxu0 0.0
    %905 = vmatpush2.msra.mxu0 0.0
    %906 = vmatprep.subr.mxu0 0.0
    %907 = vmatpush2.msra.mxu0 0.0
    %908 = vmatprep.subr.mxu0 0.0
    %909 = vmatpush2.msra.mxu0 0.0
    %910 = vmatprep.subr.mxu0 0.0
    %911 = vmatpush2.msra.mxu0 0.0
    %912 = vmatprep.subr.mxu0 0.0
    %913 = vmatpush2.msra.mxu0 0.0
    %914 = vmatprep.subr.mxu0 0.0
    %915 = vmatpush2.msra.mxu0 0.0
    %916 = vmatprep.subr.mxu0 0.0
    %917 = vmatpush2.msra.mxu0 0.0
    %918 = vmatprep.subr.mxu0 0.0
    %919 = vmatpush2.msra.mxu0 0.0
    %920 = vmatprep.subr.mxu0 0.0
    %921 = vmatpush2.msra.mxu0 0.0
    %922 = vmatprep.subr.mxu0 0.0
    %923 = vmatpush2.msra.mxu0 0.0
    %924 = vmatprep.mubr.f32.mxu0 0.0
    %925 = vmatmul.mubr.f32.gmra.mxu0 0.0
    %v926 = vpop.f32.mrf.mxu0
    %v927 = vadd.f32 %v785, %v926
    %v928 = vpop.f32.mrf.mxu0
    %929 = vdwg.mxu0
    %v931 = vrot.slane %v856, 1
    %v932 = vrot.slane %v856, 2
    %v933 = vrot.slane %v856, 3
    %v934 = vrot.slane %v856, 4
    %v935 = vrot.slane %v856, 5
    %v936 = vrot.slane %v856, 6
    %v937 = vrot.slane %v856, 7
    %v946 = vadd.f32 %v573, %v856
    %v947 = vadd.f32 %v579, %v931
    %v948 = vadd.f32 %v585, %v932
    %v949 = vadd.f32 %v591, %v933
    %v950 = vadd.f32 %v597, %v934
    %v951 = vadd.f32 %v603, %v935
    %v952 = vadd.f32 %v609, %v936
    %v953 = vadd.f32 %v615, %v937
    %v954 = vxor.u32 %v946, 2147483648
    %v955 = vxor.u32 %v947, 2147483648
    %v956 = vxor.u32 %v948, 2147483648
    %v957 = vxor.u32 %v949, 2147483648
    %v958 = vxor.u32 %v950, 2147483648
    %v959 = vxor.u32 %v951, 2147483648
    %v960 = vxor.u32 %v952, 2147483648
    %v961 = vxor.u32 %v953, 2147483648
    %v962 = vmul.f32 %v954, 1.442695
    %v963 = vpow.pop %v962
    %v964 = vmul.f32 %v955, 1.442695
    %v965 = vpow.pop %v964
    %v966 = vmul.f32 %v956, 1.442695
    %v967 = vpow.pop %v966
    %v968 = vmul.f32 %v957, 1.442695
    %v969 = vpow.pop %v968
    %v970 = vmul.f32 %v958, 1.442695
    %v971 = vpow.pop %v970
    %v972 = vmul.f32 %v959, 1.442695
    %v973 = vpow.pop %v972
    %v974 = vmul.f32 %v960, 1.442695
    %v975 = vpow.pop %v974
    %v976 = vmul.f32 %v961, 1.442695
    %v977 = vpow.pop %v976
    %v978 = vadd.f32 %v963, 1.0
    %v979 = vadd.f32 %v965, 1.0
    %v980 = vadd.f32 %v967, 1.0
    %v981 = vadd.f32 %v969, 1.0
    %v982 = vadd.f32 %v971, 1.0
    %v983 = vadd.f32 %v973, 1.0
    %v984 = vadd.f32 %v975, 1.0
    %v985 = vadd.f32 %v977, 1.0
    %v986 = vrcp.pop %v978
    %v987 = vmul.f32 1.0, %v986
    %v988 = vrcp.pop %v979
    %v989 = vmul.f32 1.0, %v988
    %v990 = vrcp.pop %v980
    %v991 = vmul.f32 1.0, %v990
    %v992 = vrcp.pop %v981
    %v993 = vmul.f32 1.0, %v992
    %v994 = vrcp.pop %v982
    %v995 = vmul.f32 1.0, %v994
    %v996 = vrcp.pop %v983
    %v997 = vmul.f32 1.0, %v996
    %v998 = vrcp.pop %v984
    %v999 = vmul.f32 1.0, %v998
    %v1000 = vrcp.pop %v985
    %v1001 = vmul.f32 1.0, %v1000
    %v1003 = vrot.slane %v858, 1
    %v1004 = vrot.slane %v858, 2
    %v1005 = vrot.slane %v858, 3
    %v1006 = vrot.slane %v858, 4
    %v1007 = vrot.slane %v858, 5
    %v1008 = vrot.slane %v858, 6
    %v1009 = vrot.slane %v858, 7
    %v1018 = vadd.f32 %v575, %v858
    %v1019 = vadd.f32 %v581, %v1003
    %v1020 = vadd.f32 %v587, %v1004
    %v1021 = vadd.f32 %v593, %v1005
    %v1022 = vadd.f32 %v599, %v1006
    %v1023 = vadd.f32 %v605, %v1007
    %v1024 = vadd.f32 %v611, %v1008
    %v1025 = vadd.f32 %v617, %v1009
    %v1026 = vxor.u32 %v1018, 2147483648
    %v1027 = vxor.u32 %v1019, 2147483648
    %v1028 = vxor.u32 %v1020, 2147483648
    %v1029 = vxor.u32 %v1021, 2147483648
    %v1030 = vxor.u32 %v1022, 2147483648
    %v1031 = vxor.u32 %v1023, 2147483648
    %v1032 = vxor.u32 %v1024, 2147483648
    %v1033 = vxor.u32 %v1025, 2147483648
    %v1034 = vmul.f32 %v1026, 1.442695
    %v1035 = vpow.pop %v1034
    %v1036 = vmul.f32 %v1027, 1.442695
    %v1037 = vpow.pop %v1036
    %v1038 = vmul.f32 %v1028, 1.442695
    %v1039 = vpow.pop %v1038
    %v1040 = vmul.f32 %v1029, 1.442695
    %v1041 = vpow.pop %v1040
    %v1042 = vmul.f32 %v1030, 1.442695
    %v1043 = vpow.pop %v1042
    %v1044 = vmul.f32 %v1031, 1.442695
    %v1045 = vpow.pop %v1044
    %v1046 = vmul.f32 %v1032, 1.442695
    %v1047 = vpow.pop %v1046
    %v1048 = vmul.f32 %v1033, 1.442695
    %v1049 = vpow.pop %v1048
    %v1050 = vadd.f32 %v1035, 1.0
    %v1051 = vadd.f32 %v1037, 1.0
    %v1052 = vadd.f32 %v1039, 1.0
    %v1053 = vadd.f32 %v1041, 1.0
    %v1054 = vadd.f32 %v1043, 1.0
    %v1055 = vadd.f32 %v1045, 1.0
    %v1056 = vadd.f32 %v1047, 1.0
    %v1057 = vadd.f32 %v1049, 1.0
    %v1058 = vrcp.pop %v1050
    %v1059 = vmul.f32 1.0, %v1058
    %v1060 = vrcp.pop %v1051
    %v1061 = vmul.f32 1.0, %v1060
    %v1062 = vrcp.pop %v1052
    %v1063 = vmul.f32 1.0, %v1062
    %v1064 = vrcp.pop %v1053
    %v1065 = vmul.f32 1.0, %v1064
    %v1066 = vrcp.pop %v1054
    %v1067 = vmul.f32 1.0, %v1066
    %v1068 = vrcp.pop %v1055
    %v1069 = vmul.f32 1.0, %v1068
    %v1070 = vrcp.pop %v1056
    %v1071 = vmul.f32 1.0, %v1070
    %v1072 = vrcp.pop %v1057
    %v1073 = vmul.f32 1.0, %v1072
    %v1075 = vrot.slane %v927, 1
    %v1076 = vrot.slane %v927, 2
    %v1077 = vrot.slane %v927, 3
    %v1078 = vrot.slane %v927, 4
    %v1079 = vrot.slane %v927, 5
    %v1080 = vrot.slane %v927, 6
    %v1081 = vrot.slane %v927, 7
    %v1090 = vmul.f32 %v987, %v927
    %v1091 = vmul.f32 %v989, %v1075
    %v1092 = vmul.f32 %v991, %v1076
    %v1093 = vmul.f32 %v993, %v1077
    %v1094 = vmul.f32 %v995, %v1078
    %v1095 = vmul.f32 %v997, %v1079
    %v1096 = vmul.f32 %v999, %v1080
    %v1097 = vmul.f32 %v1001, %v1081
    %v1098 = vadd.f32 %v686, %v1090
    %v1099 = vadd.f32 %v691, %v1091
    %v1100 = vadd.f32 %v696, %v1092
    %v1101 = vadd.f32 %v701, %v1093
    %v1102 = vadd.f32 %v706, %v1094
    %v1103 = vadd.f32 %v711, %v1095
    %v1104 = vadd.f32 %v716, %v1096
    %v1105 = vadd.f32 %v721, %v1097
    %v1106 = vtanh.pop %v1098
    %v1107 = vtanh.pop %v1099
    %v1108 = vtanh.pop %v1100
    %v1109 = vtanh.pop %v1101
    %v1110 = vtanh.pop %v1102
    %v1111 = vtanh.pop %v1103
    %v1112 = vtanh.pop %v1104
    %v1113 = vtanh.pop %v1105
    %v1114 = vsub.f32 1.0, %v1059
    %v1115 = vsub.f32 1.0, %v1061
    %v1116 = vsub.f32 1.0, %v1063
    %v1117 = vsub.f32 1.0, %v1065
    %v1118 = vsub.f32 1.0, %v1067
    %v1119 = vsub.f32 1.0, %v1069
    %v1120 = vsub.f32 1.0, %v1071
    %v1121 = vsub.f32 1.0, %v1073
    %v1122 = vmul.f32 %v1114, %v1106
    %v1123 = vmul.f32 %v1115, %v1107
    %v1124 = vmul.f32 %v1116, %v1108
    %v1125 = vmul.f32 %v1117, %v1109
    %v1126 = vmul.f32 %v1118, %v1110
    %v1127 = vmul.f32 %v1119, %v1111
    %v1128 = vmul.f32 %v1120, %v1112
    %v1129 = vmul.f32 %v1121, %v1113
    %v1130 = vmul.f32 %v1059, 0.0
    %v1131 = vmul.f32 %v1061, 0.0
    %v1132 = vmul.f32 %v1063, 0.0
    %v1133 = vmul.f32 %v1065, 0.0
    %v1134 = vmul.f32 %v1067, 0.0
    %v1135 = vmul.f32 %v1069, 0.0
    %v1136 = vmul.f32 %v1071, 0.0
    %v1137 = vmul.f32 %v1073, 0.0
    %v1138 = vadd.f32 %v1122, %v1130
    %v1139 = vadd.f32 %v1123, %v1131
    %v1140 = vadd.f32 %v1124, %v1132
    %v1141 = vadd.f32 %v1125, %v1133
    %v1142 = vadd.f32 %v1126, %v1134
    %v1143 = vadd.f32 %v1127, %v1135
    %v1144 = vadd.f32 %v1128, %v1136
    %v1145 = vadd.f32 %v1129, %v1137
    %v1154 = vrot.slane %v1139, 7
    %vm1155 = vcmask 1041409
    %v1156 = vsel %vm1155, %v1154, %v1138
    %v1157 = vrot.slane %v1140, 6
    %vm1158 = vcmask 1042434
    %v1159 = vsel %vm1158, %v1157, %v1156
    %v1160 = vrot.slane %v1141, 5
    %vm1161 = vcmask 1043459
    %v1162 = vsel %vm1161, %v1160, %v1159
    %v1163 = vrot.slane %v1142, 4
    %vm1164 = vcmask 1044484
    %v1165 = vsel %vm1164, %v1163, %v1162
    %v1166 = vrot.slane %v1143, 3
    %vm1167 = vcmask 1045509
    %v1168 = vsel %vm1167, %v1166, %v1165
    %v1169 = vrot.slane %v1144, 2
    %vm1170 = vcmask 1046534
    %v1171 = vsel %vm1170, %v1169, %v1168
    %v1172 = vrot.slane %v1145, 1
    %vm1173 = vcmask 1047559
    %v1174 = vsel %vm1173, %v1172, %v1171
    %1176 = vmatprep.subr.mxu0 %v770
    %1177 = vmatpush1.msra.mxu0 %v769
    %1178 = vmatprep.subr.mxu0 %v767
    %1179 = vmatpush1.msra.mxu0 %v766
    %1180 = vmatprep.subr.mxu0 %v764
    %1181 = vmatpush1.msra.mxu0 %v763
    %1182 = vmatprep.subr.mxu0 %v761
    %1183 = vmatpush1.msra.mxu0 %v760
    %1184 = vmatprep.subr.mxu0 %v758
    %1185 = vmatpush1.msra.mxu0 %v757
    %1186 = vmatprep.subr.mxu0 %v755
    %1187 = vmatpush1.msra.mxu0 %v754
    %1188 = vmatprep.subr.mxu0 %v752
    %1189 = vmatpush1.msra.mxu0 %v751
    %1190 = vmatprep.subr.mxu0 %v749
    %1191 = vmatpush1.msra.mxu0 %v748
    %1192 = vmatprep.subr.mxu0 %v746
    %1193 = vmatpush1.msra.mxu0 %v745
    %1194 = vmatprep.subr.mxu0 %v743
    %1195 = vmatpush1.msra.mxu0 %v742
    %1196 = vmatprep.subr.mxu0 %v740
    %1197 = vmatpush1.msra.mxu0 %v739
    %1198 = vmatprep.subr.mxu0 %v737
    %1199 = vmatpush1.msra.mxu0 %v736
    %1200 = vmatprep.subr.mxu0 %v734
    %1201 = vmatpush1.msra.mxu0 %v733
    %1202 = vmatprep.subr.mxu0 %v731
    %1203 = vmatpush1.msra.mxu0 %v730
    %1204 = vmatprep.subr.mxu0 %v728
    %1205 = vmatpush1.msra.mxu0 %v727
    %1206 = vmatprep.subr.mxu0 %v725
    %1207 = vmatpush1.msra.mxu0 %v724
    %1208 = vmatprep.subr.mxu0 0.0
    %1209 = vmatpush2.msra.mxu0 0.0
    %1210 = vmatprep.subr.mxu0 0.0
    %1211 = vmatpush2.msra.mxu0 0.0
    %1212 = vmatprep.subr.mxu0 0.0
    %1213 = vmatpush2.msra.mxu0 0.0
    %1214 = vmatprep.subr.mxu0 0.0
    %1215 = vmatpush2.msra.mxu0 0.0
    %1216 = vmatprep.subr.mxu0 0.0
    %1217 = vmatpush2.msra.mxu0 0.0
    %1218 = vmatprep.subr.mxu0 0.0
    %1219 = vmatpush2.msra.mxu0 0.0
    %1220 = vmatprep.subr.mxu0 0.0
    %1221 = vmatpush2.msra.mxu0 0.0
    %1222 = vmatprep.subr.mxu0 0.0
    %1223 = vmatpush2.msra.mxu0 0.0
    %1224 = vmatprep.subr.mxu0 0.0
    %1225 = vmatpush2.msra.mxu0 0.0
    %1226 = vmatprep.subr.mxu0 0.0
    %1227 = vmatpush2.msra.mxu0 0.0
    %1228 = vmatprep.subr.mxu0 0.0
    %1229 = vmatpush2.msra.mxu0 0.0
    %1230 = vmatprep.subr.mxu0 0.0
    %1231 = vmatpush2.msra.mxu0 0.0
    %1232 = vmatprep.subr.mxu0 0.0
    %1233 = vmatpush2.msra.mxu0 0.0
    %1234 = vmatprep.subr.mxu0 0.0
    %1235 = vmatpush2.msra.mxu0 0.0
    %1236 = vmatprep.subr.mxu0 0.0
    %1237 = vmatpush2.msra.mxu0 0.0
    %1238 = vmatprep.subr.mxu0 0.0
    %1239 = vmatpush2.msra.mxu0 0.0
    %1240 = vmatprep.mubr.f32.mxu0 0.0
    %1241 = vmatmul.mubr.f32.gmra.mxu0 %v1174
    %v1242 = vpop.f32.mrf.mxu0
    %v1243 = vadd.f32 %v777, %v1242
    %v1244 = vpop.f32.mrf.mxu0
    %v1245 = vadd.f32 %v781, %v1244
    %1246 = vdwg.mxu0
    %1247 = vmatprep.subr.mxu0 0.0
    %1248 = vmatpush1.msra.mxu0 %v771
    %1249 = vmatprep.subr.mxu0 0.0
    %1250 = vmatpush1.msra.mxu0 %v768
    %1251 = vmatprep.subr.mxu0 0.0
    %1252 = vmatpush1.msra.mxu0 %v765
    %1253 = vmatprep.subr.mxu0 0.0
    %1254 = vmatpush1.msra.mxu0 %v762
    %1255 = vmatprep.subr.mxu0 0.0
    %1256 = vmatpush1.msra.mxu0 %v759
    %1257 = vmatprep.subr.mxu0 0.0
    %1258 = vmatpush1.msra.mxu0 %v756
    %1259 = vmatprep.subr.mxu0 0.0
    %1260 = vmatpush1.msra.mxu0 %v753
    %1261 = vmatprep.subr.mxu0 0.0
    %1262 = vmatpush1.msra.mxu0 %v750
    %1263 = vmatprep.subr.mxu0 0.0
    %1264 = vmatpush1.msra.mxu0 %v747
    %1265 = vmatprep.subr.mxu0 0.0
    %1266 = vmatpush1.msra.mxu0 %v744
    %1267 = vmatprep.subr.mxu0 0.0
    %1268 = vmatpush1.msra.mxu0 %v741
    %1269 = vmatprep.subr.mxu0 0.0
    %1270 = vmatpush1.msra.mxu0 %v738
    %1271 = vmatprep.subr.mxu0 0.0
    %1272 = vmatpush1.msra.mxu0 %v735
    %1273 = vmatprep.subr.mxu0 0.0
    %1274 = vmatpush1.msra.mxu0 %v732
    %1275 = vmatprep.subr.mxu0 0.0
    %1276 = vmatpush1.msra.mxu0 %v729
    %1277 = vmatprep.subr.mxu0 0.0
    %1278 = vmatpush1.msra.mxu0 %v726
    %1279 = vmatprep.subr.mxu0 0.0
    %1280 = vmatpush2.msra.mxu0 0.0
    %1281 = vmatprep.subr.mxu0 0.0
    %1282 = vmatpush2.msra.mxu0 0.0
    %1283 = vmatprep.subr.mxu0 0.0
    %1284 = vmatpush2.msra.mxu0 0.0
    %1285 = vmatprep.subr.mxu0 0.0
    %1286 = vmatpush2.msra.mxu0 0.0
    %1287 = vmatprep.subr.mxu0 0.0
    %1288 = vmatpush2.msra.mxu0 0.0
    %1289 = vmatprep.subr.mxu0 0.0
    %1290 = vmatpush2.msra.mxu0 0.0
    %1291 = vmatprep.subr.mxu0 0.0
    %1292 = vmatpush2.msra.mxu0 0.0
    %1293 = vmatprep.subr.mxu0 0.0
    %1294 = vmatpush2.msra.mxu0 0.0
    %1295 = vmatprep.subr.mxu0 0.0
    %1296 = vmatpush2.msra.mxu0 0.0
    %1297 = vmatprep.subr.mxu0 0.0
    %1298 = vmatpush2.msra.mxu0 0.0
    %1299 = vmatprep.subr.mxu0 0.0
    %1300 = vmatpush2.msra.mxu0 0.0
    %1301 = vmatprep.subr.mxu0 0.0
    %1302 = vmatpush2.msra.mxu0 0.0
    %1303 = vmatprep.subr.mxu0 0.0
    %1304 = vmatpush2.msra.mxu0 0.0
    %1305 = vmatprep.subr.mxu0 0.0
    %1306 = vmatpush2.msra.mxu0 0.0
    %1307 = vmatprep.subr.mxu0 0.0
    %1308 = vmatpush2.msra.mxu0 0.0
    %1309 = vmatprep.subr.mxu0 0.0
    %1310 = vmatpush2.msra.mxu0 0.0
    %1311 = vmatprep.mubr.f32.mxu0 0.0
    %1312 = vmatmul.mubr.f32.gmra.mxu0 %v1174
    %v1313 = vpop.f32.mrf.mxu0
    %v1314 = vadd.f32 %v785, %v1313
    %v1315 = vpop.f32.mrf.mxu0
    %1316 = vdwg.mxu0
    %v1318 = vrot.slane %v1243, 7
    %v1319 = vrot.slane %v1243, 1
    %v1320 = vrot.slane %v1243, 2
    %v1321 = vrot.slane %v1243, 3
    %v1322 = vrot.slane %v1243, 4
    %v1323 = vrot.slane %v1243, 5
    %v1324 = vrot.slane %v1243, 6
    %v1333 = vadd.f32 %v573, %v1318
    %v1334 = vadd.f32 %v579, %v1243
    %v1335 = vadd.f32 %v585, %v1319
    %v1336 = vadd.f32 %v591, %v1320
    %v1337 = vadd.f32 %v597, %v1321
    %v1338 = vadd.f32 %v603, %v1322
    %v1339 = vadd.f32 %v609, %v1323
    %v1340 = vadd.f32 %v615, %v1324
    %v1341 = vxor.u32 %v1333, 2147483648
    %v1342 = vxor.u32 %v1334, 2147483648
    %v1343 = vxor.u32 %v1335, 2147483648
    %v1344 = vxor.u32 %v1336, 2147483648
    %v1345 = vxor.u32 %v1337, 2147483648
    %v1346 = vxor.u32 %v1338, 2147483648
    %v1347 = vxor.u32 %v1339, 2147483648
    %v1348 = vxor.u32 %v1340, 2147483648
    %v1349 = vmul.f32 %v1341, 1.442695
    %v1350 = vpow.pop %v1349
    %v1351 = vmul.f32 %v1342, 1.442695
    %v1352 = vpow.pop %v1351
    %v1353 = vmul.f32 %v1343, 1.442695
    %v1354 = vpow.pop %v1353
    %v1355 = vmul.f32 %v1344, 1.442695
    %v1356 = vpow.pop %v1355
    %v1357 = vmul.f32 %v1345, 1.442695
    %v1358 = vpow.pop %v1357
    %v1359 = vmul.f32 %v1346, 1.442695
    %v1360 = vpow.pop %v1359
    %v1361 = vmul.f32 %v1347, 1.442695
    %v1362 = vpow.pop %v1361
    %v1363 = vmul.f32 %v1348, 1.442695
    %v1364 = vpow.pop %v1363
    %v1365 = vadd.f32 %v1350, 1.0
    %v1366 = vadd.f32 %v1352, 1.0
    %v1367 = vadd.f32 %v1354, 1.0
    %v1368 = vadd.f32 %v1356, 1.0
    %v1369 = vadd.f32 %v1358, 1.0
    %v1370 = vadd.f32 %v1360, 1.0
    %v1371 = vadd.f32 %v1362, 1.0
    %v1372 = vadd.f32 %v1364, 1.0
    %v1373 = vrcp.pop %v1365
    %v1374 = vmul.f32 1.0, %v1373
    %v1375 = vrcp.pop %v1366
    %v1376 = vmul.f32 1.0, %v1375
    %v1377 = vrcp.pop %v1367
    %v1378 = vmul.f32 1.0, %v1377
    %v1379 = vrcp.pop %v1368
    %v1380 = vmul.f32 1.0, %v1379
    %v1381 = vrcp.pop %v1369
    %v1382 = vmul.f32 1.0, %v1381
    %v1383 = vrcp.pop %v1370
    %v1384 = vmul.f32 1.0, %v1383
    %v1385 = vrcp.pop %v1371
    %v1386 = vmul.f32 1.0, %v1385
    %v1387 = vrcp.pop %v1372
    %v1388 = vmul.f32 1.0, %v1387
    %v1390 = vrot.slane %v1245, 7
    %v1391 = vrot.slane %v1245, 1
    %v1392 = vrot.slane %v1245, 2
    %v1393 = vrot.slane %v1245, 3
    %v1394 = vrot.slane %v1245, 4
    %v1395 = vrot.slane %v1245, 5
    %v1396 = vrot.slane %v1245, 6
    %v1405 = vadd.f32 %v575, %v1390
    %v1406 = vadd.f32 %v581, %v1245
    %v1407 = vadd.f32 %v587, %v1391
    %v1408 = vadd.f32 %v593, %v1392
    %v1409 = vadd.f32 %v599, %v1393
    %v1410 = vadd.f32 %v605, %v1394
    %v1411 = vadd.f32 %v611, %v1395
    %v1412 = vadd.f32 %v617, %v1396
    %v1413 = vxor.u32 %v1405, 2147483648
    %v1414 = vxor.u32 %v1406, 2147483648
    %v1415 = vxor.u32 %v1407, 2147483648
    %v1416 = vxor.u32 %v1408, 2147483648
    %v1417 = vxor.u32 %v1409, 2147483648
    %v1418 = vxor.u32 %v1410, 2147483648
    %v1419 = vxor.u32 %v1411, 2147483648
    %v1420 = vxor.u32 %v1412, 2147483648
    %v1421 = vmul.f32 %v1413, 1.442695
    %v1422 = vpow.pop %v1421
    %v1423 = vmul.f32 %v1414, 1.442695
    %v1424 = vpow.pop %v1423
    %v1425 = vmul.f32 %v1415, 1.442695
    %v1426 = vpow.pop %v1425
    %v1427 = vmul.f32 %v1416, 1.442695
    %v1428 = vpow.pop %v1427
    %v1429 = vmul.f32 %v1417, 1.442695
    %v1430 = vpow.pop %v1429
    %v1431 = vmul.f32 %v1418, 1.442695
    %v1432 = vpow.pop %v1431
    %v1433 = vmul.f32 %v1419, 1.442695
    %v1434 = vpow.pop %v1433
    %v1435 = vmul.f32 %v1420, 1.442695
    %v1436 = vpow.pop %v1435
    %v1437 = vadd.f32 %v1422, 1.0
    %v1438 = vadd.f32 %v1424, 1.0
    %v1439 = vadd.f32 %v1426, 1.0
    %v1440 = vadd.f32 %v1428, 1.0
    %v1441 = vadd.f32 %v1430, 1.0
    %v1442 = vadd.f32 %v1432, 1.0
    %v1443 = vadd.f32 %v1434, 1.0
    %v1444 = vadd.f32 %v1436, 1.0
    %v1445 = vrcp.pop %v1437
    %v1446 = vmul.f32 1.0, %v1445
    %v1447 = vrcp.pop %v1438
    %v1448 = vmul.f32 1.0, %v1447
    %v1449 = vrcp.pop %v1439
    %v1450 = vmul.f32 1.0, %v1449
    %v1451 = vrcp.pop %v1440
    %v1452 = vmul.f32 1.0, %v1451
    %v1453 = vrcp.pop %v1441
    %v1454 = vmul.f32 1.0, %v1453
    %v1455 = vrcp.pop %v1442
    %v1456 = vmul.f32 1.0, %v1455
    %v1457 = vrcp.pop %v1443
    %v1458 = vmul.f32 1.0, %v1457
    %v1459 = vrcp.pop %v1444
    %v1460 = vmul.f32 1.0, %v1459
    %v1462 = vrot.slane %v1314, 7
    %v1463 = vrot.slane %v1314, 1
    %v1464 = vrot.slane %v1314, 2
    %v1465 = vrot.slane %v1314, 3
    %v1466 = vrot.slane %v1314, 4
    %v1467 = vrot.slane %v1314, 5
    %v1468 = vrot.slane %v1314, 6
    %v1477 = vmul.f32 %v1374, %v1462
    %v1478 = vmul.f32 %v1376, %v1314
    %v1479 = vmul.f32 %v1378, %v1463
    %v1480 = vmul.f32 %v1380, %v1464
    %v1481 = vmul.f32 %v1382, %v1465
    %v1482 = vmul.f32 %v1384, %v1466
    %v1483 = vmul.f32 %v1386, %v1467
    %v1484 = vmul.f32 %v1388, %v1468
    %v1485 = vadd.f32 %v686, %v1477
    %v1486 = vadd.f32 %v691, %v1478
    %v1487 = vadd.f32 %v696, %v1479
    %v1488 = vadd.f32 %v701, %v1480
    %v1489 = vadd.f32 %v706, %v1481
    %v1490 = vadd.f32 %v711, %v1482
    %v1491 = vadd.f32 %v716, %v1483
    %v1492 = vadd.f32 %v721, %v1484
    %v1493 = vtanh.pop %v1485
    %v1494 = vtanh.pop %v1486
    %v1495 = vtanh.pop %v1487
    %v1496 = vtanh.pop %v1488
    %v1497 = vtanh.pop %v1489
    %v1498 = vtanh.pop %v1490
    %v1499 = vtanh.pop %v1491
    %v1500 = vtanh.pop %v1492
    %v1501 = vsub.f32 1.0, %v1446
    %v1502 = vsub.f32 1.0, %v1448
    %v1503 = vsub.f32 1.0, %v1450
    %v1504 = vsub.f32 1.0, %v1452
    %v1505 = vsub.f32 1.0, %v1454
    %v1506 = vsub.f32 1.0, %v1456
    %v1507 = vsub.f32 1.0, %v1458
    %v1508 = vsub.f32 1.0, %v1460
    %v1509 = vmul.f32 %v1501, %v1493
    %v1510 = vmul.f32 %v1502, %v1494
    %v1511 = vmul.f32 %v1503, %v1495
    %v1512 = vmul.f32 %v1504, %v1496
    %v1513 = vmul.f32 %v1505, %v1497
    %v1514 = vmul.f32 %v1506, %v1498
    %v1515 = vmul.f32 %v1507, %v1499
    %v1516 = vmul.f32 %v1508, %v1500
    %v1517 = vrot.slane %v1138, 7
    %v1518 = vrot.slane %v1140, 7
    %v1519 = vrot.slane %v1141, 7
    %v1520 = vrot.slane %v1142, 7
    %v1521 = vrot.slane %v1143, 7
    %v1522 = vrot.slane %v1144, 7
    %v1523 = vrot.slane %v1145, 7
    %v1532 = vmul.f32 %v1446, %v1517
    %v1533 = vmul.f32 %v1448, %v1154
    %v1534 = vmul.f32 %v1450, %v1518
    %v1535 = vmul.f32 %v1452, %v1519
    %v1536 = vmul.f32 %v1454, %v1520
    %v1537 = vmul.f32 %v1456, %v1521
    %v1538 = vmul.f32 %v1458, %v1522
    %v1539 = vmul.f32 %v1460, %v1523
    %v1540 = vadd.f32 %v1509, %v1532
    %v1541 = vadd.f32 %v1510, %v1533
    %v1542 = vadd.f32 %v1511, %v1534
    %v1543 = vadd.f32 %v1512, %v1535
    %v1544 = vadd.f32 %v1513, %v1536
    %v1545 = vadd.f32 %v1514, %v1537
    %v1546 = vadd.f32 %v1515, %v1538
    %v1547 = vadd.f32 %v1516, %v1539
    %v1556 = vrot.slane %v1540, 1
    %v1557 = vsel %vm1155, %v1541, %v1556
    %v1558 = vrot.slane %v1542, 7
    %v1559 = vsel %vm1158, %v1558, %v1557
    %v1560 = vrot.slane %v1543, 6
    %v1561 = vsel %vm1161, %v1560, %v1559
    %v1562 = vrot.slane %v1544, 5
    %v1563 = vsel %vm1164, %v1562, %v1561
    %v1564 = vrot.slane %v1545, 4
    %v1565 = vsel %vm1167, %v1564, %v1563
    %v1566 = vrot.slane %v1546, 3
    %v1567 = vsel %vm1170, %v1566, %v1565
    %v1568 = vrot.slane %v1547, 2
    %v1569 = vsel %vm1173, %v1568, %v1567
    %1571 = vmatprep.subr.mxu0 %v770
    %1572 = vmatpush1.msra.mxu0 %v769
    %1573 = vmatprep.subr.mxu0 %v767
    %1574 = vmatpush1.msra.mxu0 %v766
    %1575 = vmatprep.subr.mxu0 %v764
    %1576 = vmatpush1.msra.mxu0 %v763
    %1577 = vmatprep.subr.mxu0 %v761
    %1578 = vmatpush1.msra.mxu0 %v760
    %1579 = vmatprep.subr.mxu0 %v758
    %1580 = vmatpush1.msra.mxu0 %v757
    %1581 = vmatprep.subr.mxu0 %v755
    %1582 = vmatpush1.msra.mxu0 %v754
    %1583 = vmatprep.subr.mxu0 %v752
    %1584 = vmatpush1.msra.mxu0 %v751
    %1585 = vmatprep.subr.mxu0 %v749
    %1586 = vmatpush1.msra.mxu0 %v748
    %1587 = vmatprep.subr.mxu0 %v746
    %1588 = vmatpush1.msra.mxu0 %v745
    %1589 = vmatprep.subr.mxu0 %v743
    %1590 = vmatpush1.msra.mxu0 %v742
    %1591 = vmatprep.subr.mxu0 %v740
    %1592 = vmatpush1.msra.mxu0 %v739
    %1593 = vmatprep.subr.mxu0 %v737
    %1594 = vmatpush1.msra.mxu0 %v736
    %1595 = vmatprep.subr.mxu0 %v734
    %1596 = vmatpush1.msra.mxu0 %v733
    %1597 = vmatprep.subr.mxu0 %v731
    %1598 = vmatpush1.msra.mxu0 %v730
    %1599 = vmatprep.subr.mxu0 %v728
    %1600 = vmatpush1.msra.mxu0 %v727
    %1601 = vmatprep.subr.mxu0 %v725
    %1602 = vmatpush1.msra.mxu0 %v724
    %1603 = vmatprep.subr.mxu0 0.0
    %1604 = vmatpush2.msra.mxu0 0.0
    %1605 = vmatprep.subr.mxu0 0.0
    %1606 = vmatpush2.msra.mxu0 0.0
    %1607 = vmatprep.subr.mxu0 0.0
    %1608 = vmatpush2.msra.mxu0 0.0
    %1609 = vmatprep.subr.mxu0 0.0
    %1610 = vmatpush2.msra.mxu0 0.0
    %1611 = vmatprep.subr.mxu0 0.0
    %1612 = vmatpush2.msra.mxu0 0.0
    %1613 = vmatprep.subr.mxu0 0.0
    %1614 = vmatpush2.msra.mxu0 0.0
    %1615 = vmatprep.subr.mxu0 0.0
    %1616 = vmatpush2.msra.mxu0 0.0
    %1617 = vmatprep.subr.mxu0 0.0
    %1618 = vmatpush2.msra.mxu0 0.0
    %1619 = vmatprep.subr.mxu0 0.0
    %1620 = vmatpush2.msra.mxu0 0.0
    %1621 = vmatprep.subr.mxu0 0.0
    %1622 = vmatpush2.msra.mxu0 0.0
    %1623 = vmatprep.subr.mxu0 0.0
    %1624 = vmatpush2.msra.mxu0 0.0
    %1625 = vmatprep.subr.mxu0 0.0
    %1626 = vmatpush2.msra.mxu0 0.0
    %1627 = vmatprep.subr.mxu0 0.0
    %1628 = vmatpush2.msra.mxu0 0.0
    %1629 = vmatprep.subr.mxu0 0.0
    %1630 = vmatpush2.msra.mxu0 0.0
    %1631 = vmatprep.subr.mxu0 0.0
    %1632 = vmatpush2.msra.mxu0 0.0
    %1633 = vmatprep.subr.mxu0 0.0
    %1634 = vmatpush2.msra.mxu0 0.0
    %1635 = vmatprep.mubr.f32.mxu0 0.0
    %1636 = vmatmul.mubr.f32.gmra.mxu0 %v1569
    %v1637 = vpop.f32.mrf.mxu0
    %v1638 = vadd.f32 %v777, %v1637
    %v1639 = vpop.f32.mrf.mxu0
    %v1640 = vadd.f32 %v781, %v1639
    %1641 = vdwg.mxu0
    %1642 = vmatprep.subr.mxu0 0.0
    %1643 = vmatpush1.msra.mxu0 %v771
    %1644 = vmatprep.subr.mxu0 0.0
    %1645 = vmatpush1.msra.mxu0 %v768
    %1646 = vmatprep.subr.mxu0 0.0
    %1647 = vmatpush1.msra.mxu0 %v765
    %1648 = vmatprep.subr.mxu0 0.0
    %1649 = vmatpush1.msra.mxu0 %v762
    %1650 = vmatprep.subr.mxu0 0.0
    %1651 = vmatpush1.msra.mxu0 %v759
    %1652 = vmatprep.subr.mxu0 0.0
    %1653 = vmatpush1.msra.mxu0 %v756
    %1654 = vmatprep.subr.mxu0 0.0
    %1655 = vmatpush1.msra.mxu0 %v753
    %1656 = vmatprep.subr.mxu0 0.0
    %1657 = vmatpush1.msra.mxu0 %v750
    %1658 = vmatprep.subr.mxu0 0.0
    %1659 = vmatpush1.msra.mxu0 %v747
    %1660 = vmatprep.subr.mxu0 0.0
    %1661 = vmatpush1.msra.mxu0 %v744
    %1662 = vmatprep.subr.mxu0 0.0
    %1663 = vmatpush1.msra.mxu0 %v741
    %1664 = vmatprep.subr.mxu0 0.0
    %1665 = vmatpush1.msra.mxu0 %v738
    %1666 = vmatprep.subr.mxu0 0.0
    %1667 = vmatpush1.msra.mxu0 %v735
    %1668 = vmatprep.subr.mxu0 0.0
    %1669 = vmatpush1.msra.mxu0 %v732
    %1670 = vmatprep.subr.mxu0 0.0
    %1671 = vmatpush1.msra.mxu0 %v729
    %1672 = vmatprep.subr.mxu0 0.0
    %1673 = vmatpush1.msra.mxu0 %v726
    %1674 = vmatprep.subr.mxu0 0.0
    %1675 = vmatpush2.msra.mxu0 0.0
    %1676 = vmatprep.subr.mxu0 0.0
    %1677 = vmatpush2.msra.mxu0 0.0
    %1678 = vmatprep.subr.mxu0 0.0
    %1679 = vmatpush2.msra.mxu0 0.0
    %1680 = vmatprep.subr.mxu0 0.0
    %1681 = vmatpush2.msra.mxu0 0.0
    %1682 = vmatprep.subr.mxu0 0.0
    %1683 = vmatpush2.msra.mxu0 0.0
    %1684 = vmatprep.subr.mxu0 0.0
    %1685 = vmatpush2.msra.mxu0 0.0
    %1686 = vmatprep.subr.mxu0 0.0
    %1687 = vmatpush2.msra.mxu0 0.0
    %1688 = vmatprep.subr.mxu0 0.0
    %1689 = vmatpush2.msra.mxu0 0.0
    %1690 = vmatprep.subr.mxu0 0.0
    %1691 = vmatpush2.msra.mxu0 0.0
    %1692 = vmatprep.subr.mxu0 0.0
    %1693 = vmatpush2.msra.mxu0 0.0
    %1694 = vmatprep.subr.mxu0 0.0
    %1695 = vmatpush2.msra.mxu0 0.0
    %1696 = vmatprep.subr.mxu0 0.0
    %1697 = vmatpush2.msra.mxu0 0.0
    %1698 = vmatprep.subr.mxu0 0.0
    %1699 = vmatpush2.msra.mxu0 0.0
    %1700 = vmatprep.subr.mxu0 0.0
    %1701 = vmatpush2.msra.mxu0 0.0
    %1702 = vmatprep.subr.mxu0 0.0
    %1703 = vmatpush2.msra.mxu0 0.0
    %1704 = vmatprep.subr.mxu0 0.0
    %1705 = vmatpush2.msra.mxu0 0.0
    %1706 = vmatprep.mubr.f32.mxu0 0.0
    %1707 = vmatmul.mubr.f32.gmra.mxu0 %v1569
    %v1708 = vpop.f32.mrf.mxu0
    %v1709 = vadd.f32 %v785, %v1708
    %v1710 = vpop.f32.mrf.mxu0
    %1711 = vdwg.mxu0
    %v1713 = vrot.slane %v1638, 6
    %v1714 = vrot.slane %v1638, 7
    %v1715 = vrot.slane %v1638, 1
    %v1716 = vrot.slane %v1638, 2
    %v1717 = vrot.slane %v1638, 3
    %v1718 = vrot.slane %v1638, 4
    %v1719 = vrot.slane %v1638, 5
    %v1728 = vadd.f32 %v573, %v1713
    %v1729 = vadd.f32 %v579, %v1714
    %v1730 = vadd.f32 %v585, %v1638
    %v1731 = vadd.f32 %v591, %v1715
    %v1732 = vadd.f32 %v597, %v1716
    %v1733 = vadd.f32 %v603, %v1717
    %v1734 = vadd.f32 %v609, %v1718
    %v1735 = vadd.f32 %v615, %v1719
    %v1736 = vxor.u32 %v1728, 2147483648
    %v1737 = vxor.u32 %v1729, 2147483648
    %v1738 = vxor.u32 %v1730, 2147483648
    %v1739 = vxor.u32 %v1731, 2147483648
    %v1740 = vxor.u32 %v1732, 2147483648
    %v1741 = vxor.u32 %v1733, 2147483648
    %v1742 = vxor.u32 %v1734, 2147483648
    %v1743 = vxor.u32 %v1735, 2147483648
    %v1744 = vmul.f32 %v1736, 1.442695
    %v1745 = vpow.pop %v1744
    %v1746 = vmul.f32 %v1737, 1.442695
    %v1747 = vpow.pop %v1746
    %v1748 = vmul.f32 %v1738, 1.442695
    %v1749 = vpow.pop %v1748
    %v1750 = vmul.f32 %v1739, 1.442695
    %v1751 = vpow.pop %v1750
    %v1752 = vmul.f32 %v1740, 1.442695
    %v1753 = vpow.pop %v1752
    %v1754 = vmul.f32 %v1741, 1.442695
    %v1755 = vpow.pop %v1754
    %v1756 = vmul.f32 %v1742, 1.442695
    %v1757 = vpow.pop %v1756
    %v1758 = vmul.f32 %v1743, 1.442695
    %v1759 = vpow.pop %v1758
    %v1760 = vadd.f32 %v1745, 1.0
    %v1761 = vadd.f32 %v1747, 1.0
    %v1762 = vadd.f32 %v1749, 1.0
    %v1763 = vadd.f32 %v1751, 1.0
    %v1764 = vadd.f32 %v1753, 1.0
    %v1765 = vadd.f32 %v1755, 1.0
    %v1766 = vadd.f32 %v1757, 1.0
    %v1767 = vadd.f32 %v1759, 1.0
    %v1768 = vrcp.pop %v1760
    %v1769 = vmul.f32 1.0, %v1768
    %v1770 = vrcp.pop %v1761
    %v1771 = vmul.f32 1.0, %v1770
    %v1772 = vrcp.pop %v1762
    %v1773 = vmul.f32 1.0, %v1772
    %v1774 = vrcp.pop %v1763
    %v1775 = vmul.f32 1.0, %v1774
    %v1776 = vrcp.pop %v1764
    %v1777 = vmul.f32 1.0, %v1776
    %v1778 = vrcp.pop %v1765
    %v1779 = vmul.f32 1.0, %v1778
    %v1780 = vrcp.pop %v1766
    %v1781 = vmul.f32 1.0, %v1780
    %v1782 = vrcp.pop %v1767
    %v1783 = vmul.f32 1.0, %v1782
    %v1785 = vrot.slane %v1640, 6
    %v1786 = vrot.slane %v1640, 7
    %v1787 = vrot.slane %v1640, 1
    %v1788 = vrot.slane %v1640, 2
    %v1789 = vrot.slane %v1640, 3
    %v1790 = vrot.slane %v1640, 4
    %v1791 = vrot.slane %v1640, 5
    %v1800 = vadd.f32 %v575, %v1785
    %v1801 = vadd.f32 %v581, %v1786
    %v1802 = vadd.f32 %v587, %v1640
    %v1803 = vadd.f32 %v593, %v1787
    %v1804 = vadd.f32 %v599, %v1788
    %v1805 = vadd.f32 %v605, %v1789
    %v1806 = vadd.f32 %v611, %v1790
    %v1807 = vadd.f32 %v617, %v1791
    %v1808 = vxor.u32 %v1800, 2147483648
    %v1809 = vxor.u32 %v1801, 2147483648
    %v1810 = vxor.u32 %v1802, 2147483648
    %v1811 = vxor.u32 %v1803, 2147483648
    %v1812 = vxor.u32 %v1804, 2147483648
    %v1813 = vxor.u32 %v1805, 2147483648
    %v1814 = vxor.u32 %v1806, 2147483648
    %v1815 = vxor.u32 %v1807, 2147483648
    %v1816 = vmul.f32 %v1808, 1.442695
    %v1817 = vpow.pop %v1816
    %v1818 = vmul.f32 %v1809, 1.442695
    %v1819 = vpow.pop %v1818
    %v1820 = vmul.f32 %v1810, 1.442695
    %v1821 = vpow.pop %v1820
    %v1822 = vmul.f32 %v1811, 1.442695
    %v1823 = vpow.pop %v1822
    %v1824 = vmul.f32 %v1812, 1.442695
    %v1825 = vpow.pop %v1824
    %v1826 = vmul.f32 %v1813, 1.442695
    %v1827 = vpow.pop %v1826
    %v1828 = vmul.f32 %v1814, 1.442695
    %v1829 = vpow.pop %v1828
    %v1830 = vmul.f32 %v1815, 1.442695
    %v1831 = vpow.pop %v1830
    %v1832 = vadd.f32 %v1817, 1.0
    %v1833 = vadd.f32 %v1819, 1.0
    %v1834 = vadd.f32 %v1821, 1.0
    %v1835 = vadd.f32 %v1823, 1.0
    %v1836 = vadd.f32 %v1825, 1.0
    %v1837 = vadd.f32 %v1827, 1.0
    %v1838 = vadd.f32 %v1829, 1.0
    %v1839 = vadd.f32 %v1831, 1.0
    %v1840 = vrcp.pop %v1832
    %v1841 = vmul.f32 1.0, %v1840
    %v1842 = vrcp.pop %v1833
    %v1843 = vmul.f32 1.0, %v1842
    %v1844 = vrcp.pop %v1834
    %v1845 = vmul.f32 1.0, %v1844
    %v1846 = vrcp.pop %v1835
    %v1847 = vmul.f32 1.0, %v1846
    %v1848 = vrcp.pop %v1836
    %v1849 = vmul.f32 1.0, %v1848
    %v1850 = vrcp.pop %v1837
    %v1851 = vmul.f32 1.0, %v1850
    %v1852 = vrcp.pop %v1838
    %v1853 = vmul.f32 1.0, %v1852
    %v1854 = vrcp.pop %v1839
    %v1855 = vmul.f32 1.0, %v1854
    %v1857 = vrot.slane %v1709, 6
    %v1858 = vrot.slane %v1709, 7
    %v1859 = vrot.slane %v1709, 1
    %v1860 = vrot.slane %v1709, 2
    %v1861 = vrot.slane %v1709, 3
    %v1862 = vrot.slane %v1709, 4
    %v1863 = vrot.slane %v1709, 5
    %v1872 = vmul.f32 %v1769, %v1857
    %v1873 = vmul.f32 %v1771, %v1858
    %v1874 = vmul.f32 %v1773, %v1709
    %v1875 = vmul.f32 %v1775, %v1859
    %v1876 = vmul.f32 %v1777, %v1860
    %v1877 = vmul.f32 %v1779, %v1861
    %v1878 = vmul.f32 %v1781, %v1862
    %v1879 = vmul.f32 %v1783, %v1863
    %v1880 = vadd.f32 %v686, %v1872
    %v1881 = vadd.f32 %v691, %v1873
    %v1882 = vadd.f32 %v696, %v1874
    %v1883 = vadd.f32 %v701, %v1875
    %v1884 = vadd.f32 %v706, %v1876
    %v1885 = vadd.f32 %v711, %v1877
    %v1886 = vadd.f32 %v716, %v1878
    %v1887 = vadd.f32 %v721, %v1879
    %v1888 = vtanh.pop %v1880
    %v1889 = vtanh.pop %v1881
    %v1890 = vtanh.pop %v1882
    %v1891 = vtanh.pop %v1883
    %v1892 = vtanh.pop %v1884
    %v1893 = vtanh.pop %v1885
    %v1894 = vtanh.pop %v1886
    %v1895 = vtanh.pop %v1887
    %v1896 = vsub.f32 1.0, %v1841
    %v1897 = vsub.f32 1.0, %v1843
    %v1898 = vsub.f32 1.0, %v1845
    %v1899 = vsub.f32 1.0, %v1847
    %v1900 = vsub.f32 1.0, %v1849
    %v1901 = vsub.f32 1.0, %v1851
    %v1902 = vsub.f32 1.0, %v1853
    %v1903 = vsub.f32 1.0, %v1855
    %v1904 = vmul.f32 %v1896, %v1888
    %v1905 = vmul.f32 %v1897, %v1889
    %v1906 = vmul.f32 %v1898, %v1890
    %v1907 = vmul.f32 %v1899, %v1891
    %v1908 = vmul.f32 %v1900, %v1892
    %v1909 = vmul.f32 %v1901, %v1893
    %v1910 = vmul.f32 %v1902, %v1894
    %v1911 = vmul.f32 %v1903, %v1895
    %v1912 = vrot.slane %v1540, 7
    %v1913 = vrot.slane %v1541, 7
    %v1914 = vrot.slane %v1543, 7
    %v1915 = vrot.slane %v1544, 7
    %v1916 = vrot.slane %v1545, 7
    %v1917 = vrot.slane %v1546, 7
    %v1918 = vrot.slane %v1547, 7
    %v1927 = vmul.f32 %v1841, %v1912
    %v1928 = vmul.f32 %v1843, %v1913
    %v1929 = vmul.f32 %v1845, %v1558
    %v1930 = vmul.f32 %v1847, %v1914
    %v1931 = vmul.f32 %v1849, %v1915
    %v1932 = vmul.f32 %v1851, %v1916
    %v1933 = vmul.f32 %v1853, %v1917
    %v1934 = vmul.f32 %v1855, %v1918
    %v1935 = vadd.f32 %v1904, %v1927
    %v1936 = vadd.f32 %v1905, %v1928
    %v1937 = vadd.f32 %v1906, %v1929
    %v1938 = vadd.f32 %v1907, %v1930
    %v1939 = vadd.f32 %v1908, %v1931
    %v1940 = vadd.f32 %v1909, %v1932
    %v1941 = vadd.f32 %v1910, %v1933
    %v1942 = vadd.f32 %v1911, %v1934
    %v1951 = vrot.slane %v1935, 2
    %v1952 = vrot.slane %v1936, 1
    %v1953 = vsel %vm1155, %v1952, %v1951
    %v1954 = vsel %vm1158, %v1937, %v1953
    %v1955 = vrot.slane %v1938, 7
    %v1956 = vsel %vm1161, %v1955, %v1954
    %v1957 = vrot.slane %v1939, 6
    %v1958 = vsel %vm1164, %v1957, %v1956
    %v1959 = vrot.slane %v1940, 5
    %v1960 = vsel %vm1167, %v1959, %v1958
    %v1961 = vrot.slane %v1941, 4
    %v1962 = vsel %vm1170, %v1961, %v1960
    %v1963 = vrot.slane %v1942, 3
    %v1964 = vsel %vm1173, %v1963, %v1962
    %1966 = vmatprep.subr.mxu0 %v770
    %1967 = vmatpush1.msra.mxu0 %v769
    %1968 = vmatprep.subr.mxu0 %v767
    %1969 = vmatpush1.msra.mxu0 %v766
    %1970 = vmatprep.subr.mxu0 %v764
    %1971 = vmatpush1.msra.mxu0 %v763
    %1972 = vmatprep.subr.mxu0 %v761
    %1973 = vmatpush1.msra.mxu0 %v760
    %1974 = vmatprep.subr.mxu0 %v758
    %1975 = vmatpush1.msra.mxu0 %v757
    %1976 = vmatprep.subr.mxu0 %v755
    %1977 = vmatpush1.msra.mxu0 %v754
    %1978 = vmatprep.subr.mxu0 %v752
    %1979 = vmatpush1.msra.mxu0 %v751
    %1980 = vmatprep.subr.mxu0 %v749
    %1981 = vmatpush1.msra.mxu0 %v748
    %1982 = vmatprep.subr.mxu0 %v746
    %1983 = vmatpush1.msra.mxu0 %v745
    %1984 = vmatprep.subr.mxu0 %v743
    %1985 = vmatpush1.msra.mxu0 %v742
    %1986 = vmatprep.subr.mxu0 %v740
    %1987 = vmatpush1.msra.mxu0 %v739
    %1988 = vmatprep.subr.mxu0 %v737
    %1989 = vmatpush1.msra.mxu0 %v736
    %1990 = vmatprep.subr.mxu0 %v734
    %1991 = vmatpush1.msra.mxu0 %v733
    %1992 = vmatprep.subr.mxu0 %v731
    %1993 = vmatpush1.msra.mxu0 %v730
    %1994 = vmatprep.subr.mxu0 %v728
    %1995 = vmatpush1.msra.mxu0 %v727
    %1996 = vmatprep.subr.mxu0 %v725
    %1997 = vmatpush1.msra.mxu0 %v724
    %1998 = vmatprep.subr.mxu0 0.0
    %1999 = vmatpush2.msra.mxu0 0.0
    %2000 = vmatprep.subr.mxu0 0.0
    %2001 = vmatpush2.msra.mxu0 0.0
    %2002 = vmatprep.subr.mxu0 0.0
    %2003 = vmatpush2.msra.mxu0 0.0
    %2004 = vmatprep.subr.mxu0 0.0
    %2005 = vmatpush2.msra.mxu0 0.0
    %2006 = vmatprep.subr.mxu0 0.0
    %2007 = vmatpush2.msra.mxu0 0.0
    %2008 = vmatprep.subr.mxu0 0.0
    %2009 = vmatpush2.msra.mxu0 0.0
    %2010 = vmatprep.subr.mxu0 0.0
    %2011 = vmatpush2.msra.mxu0 0.0
    %2012 = vmatprep.subr.mxu0 0.0
    %2013 = vmatpush2.msra.mxu0 0.0
    %2014 = vmatprep.subr.mxu0 0.0
    %2015 = vmatpush2.msra.mxu0 0.0
    %2016 = vmatprep.subr.mxu0 0.0
    %2017 = vmatpush2.msra.mxu0 0.0
    %2018 = vmatprep.subr.mxu0 0.0
    %2019 = vmatpush2.msra.mxu0 0.0
    %2020 = vmatprep.subr.mxu0 0.0
    %2021 = vmatpush2.msra.mxu0 0.0
    %2022 = vmatprep.subr.mxu0 0.0
    %2023 = vmatpush2.msra.mxu0 0.0
    %2024 = vmatprep.subr.mxu0 0.0
    %2025 = vmatpush2.msra.mxu0 0.0
    %2026 = vmatprep.subr.mxu0 0.0
    %2027 = vmatpush2.msra.mxu0 0.0
    %2028 = vmatprep.subr.mxu0 0.0
    %2029 = vmatpush2.msra.mxu0 0.0
    %2030 = vmatprep.mubr.f32.mxu0 0.0
    %2031 = vmatmul.mubr.f32.gmra.mxu0 %v1964
    %v2032 = vpop.f32.mrf.mxu0
    %v2033 = vadd.f32 %v777, %v2032
    %v2034 = vpop.f32.mrf.mxu0
    %v2035 = vadd.f32 %v781, %v2034
    %2036 = vdwg.mxu0
    %2037 = vmatprep.subr.mxu0 0.0
    %2038 = vmatpush1.msra.mxu0 %v771
    %2039 = vmatprep.subr.mxu0 0.0
    %2040 = vmatpush1.msra.mxu0 %v768
    %2041 = vmatprep.subr.mxu0 0.0
    %2042 = vmatpush1.msra.mxu0 %v765
    %2043 = vmatprep.subr.mxu0 0.0
    %2044 = vmatpush1.msra.mxu0 %v762
    %2045 = vmatprep.subr.mxu0 0.0
    %2046 = vmatpush1.msra.mxu0 %v759
    %2047 = vmatprep.subr.mxu0 0.0
    %2048 = vmatpush1.msra.mxu0 %v756
    %2049 = vmatprep.subr.mxu0 0.0
    %2050 = vmatpush1.msra.mxu0 %v753
    %2051 = vmatprep.subr.mxu0 0.0
    %2052 = vmatpush1.msra.mxu0 %v750
    %2053 = vmatprep.subr.mxu0 0.0
    %2054 = vmatpush1.msra.mxu0 %v747
    %2055 = vmatprep.subr.mxu0 0.0
    %2056 = vmatpush1.msra.mxu0 %v744
    %2057 = vmatprep.subr.mxu0 0.0
    %2058 = vmatpush1.msra.mxu0 %v741
    %2059 = vmatprep.subr.mxu0 0.0
    %2060 = vmatpush1.msra.mxu0 %v738
    %2061 = vmatprep.subr.mxu0 0.0
    %2062 = vmatpush1.msra.mxu0 %v735
    %2063 = vmatprep.subr.mxu0 0.0
    %2064 = vmatpush1.msra.mxu0 %v732
    %2065 = vmatprep.subr.mxu0 0.0
    %2066 = vmatpush1.msra.mxu0 %v729
    %2067 = vmatprep.subr.mxu0 0.0
    %2068 = vmatpush1.msra.mxu0 %v726
    %2069 = vmatprep.subr.mxu0 0.0
    %2070 = vmatpush2.msra.mxu0 0.0
    %2071 = vmatprep.subr.mxu0 0.0
    %2072 = vmatpush2.msra.mxu0 0.0
    %2073 = vmatprep.subr.mxu0 0.0
    %2074 = vmatpush2.msra.mxu0 0.0
    %2075 = vmatprep.subr.mxu0 0.0
    %2076 = vmatpush2.msra.mxu0 0.0
    %2077 = vmatprep.subr.mxu0 0.0
    %2078 = vmatpush2.msra.mxu0 0.0
    %2079 = vmatprep.subr.mxu0 0.0
    %2080 = vmatpush2.msra.mxu0 0.0
    %2081 = vmatprep.subr.mxu0 0.0
    %2082 = vmatpush2.msra.mxu0 0.0
    %2083 = vmatprep.subr.mxu0 0.0
    %2084 = vmatpush2.msra.mxu0 0.0
    %2085 = vmatprep.subr.mxu0 0.0
    %2086 = vmatpush2.msra.mxu0 0.0
    %2087 = vmatprep.subr.mxu0 0.0
    %2088 = vmatpush2.msra.mxu0 0.0
    %2089 = vmatprep.subr.mxu0 0.0
    %2090 = vmatpush2.msra.mxu0 0.0
    %2091 = vmatprep.subr.mxu0 0.0
    %2092 = vmatpush2.msra.mxu0 0.0
    %2093 = vmatprep.subr.mxu0 0.0
    %2094 = vmatpush2.msra.mxu0 0.0
    %2095 = vmatprep.subr.mxu0 0.0
    %2096 = vmatpush2.msra.mxu0 0.0
    %2097 = vmatprep.subr.mxu0 0.0
    %2098 = vmatpush2.msra.mxu0 0.0
    %2099 = vmatprep.subr.mxu0 0.0
    %2100 = vmatpush2.msra.mxu0 0.0
    %2101 = vmatprep.mubr.f32.mxu0 0.0
    %2102 = vmatmul.mubr.f32.gmra.mxu0 %v1964
    %v2103 = vpop.f32.mrf.mxu0
    %v2104 = vadd.f32 %v785, %v2103
    %v2105 = vpop.f32.mrf.mxu0
    %2106 = vdwg.mxu0
    %v2108 = vrot.slane %v2033, 5
    %v2109 = vrot.slane %v2033, 6
    %v2110 = vrot.slane %v2033, 7
    %v2111 = vrot.slane %v2033, 1
    %v2112 = vrot.slane %v2033, 2
    %v2113 = vrot.slane %v2033, 3
    %v2114 = vrot.slane %v2033, 4
    %v2123 = vadd.f32 %v573, %v2108
    %v2124 = vadd.f32 %v579, %v2109
    %v2125 = vadd.f32 %v585, %v2110
    %v2126 = vadd.f32 %v591, %v2033
    %v2127 = vadd.f32 %v597, %v2111
    %v2128 = vadd.f32 %v603, %v2112
    %v2129 = vadd.f32 %v609, %v2113
    %v2130 = vadd.f32 %v615, %v2114
    %v2131 = vxor.u32 %v2123, 2147483648
    %v2132 = vxor.u32 %v2124, 2147483648
    %v2133 = vxor.u32 %v2125, 2147483648
    %v2134 = vxor.u32 %v2126, 2147483648
    %v2135 = vxor.u32 %v2127, 2147483648
    %v2136 = vxor.u32 %v2128, 2147483648
    %v2137 = vxor.u32 %v2129, 2147483648
    %v2138 = vxor.u32 %v2130, 2147483648
    %v2139 = vmul.f32 %v2131, 1.442695
    %v2140 = vpow.pop %v2139
    %v2141 = vmul.f32 %v2132, 1.442695
    %v2142 = vpow.pop %v2141
    %v2143 = vmul.f32 %v2133, 1.442695
    %v2144 = vpow.pop %v2143
    %v2145 = vmul.f32 %v2134, 1.442695
    %v2146 = vpow.pop %v2145
    %v2147 = vmul.f32 %v2135, 1.442695
    %v2148 = vpow.pop %v2147
    %v2149 = vmul.f32 %v2136, 1.442695
    %v2150 = vpow.pop %v2149
    %v2151 = vmul.f32 %v2137, 1.442695
    %v2152 = vpow.pop %v2151
    %v2153 = vmul.f32 %v2138, 1.442695
    %v2154 = vpow.pop %v2153
    %v2155 = vadd.f32 %v2140, 1.0
    %v2156 = vadd.f32 %v2142, 1.0
    %v2157 = vadd.f32 %v2144, 1.0
    %v2158 = vadd.f32 %v2146, 1.0
    %v2159 = vadd.f32 %v2148, 1.0
    %v2160 = vadd.f32 %v2150, 1.0
    %v2161 = vadd.f32 %v2152, 1.0
    %v2162 = vadd.f32 %v2154, 1.0
    %v2163 = vrcp.pop %v2155
    %v2164 = vmul.f32 1.0, %v2163
    %v2165 = vrcp.pop %v2156
    %v2166 = vmul.f32 1.0, %v2165
    %v2167 = vrcp.pop %v2157
    %v2168 = vmul.f32 1.0, %v2167
    %v2169 = vrcp.pop %v2158
    %v2170 = vmul.f32 1.0, %v2169
    %v2171 = vrcp.pop %v2159
    %v2172 = vmul.f32 1.0, %v2171
    %v2173 = vrcp.pop %v2160
    %v2174 = vmul.f32 1.0, %v2173
    %v2175 = vrcp.pop %v2161
    %v2176 = vmul.f32 1.0, %v2175
    %v2177 = vrcp.pop %v2162
    %v2178 = vmul.f32 1.0, %v2177
    %v2180 = vrot.slane %v2035, 5
    %v2181 = vrot.slane %v2035, 6
    %v2182 = vrot.slane %v2035, 7
    %v2183 = vrot.slane %v2035, 1
    %v2184 = vrot.slane %v2035, 2
    %v2185 = vrot.slane %v2035, 3
    %v2186 = vrot.slane %v2035, 4
    %v2195 = vadd.f32 %v575, %v2180
    %v2196 = vadd.f32 %v581, %v2181
    %v2197 = vadd.f32 %v587, %v2182
    %v2198 = vadd.f32 %v593, %v2035
    %v2199 = vadd.f32 %v599, %v2183
    %v2200 = vadd.f32 %v605, %v2184
    %v2201 = vadd.f32 %v611, %v2185
    %v2202 = vadd.f32 %v617, %v2186
    %v2203 = vxor.u32 %v2195, 2147483648
    %v2204 = vxor.u32 %v2196, 2147483648
    %v2205 = vxor.u32 %v2197, 2147483648
    %v2206 = vxor.u32 %v2198, 2147483648
    %v2207 = vxor.u32 %v2199, 2147483648
    %v2208 = vxor.u32 %v2200, 2147483648
    %v2209 = vxor.u32 %v2201, 2147483648
    %v2210 = vxor.u32 %v2202, 2147483648
    %v2211 = vmul.f32 %v2203, 1.442695
    %v2212 = vpow.pop %v2211
    %v2213 = vmul.f32 %v2204, 1.442695
    %v2214 = vpow.pop %v2213
    %v2215 = vmul.f32 %v2205, 1.442695
    %v2216 = vpow.pop %v2215
    %v2217 = vmul.f32 %v2206, 1.442695
    %v2218 = vpow.pop %v2217
    %v2219 = vmul.f32 %v2207, 1.442695
    %v2220 = vpow.pop %v2219
    %v2221 = vmul.f32 %v2208, 1.442695
    %v2222 = vpow.pop %v2221
    %v2223 = vmul.f32 %v2209, 1.442695
    %v2224 = vpow.pop %v2223
    %v2225 = vmul.f32 %v2210, 1.442695
    %v2226 = vpow.pop %v2225
    %v2227 = vadd.f32 %v2212, 1.0
    %v2228 = vadd.f32 %v2214, 1.0
    %v2229 = vadd.f32 %v2216, 1.0
    %v2230 = vadd.f32 %v2218, 1.0
    %v2231 = vadd.f32 %v2220, 1.0
    %v2232 = vadd.f32 %v2222, 1.0
    %v2233 = vadd.f32 %v2224, 1.0
    %v2234 = vadd.f32 %v2226, 1.0
    %v2235 = vrcp.pop %v2227
    %v2236 = vmul.f32 1.0, %v2235
    %v2237 = vrcp.pop %v2228
    %v2238 = vmul.f32 1.0, %v2237
    %v2239 = vrcp.pop %v2229
    %v2240 = vmul.f32 1.0, %v2239
    %v2241 = vrcp.pop %v2230
    %v2242 = vmul.f32 1.0, %v2241
    %v2243 = vrcp.pop %v2231
    %v2244 = vmul.f32 1.0, %v2243
    %v2245 = vrcp.pop %v2232
    %v2246 = vmul.f32 1.0, %v2245
    %v2247 = vrcp.pop %v2233
    %v2248 = vmul.f32 1.0, %v2247
    %v2249 = vrcp.pop %v2234
    %v2250 = vmul.f32 1.0, %v2249
    %v2252 = vrot.slane %v2104, 5
    %v2253 = vrot.slane %v2104, 6
    %v2254 = vrot.slane %v2104, 7
    %v2255 = vrot.slane %v2104, 1
    %v2256 = vrot.slane %v2104, 2
    %v2257 = vrot.slane %v2104, 3
    %v2258 = vrot.slane %v2104, 4
    %v2267 = vmul.f32 %v2164, %v2252
    %v2268 = vmul.f32 %v2166, %v2253
    %v2269 = vmul.f32 %v2168, %v2254
    %v2270 = vmul.f32 %v2170, %v2104
    %v2271 = vmul.f32 %v2172, %v2255
    %v2272 = vmul.f32 %v2174, %v2256
    %v2273 = vmul.f32 %v2176, %v2257
    %v2274 = vmul.f32 %v2178, %v2258
    %v2275 = vadd.f32 %v686, %v2267
    %v2276 = vadd.f32 %v691, %v2268
    %v2277 = vadd.f32 %v696, %v2269
    %v2278 = vadd.f32 %v701, %v2270
    %v2279 = vadd.f32 %v706, %v2271
    %v2280 = vadd.f32 %v711, %v2272
    %v2281 = vadd.f32 %v716, %v2273
    %v2282 = vadd.f32 %v721, %v2274
    %v2283 = vtanh.pop %v2275
    %v2284 = vtanh.pop %v2276
    %v2285 = vtanh.pop %v2277
    %v2286 = vtanh.pop %v2278
    %v2287 = vtanh.pop %v2279
    %v2288 = vtanh.pop %v2280
    %v2289 = vtanh.pop %v2281
    %v2290 = vtanh.pop %v2282
    %v2291 = vsub.f32 1.0, %v2236
    %v2292 = vsub.f32 1.0, %v2238
    %v2293 = vsub.f32 1.0, %v2240
    %v2294 = vsub.f32 1.0, %v2242
    %v2295 = vsub.f32 1.0, %v2244
    %v2296 = vsub.f32 1.0, %v2246
    %v2297 = vsub.f32 1.0, %v2248
    %v2298 = vsub.f32 1.0, %v2250
    %v2299 = vmul.f32 %v2291, %v2283
    %v2300 = vmul.f32 %v2292, %v2284
    %v2301 = vmul.f32 %v2293, %v2285
    %v2302 = vmul.f32 %v2294, %v2286
    %v2303 = vmul.f32 %v2295, %v2287
    %v2304 = vmul.f32 %v2296, %v2288
    %v2305 = vmul.f32 %v2297, %v2289
    %v2306 = vmul.f32 %v2298, %v2290
    %v2307 = vrot.slane %v1935, 7
    %v2308 = vrot.slane %v1936, 7
    %v2309 = vrot.slane %v1937, 7
    %v2310 = vrot.slane %v1939, 7
    %v2311 = vrot.slane %v1940, 7
    %v2312 = vrot.slane %v1941, 7
    %v2313 = vrot.slane %v1942, 7
    %v2322 = vmul.f32 %v2236, %v2307
    %v2323 = vmul.f32 %v2238, %v2308
    %v2324 = vmul.f32 %v2240, %v2309
    %v2325 = vmul.f32 %v2242, %v1955
    %v2326 = vmul.f32 %v2244, %v2310
    %v2327 = vmul.f32 %v2246, %v2311
    %v2328 = vmul.f32 %v2248, %v2312
    %v2329 = vmul.f32 %v2250, %v2313
    %v2330 = vadd.f32 %v2299, %v2322
    %v2331 = vadd.f32 %v2300, %v2323
    %v2332 = vadd.f32 %v2301, %v2324
    %v2333 = vadd.f32 %v2302, %v2325
    %v2334 = vadd.f32 %v2303, %v2326
    %v2335 = vadd.f32 %v2304, %v2327
    %v2336 = vadd.f32 %v2305, %v2328
    %v2337 = vadd.f32 %v2306, %v2329
    %v2346 = vrot.slane %v2330, 3
    %v2347 = vrot.slane %v2331, 2
    %v2348 = vsel %vm1155, %v2347, %v2346
    %v2349 = vrot.slane %v2332, 1
    %v2350 = vsel %vm1158, %v2349, %v2348
    %v2351 = vsel %vm1161, %v2333, %v2350
    %v2352 = vrot.slane %v2334, 7
    %v2353 = vsel %vm1164, %v2352, %v2351
    %v2354 = vrot.slane %v2335, 6
    %v2355 = vsel %vm1167, %v2354, %v2353
    %v2356 = vrot.slane %v2336, 5
    %v2357 = vsel %vm1170, %v2356, %v2355
    %v2358 = vrot.slane %v2337, 4
    %v2359 = vsel %vm1173, %v2358, %v2357
    %2361 = vmatprep.subr.mxu0 %v770
    %2362 = vmatpush1.msra.mxu0 %v769
    %2363 = vmatprep.subr.mxu0 %v767
    %2364 = vmatpush1.msra.mxu0 %v766
    %2365 = vmatprep.subr.mxu0 %v764
    %2366 = vmatpush1.msra.mxu0 %v763
    %2367 = vmatprep.subr.mxu0 %v761
    %2368 = vmatpush1.msra.mxu0 %v760
    %2369 = vmatprep.subr.mxu0 %v758
    %2370 = vmatpush1.msra.mxu0 %v757
    %2371 = vmatprep.subr.mxu0 %v755
    %2372 = vmatpush1.msra.mxu0 %v754
    %2373 = vmatprep.subr.mxu0 %v752
    %2374 = vmatpush1.msra.mxu0 %v751
    %2375 = vmatprep.subr.mxu0 %v749
    %2376 = vmatpush1.msra.mxu0 %v748
    %2377 = vmatprep.subr.mxu0 %v746
    %2378 = vmatpush1.msra.mxu0 %v745
    %2379 = vmatprep.subr.mxu0 %v743
    %2380 = vmatpush1.msra.mxu0 %v742
    %2381 = vmatprep.subr.mxu0 %v740
    %2382 = vmatpush1.msra.mxu0 %v739
    %2383 = vmatprep.subr.mxu0 %v737
    %2384 = vmatpush1.msra.mxu0 %v736
    %2385 = vmatprep.subr.mxu0 %v734
    %2386 = vmatpush1.msra.mxu0 %v733
    %2387 = vmatprep.subr.mxu0 %v731
    %2388 = vmatpush1.msra.mxu0 %v730
    %2389 = vmatprep.subr.mxu0 %v728
    %2390 = vmatpush1.msra.mxu0 %v727
    %2391 = vmatprep.subr.mxu0 %v725
    %2392 = vmatpush1.msra.mxu0 %v724
    %2393 = vmatprep.subr.mxu0 0.0
    %2394 = vmatpush2.msra.mxu0 0.0
    %2395 = vmatprep.subr.mxu0 0.0
    %2396 = vmatpush2.msra.mxu0 0.0
    %2397 = vmatprep.subr.mxu0 0.0
    %2398 = vmatpush2.msra.mxu0 0.0
    %2399 = vmatprep.subr.mxu0 0.0
    %2400 = vmatpush2.msra.mxu0 0.0
    %2401 = vmatprep.subr.mxu0 0.0
    %2402 = vmatpush2.msra.mxu0 0.0
    %2403 = vmatprep.subr.mxu0 0.0
    %2404 = vmatpush2.msra.mxu0 0.0
    %2405 = vmatprep.subr.mxu0 0.0
    %2406 = vmatpush2.msra.mxu0 0.0
    %2407 = vmatprep.subr.mxu0 0.0
    %2408 = vmatpush2.msra.mxu0 0.0
    %2409 = vmatprep.subr.mxu0 0.0
    %2410 = vmatpush2.msra.mxu0 0.0
    %2411 = vmatprep.subr.mxu0 0.0
    %2412 = vmatpush2.msra.mxu0 0.0
    %2413 = vmatprep.subr.mxu0 0.0
    %2414 = vmatpush2.msra.mxu0 0.0
    %2415 = vmatprep.subr.mxu0 0.0
    %2416 = vmatpush2.msra.mxu0 0.0
    %2417 = vmatprep.subr.mxu0 0.0
    %2418 = vmatpush2.msra.mxu0 0.0
    %2419 = vmatprep.subr.mxu0 0.0
    %2420 = vmatpush2.msra.mxu0 0.0
    %2421 = vmatprep.subr.mxu0 0.0
    %2422 = vmatpush2.msra.mxu0 0.0
    %2423 = vmatprep.subr.mxu0 0.0
    %2424 = vmatpush2.msra.mxu0 0.0
    %2425 = vmatprep.mubr.f32.mxu0 0.0
    %2426 = vmatmul.mubr.f32.gmra.mxu0 %v2359
    %v2427 = vpop.f32.mrf.mxu0
    %v2428 = vadd.f32 %v777, %v2427
    %v2429 = vpop.f32.mrf.mxu0
    %v2430 = vadd.f32 %v781, %v2429
    %2431 = vdwg.mxu0
    %2432 = vmatprep.subr.mxu0 0.0
    %2433 = vmatpush1.msra.mxu0 %v771
    %2434 = vmatprep.subr.mxu0 0.0
    %2435 = vmatpush1.msra.mxu0 %v768
    %2436 = vmatprep.subr.mxu0 0.0
    %2437 = vmatpush1.msra.mxu0 %v765
    %2438 = vmatprep.subr.mxu0 0.0
    %2439 = vmatpush1.msra.mxu0 %v762
    %2440 = vmatprep.subr.mxu0 0.0
    %2441 = vmatpush1.msra.mxu0 %v759
    %2442 = vmatprep.subr.mxu0 0.0
    %2443 = vmatpush1.msra.mxu0 %v756
    %2444 = vmatprep.subr.mxu0 0.0
    %2445 = vmatpush1.msra.mxu0 %v753
    %2446 = vmatprep.subr.mxu0 0.0
    %2447 = vmatpush1.msra.mxu0 %v750
    %2448 = vmatprep.subr.mxu0 0.0
    %2449 = vmatpush1.msra.mxu0 %v747
    %2450 = vmatprep.subr.mxu0 0.0
    %2451 = vmatpush1.msra.mxu0 %v744
    %2452 = vmatprep.subr.mxu0 0.0
    %2453 = vmatpush1.msra.mxu0 %v741
    %2454 = vmatprep.subr.mxu0 0.0
    %2455 = vmatpush1.msra.mxu0 %v738
    %2456 = vmatprep.subr.mxu0 0.0
    %2457 = vmatpush1.msra.mxu0 %v735
    %2458 = vmatprep.subr.mxu0 0.0
    %2459 = vmatpush1.msra.mxu0 %v732
    %2460 = vmatprep.subr.mxu0 0.0
    %2461 = vmatpush1.msra.mxu0 %v729
    %2462 = vmatprep.subr.mxu0 0.0
    %2463 = vmatpush1.msra.mxu0 %v726
    %2464 = vmatprep.subr.mxu0 0.0
    %2465 = vmatpush2.msra.mxu0 0.0
    %2466 = vmatprep.subr.mxu0 0.0
    %2467 = vmatpush2.msra.mxu0 0.0
    %2468 = vmatprep.subr.mxu0 0.0
    %2469 = vmatpush2.msra.mxu0 0.0
    %2470 = vmatprep.subr.mxu0 0.0
    %2471 = vmatpush2.msra.mxu0 0.0
    %2472 = vmatprep.subr.mxu0 0.0
    %2473 = vmatpush2.msra.mxu0 0.0
    %2474 = vmatprep.subr.mxu0 0.0
    %2475 = vmatpush2.msra.mxu0 0.0
    %2476 = vmatprep.subr.mxu0 0.0
    %2477 = vmatpush2.msra.mxu0 0.0
    %2478 = vmatprep.subr.mxu0 0.0
    %2479 = vmatpush2.msra.mxu0 0.0
    %2480 = vmatprep.subr.mxu0 0.0
    %2481 = vmatpush2.msra.mxu0 0.0
    %2482 = vmatprep.subr.mxu0 0.0
    %2483 = vmatpush2.msra.mxu0 0.0
    %2484 = vmatprep.subr.mxu0 0.0
    %2485 = vmatpush2.msra.mxu0 0.0
    %2486 = vmatprep.subr.mxu0 0.0
    %2487 = vmatpush2.msra.mxu0 0.0
    %2488 = vmatprep.subr.mxu0 0.0
    %2489 = vmatpush2.msra.mxu0 0.0
    %2490 = vmatprep.subr.mxu0 0.0
    %2491 = vmatpush2.msra.mxu0 0.0
    %2492 = vmatprep.subr.mxu0 0.0
    %2493 = vmatpush2.msra.mxu0 0.0
    %2494 = vmatprep.subr.mxu0 0.0
    %2495 = vmatpush2.msra.mxu0 0.0
    %2496 = vmatprep.mubr.f32.mxu0 0.0
    %2497 = vmatmul.mubr.f32.gmra.mxu0 %v2359
    %v2498 = vpop.f32.mrf.mxu0
    %v2499 = vadd.f32 %v785, %v2498
    %v2500 = vpop.f32.mrf.mxu0
    %2501 = vdwg.mxu0
    %v2503 = vrot.slane %v2428, 4
    %v2504 = vrot.slane %v2428, 5
    %v2505 = vrot.slane %v2428, 6
    %v2506 = vrot.slane %v2428, 7
    %v2507 = vrot.slane %v2428, 1
    %v2508 = vrot.slane %v2428, 2
    %v2509 = vrot.slane %v2428, 3
    %v2518 = vadd.f32 %v573, %v2503
    %v2519 = vadd.f32 %v579, %v2504
    %v2520 = vadd.f32 %v585, %v2505
    %v2521 = vadd.f32 %v591, %v2506
    %v2522 = vadd.f32 %v597, %v2428
    %v2523 = vadd.f32 %v603, %v2507
    %v2524 = vadd.f32 %v609, %v2508
    %v2525 = vadd.f32 %v615, %v2509
    %v2526 = vxor.u32 %v2518, 2147483648
    %v2527 = vxor.u32 %v2519, 2147483648
    %v2528 = vxor.u32 %v2520, 2147483648
    %v2529 = vxor.u32 %v2521, 2147483648
    %v2530 = vxor.u32 %v2522, 2147483648
    %v2531 = vxor.u32 %v2523, 2147483648
    %v2532 = vxor.u32 %v2524, 2147483648
    %v2533 = vxor.u32 %v2525, 2147483648
    %v2534 = vmul.f32 %v2526, 1.442695
    %v2535 = vpow.pop %v2534
    %v2536 = vmul.f32 %v2527, 1.442695
    %v2537 = vpow.pop %v2536
    %v2538 = vmul.f32 %v2528, 1.442695
    %v2539 = vpow.pop %v2538
    %v2540 = vmul.f32 %v2529, 1.442695
    %v2541 = vpow.pop %v2540
    %v2542 = vmul.f32 %v2530, 1.442695
    %v2543 = vpow.pop %v2542
    %v2544 = vmul.f32 %v2531, 1.442695
    %v2545 = vpow.pop %v2544
    %v2546 = vmul.f32 %v2532, 1.442695
    %v2547 = vpow.pop %v2546
    %v2548 = vmul.f32 %v2533, 1.442695
    %v2549 = vpow.pop %v2548
    %v2550 = vadd.f32 %v2535, 1.0
    %v2551 = vadd.f32 %v2537, 1.0
    %v2552 = vadd.f32 %v2539, 1.0
    %v2553 = vadd.f32 %v2541, 1.0
    %v2554 = vadd.f32 %v2543, 1.0
    %v2555 = vadd.f32 %v2545, 1.0
    %v2556 = vadd.f32 %v2547, 1.0
    %v2557 = vadd.f32 %v2549, 1.0
    %v2558 = vrcp.pop %v2550
    %v2559 = vmul.f32 1.0, %v2558
    %v2560 = vrcp.pop %v2551
    %v2561 = vmul.f32 1.0, %v2560
    %v2562 = vrcp.pop %v2552
    %v2563 = vmul.f32 1.0, %v2562
    %v2564 = vrcp.pop %v2553
    %v2565 = vmul.f32 1.0, %v2564
    %v2566 = vrcp.pop %v2554
    %v2567 = vmul.f32 1.0, %v2566
    %v2568 = vrcp.pop %v2555
    %v2569 = vmul.f32 1.0, %v2568
    %v2570 = vrcp.pop %v2556
    %v2571 = vmul.f32 1.0, %v2570
    %v2572 = vrcp.pop %v2557
    %v2573 = vmul.f32 1.0, %v2572
    %v2575 = vrot.slane %v2430, 4
    %v2576 = vrot.slane %v2430, 5
    %v2577 = vrot.slane %v2430, 6
    %v2578 = vrot.slane %v2430, 7
    %v2579 = vrot.slane %v2430, 1
    %v2580 = vrot.slane %v2430, 2
    %v2581 = vrot.slane %v2430, 3
    %v2590 = vadd.f32 %v575, %v2575
    %v2591 = vadd.f32 %v581, %v2576
    %v2592 = vadd.f32 %v587, %v2577
    %v2593 = vadd.f32 %v593, %v2578
    %v2594 = vadd.f32 %v599, %v2430
    %v2595 = vadd.f32 %v605, %v2579
    %v2596 = vadd.f32 %v611, %v2580
    %v2597 = vadd.f32 %v617, %v2581
    %v2598 = vxor.u32 %v2590, 2147483648
    %v2599 = vxor.u32 %v2591, 2147483648
    %v2600 = vxor.u32 %v2592, 2147483648
    %v2601 = vxor.u32 %v2593, 2147483648
    %v2602 = vxor.u32 %v2594, 2147483648
    %v2603 = vxor.u32 %v2595, 2147483648
    %v2604 = vxor.u32 %v2596, 2147483648
    %v2605 = vxor.u32 %v2597, 2147483648
    %v2606 = vmul.f32 %v2598, 1.442695
    %v2607 = vpow.pop %v2606
    %v2608 = vmul.f32 %v2599, 1.442695
    %v2609 = vpow.pop %v2608
    %v2610 = vmul.f32 %v2600, 1.442695
    %v2611 = vpow.pop %v2610
    %v2612 = vmul.f32 %v2601, 1.442695
    %v2613 = vpow.pop %v2612
    %v2614 = vmul.f32 %v2602, 1.442695
    %v2615 = vpow.pop %v2614
    %v2616 = vmul.f32 %v2603, 1.442695
    %v2617 = vpow.pop %v2616
    %v2618 = vmul.f32 %v2604, 1.442695
    %v2619 = vpow.pop %v2618
    %v2620 = vmul.f32 %v2605, 1.442695
    %v2621 = vpow.pop %v2620
    %v2622 = vadd.f32 %v2607, 1.0
    %v2623 = vadd.f32 %v2609, 1.0
    %v2624 = vadd.f32 %v2611, 1.0
    %v2625 = vadd.f32 %v2613, 1.0
    %v2626 = vadd.f32 %v2615, 1.0
    %v2627 = vadd.f32 %v2617, 1.0
    %v2628 = vadd.f32 %v2619, 1.0
    %v2629 = vadd.f32 %v2621, 1.0
    %v2630 = vrcp.pop %v2622
    %v2631 = vmul.f32 1.0, %v2630
    %v2632 = vrcp.pop %v2623
    %v2633 = vmul.f32 1.0, %v2632
    %v2634 = vrcp.pop %v2624
    %v2635 = vmul.f32 1.0, %v2634
    %v2636 = vrcp.pop %v2625
    %v2637 = vmul.f32 1.0, %v2636
    %v2638 = vrcp.pop %v2626
    %v2639 = vmul.f32 1.0, %v2638
    %v2640 = vrcp.pop %v2627
    %v2641 = vmul.f32 1.0, %v2640
    %v2642 = vrcp.pop %v2628
    %v2643 = vmul.f32 1.0, %v2642
    %v2644 = vrcp.pop %v2629
    %v2645 = vmul.f32 1.0, %v2644
    %v2647 = vrot.slane %v2499, 4
    %v2648 = vrot.slane %v2499, 5
    %v2649 = vrot.slane %v2499, 6
    %v2650 = vrot.slane %v2499, 7
    %v2651 = vrot.slane %v2499, 1
    %v2652 = vrot.slane %v2499, 2
    %v2653 = vrot.slane %v2499, 3
    %v2662 = vmul.f32 %v2559, %v2647
    %v2663 = vmul.f32 %v2561, %v2648
    %v2664 = vmul.f32 %v2563, %v2649
    %v2665 = vmul.f32 %v2565, %v2650
    %v2666 = vmul.f32 %v2567, %v2499
    %v2667 = vmul.f32 %v2569, %v2651
    %v2668 = vmul.f32 %v2571, %v2652
    %v2669 = vmul.f32 %v2573, %v2653
    %v2670 = vadd.f32 %v686, %v2662
    %v2671 = vadd.f32 %v691, %v2663
    %v2672 = vadd.f32 %v696, %v2664
    %v2673 = vadd.f32 %v701, %v2665
    %v2674 = vadd.f32 %v706, %v2666
    %v2675 = vadd.f32 %v711, %v2667
    %v2676 = vadd.f32 %v716, %v2668
    %v2677 = vadd.f32 %v721, %v2669
    %v2678 = vtanh.pop %v2670
    %v2679 = vtanh.pop %v2671
    %v2680 = vtanh.pop %v2672
    %v2681 = vtanh.pop %v2673
    %v2682 = vtanh.pop %v2674
    %v2683 = vtanh.pop %v2675
    %v2684 = vtanh.pop %v2676
    %v2685 = vtanh.pop %v2677
    %v2686 = vsub.f32 1.0, %v2631
    %v2687 = vsub.f32 1.0, %v2633
    %v2688 = vsub.f32 1.0, %v2635
    %v2689 = vsub.f32 1.0, %v2637
    %v2690 = vsub.f32 1.0, %v2639
    %v2691 = vsub.f32 1.0, %v2641
    %v2692 = vsub.f32 1.0, %v2643
    %v2693 = vsub.f32 1.0, %v2645
    %v2694 = vmul.f32 %v2686, %v2678
    %v2695 = vmul.f32 %v2687, %v2679
    %v2696 = vmul.f32 %v2688, %v2680
    %v2697 = vmul.f32 %v2689, %v2681
    %v2698 = vmul.f32 %v2690, %v2682
    %v2699 = vmul.f32 %v2691, %v2683
    %v2700 = vmul.f32 %v2692, %v2684
    %v2701 = vmul.f32 %v2693, %v2685
    %v2702 = vrot.slane %v2330, 7
    %v2703 = vrot.slane %v2331, 7
    %v2704 = vrot.slane %v2332, 7
    %v2705 = vrot.slane %v2333, 7
    %v2706 = vrot.slane %v2335, 7
    %v2707 = vrot.slane %v2336, 7
    %v2708 = vrot.slane %v2337, 7
    %v2717 = vmul.f32 %v2631, %v2702
    %v2718 = vmul.f32 %v2633, %v2703
    %v2719 = vmul.f32 %v2635, %v2704
    %v2720 = vmul.f32 %v2637, %v2705
    %v2721 = vmul.f32 %v2639, %v2352
    %v2722 = vmul.f32 %v2641, %v2706
    %v2723 = vmul.f32 %v2643, %v2707
    %v2724 = vmul.f32 %v2645, %v2708
    %v2725 = vadd.f32 %v2694, %v2717
    %v2726 = vadd.f32 %v2695, %v2718
    %v2727 = vadd.f32 %v2696, %v2719
    %v2728 = vadd.f32 %v2697, %v2720
    %v2729 = vadd.f32 %v2698, %v2721
    %v2730 = vadd.f32 %v2699, %v2722
    %v2731 = vadd.f32 %v2700, %v2723
    %v2732 = vadd.f32 %v2701, %v2724
    %v2741 = vrot.slane %v2725, 4
    %v2742 = vrot.slane %v2726, 3
    %v2743 = vsel %vm1155, %v2742, %v2741
    %v2744 = vrot.slane %v2727, 2
    %v2745 = vsel %vm1158, %v2744, %v2743
    %v2746 = vrot.slane %v2728, 1
    %v2747 = vsel %vm1161, %v2746, %v2745
    %v2748 = vsel %vm1164, %v2729, %v2747
    %v2749 = vrot.slane %v2730, 7
    %v2750 = vsel %vm1167, %v2749, %v2748
    %v2751 = vrot.slane %v2731, 6
    %v2752 = vsel %vm1170, %v2751, %v2750
    %v2753 = vrot.slane %v2732, 5
    %v2754 = vsel %vm1173, %v2753, %v2752
    %2756 = vmatprep.subr.mxu0 %v770
    %2757 = vmatpush1.msra.mxu0 %v769
    %2758 = vmatprep.subr.mxu0 %v767
    %2759 = vmatpush1.msra.mxu0 %v766
    %2760 = vmatprep.subr.mxu0 %v764
    %2761 = vmatpush1.msra.mxu0 %v763
    %2762 = vmatprep.subr.mxu0 %v761
    %2763 = vmatpush1.msra.mxu0 %v760
    %2764 = vmatprep.subr.mxu0 %v758
    %2765 = vmatpush1.msra.mxu0 %v757
    %2766 = vmatprep.subr.mxu0 %v755
    %2767 = vmatpush1.msra.mxu0 %v754
    %2768 = vmatprep.subr.mxu0 %v752
    %2769 = vmatpush1.msra.mxu0 %v751
    %2770 = vmatprep.subr.mxu0 %v749
    %2771 = vmatpush1.msra.mxu0 %v748
    %2772 = vmatprep.subr.mxu0 %v746
    %2773 = vmatpush1.msra.mxu0 %v745
    %2774 = vmatprep.subr.mxu0 %v743
    %2775 = vmatpush1.msra.mxu0 %v742
    %2776 = vmatprep.subr.mxu0 %v740
    %2777 = vmatpush1.msra.mxu0 %v739
    %2778 = vmatprep.subr.mxu0 %v737
    %2779 = vmatpush1.msra.mxu0 %v736
    %2780 = vmatprep.subr.mxu0 %v734
    %2781 = vmatpush1.msra.mxu0 %v733
    %2782 = vmatprep.subr.mxu0 %v731
    %2783 = vmatpush1.msra.mxu0 %v730
    %2784 = vmatprep.subr.mxu0 %v728
    %2785 = vmatpush1.msra.mxu0 %v727
    %2786 = vmatprep.subr.mxu0 %v725
    %2787 = vmatpush1.msra.mxu0 %v724
    %2788 = vmatprep.subr.mxu0 0.0
    %2789 = vmatpush2.msra.mxu0 0.0
    %2790 = vmatprep.subr.mxu0 0.0
    %2791 = vmatpush2.msra.mxu0 0.0
    %2792 = vmatprep.subr.mxu0 0.0
    %2793 = vmatpush2.msra.mxu0 0.0
    %2794 = vmatprep.subr.mxu0 0.0
    %2795 = vmatpush2.msra.mxu0 0.0
    %2796 = vmatprep.subr.mxu0 0.0
    %2797 = vmatpush2.msra.mxu0 0.0
    %2798 = vmatprep.subr.mxu0 0.0
    %2799 = vmatpush2.msra.mxu0 0.0
    %2800 = vmatprep.subr.mxu0 0.0
    %2801 = vmatpush2.msra.mxu0 0.0
    %2802 = vmatprep.subr.mxu0 0.0
    %2803 = vmatpush2.msra.mxu0 0.0
    %2804 = vmatprep.subr.mxu0 0.0
    %2805 = vmatpush2.msra.mxu0 0.0
    %2806 = vmatprep.subr.mxu0 0.0
    %2807 = vmatpush2.msra.mxu0 0.0
    %2808 = vmatprep.subr.mxu0 0.0
    %2809 = vmatpush2.msra.mxu0 0.0
    %2810 = vmatprep.subr.mxu0 0.0
    %2811 = vmatpush2.msra.mxu0 0.0
    %2812 = vmatprep.subr.mxu0 0.0
    %2813 = vmatpush2.msra.mxu0 0.0
    %2814 = vmatprep.subr.mxu0 0.0
    %2815 = vmatpush2.msra.mxu0 0.0
    %2816 = vmatprep.subr.mxu0 0.0
    %2817 = vmatpush2.msra.mxu0 0.0
    %2818 = vmatprep.subr.mxu0 0.0
    %2819 = vmatpush2.msra.mxu0 0.0
    %2820 = vmatprep.mubr.f32.mxu0 0.0
    %2821 = vmatmul.mubr.f32.gmra.mxu0 %v2754
    %v2822 = vpop.f32.mrf.mxu0
    %v2823 = vadd.f32 %v777, %v2822
    %v2824 = vpop.f32.mrf.mxu0
    %v2825 = vadd.f32 %v781, %v2824
    %2826 = vdwg.mxu0
    %2827 = vmatprep.subr.mxu0 0.0
    %2828 = vmatpush1.msra.mxu0 %v771
    %2829 = vmatprep.subr.mxu0 0.0
    %2830 = vmatpush1.msra.mxu0 %v768
    %2831 = vmatprep.subr.mxu0 0.0
    %2832 = vmatpush1.msra.mxu0 %v765
    %2833 = vmatprep.subr.mxu0 0.0
    %2834 = vmatpush1.msra.mxu0 %v762
    %2835 = vmatprep.subr.mxu0 0.0
    %2836 = vmatpush1.msra.mxu0 %v759
    %2837 = vmatprep.subr.mxu0 0.0
    %2838 = vmatpush1.msra.mxu0 %v756
    %2839 = vmatprep.subr.mxu0 0.0
    %2840 = vmatpush1.msra.mxu0 %v753
    %2841 = vmatprep.subr.mxu0 0.0
    %2842 = vmatpush1.msra.mxu0 %v750
    %2843 = vmatprep.subr.mxu0 0.0
    %2844 = vmatpush1.msra.mxu0 %v747
    %2845 = vmatprep.subr.mxu0 0.0
    %2846 = vmatpush1.msra.mxu0 %v744
    %2847 = vmatprep.subr.mxu0 0.0
    %2848 = vmatpush1.msra.mxu0 %v741
    %2849 = vmatprep.subr.mxu0 0.0
    %2850 = vmatpush1.msra.mxu0 %v738
    %2851 = vmatprep.subr.mxu0 0.0
    %2852 = vmatpush1.msra.mxu0 %v735
    %2853 = vmatprep.subr.mxu0 0.0
    %2854 = vmatpush1.msra.mxu0 %v732
    %2855 = vmatprep.subr.mxu0 0.0
    %2856 = vmatpush1.msra.mxu0 %v729
    %2857 = vmatprep.subr.mxu0 0.0
    %2858 = vmatpush1.msra.mxu0 %v726
    %2859 = vmatprep.subr.mxu0 0.0
    %2860 = vmatpush2.msra.mxu0 0.0
    %2861 = vmatprep.subr.mxu0 0.0
    %2862 = vmatpush2.msra.mxu0 0.0
    %2863 = vmatprep.subr.mxu0 0.0
    %2864 = vmatpush2.msra.mxu0 0.0
    %2865 = vmatprep.subr.mxu0 0.0
    %2866 = vmatpush2.msra.mxu0 0.0
    %2867 = vmatprep.subr.mxu0 0.0
    %2868 = vmatpush2.msra.mxu0 0.0
    %2869 = vmatprep.subr.mxu0 0.0
    %2870 = vmatpush2.msra.mxu0 0.0
    %2871 = vmatprep.subr.mxu0 0.0
    %2872 = vmatpush2.msra.mxu0 0.0
    %2873 = vmatprep.subr.mxu0 0.0
    %2874 = vmatpush2.msra.mxu0 0.0
    %2875 = vmatprep.subr.mxu0 0.0
    %2876 = vmatpush2.msra.mxu0 0.0
    %2877 = vmatprep.subr.mxu0 0.0
    %2878 = vmatpush2.msra.mxu0 0.0
    %2879 = vmatprep.subr.mxu0 0.0
    %2880 = vmatpush2.msra.mxu0 0.0
    %2881 = vmatprep.subr.mxu0 0.0
    %2882 = vmatpush2.msra.mxu0 0.0
    %2883 = vmatprep.subr.mxu0 0.0
    %2884 = vmatpush2.msra.mxu0 0.0
    %2885 = vmatprep.subr.mxu0 0.0
    %2886 = vmatpush2.msra.mxu0 0.0
    %2887 = vmatprep.subr.mxu0 0.0
    %2888 = vmatpush2.msra.mxu0 0.0
    %2889 = vmatprep.subr.mxu0 0.0
    %2890 = vmatpush2.msra.mxu0 0.0
    %2891 = vmatprep.mubr.f32.mxu0 0.0
    %2892 = vmatmul.mubr.f32.gmra.mxu0 %v2754
    %v2893 = vpop.f32.mrf.mxu0
    %v2894 = vadd.f32 %v785, %v2893
    %v2895 = vpop.f32.mrf.mxu0
    %2896 = vdwg.mxu0
    %v2898 = vrot.slane %v2823, 3
    %v2899 = vrot.slane %v2823, 4
    %v2900 = vrot.slane %v2823, 5
    %v2901 = vrot.slane %v2823, 6
    %v2902 = vrot.slane %v2823, 7
    %v2903 = vrot.slane %v2823, 1
    %v2904 = vrot.slane %v2823, 2
    %v2913 = vadd.f32 %v573, %v2898
    %v2914 = vadd.f32 %v579, %v2899
    %v2915 = vadd.f32 %v585, %v2900
    %v2916 = vadd.f32 %v591, %v2901
    %v2917 = vadd.f32 %v597, %v2902
    %v2918 = vadd.f32 %v603, %v2823
    %v2919 = vadd.f32 %v609, %v2903
    %v2920 = vadd.f32 %v615, %v2904
    %v2921 = vxor.u32 %v2913, 2147483648
    %v2922 = vxor.u32 %v2914, 2147483648
    %v2923 = vxor.u32 %v2915, 2147483648
    %v2924 = vxor.u32 %v2916, 2147483648
    %v2925 = vxor.u32 %v2917, 2147483648
    %v2926 = vxor.u32 %v2918, 2147483648
    %v2927 = vxor.u32 %v2919, 2147483648
    %v2928 = vxor.u32 %v2920, 2147483648
    %v2929 = vmul.f32 %v2921, 1.442695
    %v2930 = vpow.pop %v2929
    %v2931 = vmul.f32 %v2922, 1.442695
    %v2932 = vpow.pop %v2931
    %v2933 = vmul.f32 %v2923, 1.442695
    %v2934 = vpow.pop %v2933
    %v2935 = vmul.f32 %v2924, 1.442695
    %v2936 = vpow.pop %v2935
    %v2937 = vmul.f32 %v2925, 1.442695
    %v2938 = vpow.pop %v2937
    %v2939 = vmul.f32 %v2926, 1.442695
    %v2940 = vpow.pop %v2939
    %v2941 = vmul.f32 %v2927, 1.442695
    %v2942 = vpow.pop %v2941
    %v2943 = vmul.f32 %v2928, 1.442695
    %v2944 = vpow.pop %v2943
    %v2945 = vadd.f32 %v2930, 1.0
    %v2946 = vadd.f32 %v2932, 1.0
    %v2947 = vadd.f32 %v2934, 1.0
    %v2948 = vadd.f32 %v2936, 1.0
    %v2949 = vadd.f32 %v2938, 1.0
    %v2950 = vadd.f32 %v2940, 1.0
    %v2951 = vadd.f32 %v2942, 1.0
    %v2952 = vadd.f32 %v2944, 1.0
    %v2953 = vrcp.pop %v2945
    %v2954 = vmul.f32 1.0, %v2953
    %v2955 = vrcp.pop %v2946
    %v2956 = vmul.f32 1.0, %v2955
    %v2957 = vrcp.pop %v2947
    %v2958 = vmul.f32 1.0, %v2957
    %v2959 = vrcp.pop %v2948
    %v2960 = vmul.f32 1.0, %v2959
    %v2961 = vrcp.pop %v2949
    %v2962 = vmul.f32 1.0, %v2961
    %v2963 = vrcp.pop %v2950
    %v2964 = vmul.f32 1.0, %v2963
    %v2965 = vrcp.pop %v2951
    %v2966 = vmul.f32 1.0, %v2965
    %v2967 = vrcp.pop %v2952
    %v2968 = vmul.f32 1.0, %v2967
    %v2970 = vrot.slane %v2825, 3
    %v2971 = vrot.slane %v2825, 4
    %v2972 = vrot.slane %v2825, 5
    %v2973 = vrot.slane %v2825, 6
    %v2974 = vrot.slane %v2825, 7
    %v2975 = vrot.slane %v2825, 1
    %v2976 = vrot.slane %v2825, 2
    %v2985 = vadd.f32 %v575, %v2970
    %v2986 = vadd.f32 %v581, %v2971
    %v2987 = vadd.f32 %v587, %v2972
    %v2988 = vadd.f32 %v593, %v2973
    %v2989 = vadd.f32 %v599, %v2974
    %v2990 = vadd.f32 %v605, %v2825
    %v2991 = vadd.f32 %v611, %v2975
    %v2992 = vadd.f32 %v617, %v2976
    %v2993 = vxor.u32 %v2985, 2147483648
    %v2994 = vxor.u32 %v2986, 2147483648
    %v2995 = vxor.u32 %v2987, 2147483648
    %v2996 = vxor.u32 %v2988, 2147483648
    %v2997 = vxor.u32 %v2989, 2147483648
    %v2998 = vxor.u32 %v2990, 2147483648
    %v2999 = vxor.u32 %v2991, 2147483648
    %v3000 = vxor.u32 %v2992, 2147483648
    %v3001 = vmul.f32 %v2993, 1.442695
    %v3002 = vpow.pop %v3001
    %v3003 = vmul.f32 %v2994, 1.442695
    %v3004 = vpow.pop %v3003
    %v3005 = vmul.f32 %v2995, 1.442695
    %v3006 = vpow.pop %v3005
    %v3007 = vmul.f32 %v2996, 1.442695
    %v3008 = vpow.pop %v3007
    %v3009 = vmul.f32 %v2997, 1.442695
    %v3010 = vpow.pop %v3009
    %v3011 = vmul.f32 %v2998, 1.442695
    %v3012 = vpow.pop %v3011
    %v3013 = vmul.f32 %v2999, 1.442695
    %v3014 = vpow.pop %v3013
    %v3015 = vmul.f32 %v3000, 1.442695
    %v3016 = vpow.pop %v3015
    %v3017 = vadd.f32 %v3002, 1.0
    %v3018 = vadd.f32 %v3004, 1.0
    %v3019 = vadd.f32 %v3006, 1.0
    %v3020 = vadd.f32 %v3008, 1.0
    %v3021 = vadd.f32 %v3010, 1.0
    %v3022 = vadd.f32 %v3012, 1.0
    %v3023 = vadd.f32 %v3014, 1.0
    %v3024 = vadd.f32 %v3016, 1.0
    %v3025 = vrcp.pop %v3017
    %v3026 = vmul.f32 1.0, %v3025
    %v3027 = vrcp.pop %v3018
    %v3028 = vmul.f32 1.0, %v3027
    %v3029 = vrcp.pop %v3019
    %v3030 = vmul.f32 1.0, %v3029
    %v3031 = vrcp.pop %v3020
    %v3032 = vmul.f32 1.0, %v3031
    %v3033 = vrcp.pop %v3021
    %v3034 = vmul.f32 1.0, %v3033
    %v3035 = vrcp.pop %v3022
    %v3036 = vmul.f32 1.0, %v3035
    %v3037 = vrcp.pop %v3023
    %v3038 = vmul.f32 1.0, %v3037
    %v3039 = vrcp.pop %v3024
    %v3040 = vmul.f32 1.0, %v3039
    %v3042 = vrot.slane %v2894, 3
    %v3043 = vrot.slane %v2894, 4
    %v3044 = vrot.slane %v2894, 5
    %v3045 = vrot.slane %v2894, 6
    %v3046 = vrot.slane %v2894, 7
    %v3047 = vrot.slane %v2894, 1
    %v3048 = vrot.slane %v2894, 2
    %v3057 = vmul.f32 %v2954, %v3042
    %v3058 = vmul.f32 %v2956, %v3043
    %v3059 = vmul.f32 %v2958, %v3044
    %v3060 = vmul.f32 %v2960, %v3045
    %v3061 = vmul.f32 %v2962, %v3046
    %v3062 = vmul.f32 %v2964, %v2894
    %v3063 = vmul.f32 %v2966, %v3047
    %v3064 = vmul.f32 %v2968, %v3048
    %v3065 = vadd.f32 %v686, %v3057
    %v3066 = vadd.f32 %v691, %v3058
    %v3067 = vadd.f32 %v696, %v3059
    %v3068 = vadd.f32 %v701, %v3060
    %v3069 = vadd.f32 %v706, %v3061
    %v3070 = vadd.f32 %v711, %v3062
    %v3071 = vadd.f32 %v716, %v3063
    %v3072 = vadd.f32 %v721, %v3064
    %v3073 = vtanh.pop %v3065
    %v3074 = vtanh.pop %v3066
    %v3075 = vtanh.pop %v3067
    %v3076 = vtanh.pop %v3068
    %v3077 = vtanh.pop %v3069
    %v3078 = vtanh.pop %v3070
    %v3079 = vtanh.pop %v3071
    %v3080 = vtanh.pop %v3072
    %v3081 = vsub.f32 1.0, %v3026
    %v3082 = vsub.f32 1.0, %v3028
    %v3083 = vsub.f32 1.0, %v3030
    %v3084 = vsub.f32 1.0, %v3032
    %v3085 = vsub.f32 1.0, %v3034
    %v3086 = vsub.f32 1.0, %v3036
    %v3087 = vsub.f32 1.0, %v3038
    %v3088 = vsub.f32 1.0, %v3040
    %v3089 = vmul.f32 %v3081, %v3073
    %v3090 = vmul.f32 %v3082, %v3074
    %v3091 = vmul.f32 %v3083, %v3075
    %v3092 = vmul.f32 %v3084, %v3076
    %v3093 = vmul.f32 %v3085, %v3077
    %v3094 = vmul.f32 %v3086, %v3078
    %v3095 = vmul.f32 %v3087, %v3079
    %v3096 = vmul.f32 %v3088, %v3080
    %v3097 = vrot.slane %v2725, 7
    %v3098 = vrot.slane %v2726, 7
    %v3099 = vrot.slane %v2727, 7
    %v3100 = vrot.slane %v2728, 7
    %v3101 = vrot.slane %v2729, 7
    %v3102 = vrot.slane %v2731, 7
    %v3103 = vrot.slane %v2732, 7
    %v3112 = vmul.f32 %v3026, %v3097
    %v3113 = vmul.f32 %v3028, %v3098
    %v3114 = vmul.f32 %v3030, %v3099
    %v3115 = vmul.f32 %v3032, %v3100
    %v3116 = vmul.f32 %v3034, %v3101
    %v3117 = vmul.f32 %v3036, %v2749
    %v3118 = vmul.f32 %v3038, %v3102
    %v3119 = vmul.f32 %v3040, %v3103
    %v3120 = vadd.f32 %v3089, %v3112
    %v3121 = vadd.f32 %v3090, %v3113
    %v3122 = vadd.f32 %v3091, %v3114
    %v3123 = vadd.f32 %v3092, %v3115
    %v3124 = vadd.f32 %v3093, %v3116
    %v3125 = vadd.f32 %v3094, %v3117
    %v3126 = vadd.f32 %v3095, %v3118
    %v3127 = vadd.f32 %v3096, %v3119
    %v3136 = vrot.slane %v3120, 5
    %v3137 = vrot.slane %v3121, 4
    %v3138 = vsel %vm1155, %v3137, %v3136
    %v3139 = vrot.slane %v3122, 3
    %v3140 = vsel %vm1158, %v3139, %v3138
    %v3141 = vrot.slane %v3123, 2
    %v3142 = vsel %vm1161, %v3141, %v3140
    %v3143 = vrot.slane %v3124, 1
    %v3144 = vsel %vm1164, %v3143, %v3142
    %v3145 = vsel %vm1167, %v3125, %v3144
    %v3146 = vrot.slane %v3126, 7
    %v3147 = vsel %vm1170, %v3146, %v3145
    %v3148 = vrot.slane %v3127, 6
    %v3149 = vsel %vm1173, %v3148, %v3147
    %3151 = vmatprep.subr.mxu0 %v770
    %3152 = vmatpush1.msra.mxu0 %v769
    %3153 = vmatprep.subr.mxu0 %v767
    %3154 = vmatpush1.msra.mxu0 %v766
    %3155 = vmatprep.subr.mxu0 %v764
    %3156 = vmatpush1.msra.mxu0 %v763
    %3157 = vmatprep.subr.mxu0 %v761
    %3158 = vmatpush1.msra.mxu0 %v760
    %3159 = vmatprep.subr.mxu0 %v758
    %3160 = vmatpush1.msra.mxu0 %v757
    %3161 = vmatprep.subr.mxu0 %v755
    %3162 = vmatpush1.msra.mxu0 %v754
    %3163 = vmatprep.subr.mxu0 %v752
    %3164 = vmatpush1.msra.mxu0 %v751
    %3165 = vmatprep.subr.mxu0 %v749
    %3166 = vmatpush1.msra.mxu0 %v748
    %3167 = vmatprep.subr.mxu0 %v746
    %3168 = vmatpush1.msra.mxu0 %v745
    %3169 = vmatprep.subr.mxu0 %v743
    %3170 = vmatpush1.msra.mxu0 %v742
    %3171 = vmatprep.subr.mxu0 %v740
    %3172 = vmatpush1.msra.mxu0 %v739
    %3173 = vmatprep.subr.mxu0 %v737
    %3174 = vmatpush1.msra.mxu0 %v736
    %3175 = vmatprep.subr.mxu0 %v734
    %3176 = vmatpush1.msra.mxu0 %v733
    %3177 = vmatprep.subr.mxu0 %v731
    %3178 = vmatpush1.msra.mxu0 %v730
    %3179 = vmatprep.subr.mxu0 %v728
    %3180 = vmatpush1.msra.mxu0 %v727
    %3181 = vmatprep.subr.mxu0 %v725
    %3182 = vmatpush1.msra.mxu0 %v724
    %3183 = vmatprep.subr.mxu0 0.0
    %3184 = vmatpush2.msra.mxu0 0.0
    %3185 = vmatprep.subr.mxu0 0.0
    %3186 = vmatpush2.msra.mxu0 0.0
    %3187 = vmatprep.subr.mxu0 0.0
    %3188 = vmatpush2.msra.mxu0 0.0
    %3189 = vmatprep.subr.mxu0 0.0
    %3190 = vmatpush2.msra.mxu0 0.0
    %3191 = vmatprep.subr.mxu0 0.0
    %3192 = vmatpush2.msra.mxu0 0.0
    %3193 = vmatprep.subr.mxu0 0.0
    %3194 = vmatpush2.msra.mxu0 0.0
    %3195 = vmatprep.subr.mxu0 0.0
    %3196 = vmatpush2.msra.mxu0 0.0
    %3197 = vmatprep.subr.mxu0 0.0
    %3198 = vmatpush2.msra.mxu0 0.0
    %3199 = vmatprep.subr.mxu0 0.0
    %3200 = vmatpush2.msra.mxu0 0.0
    %3201 = vmatprep.subr.mxu0 0.0
    %3202 = vmatpush2.msra.mxu0 0.0
    %3203 = vmatprep.subr.mxu0 0.0
    %3204 = vmatpush2.msra.mxu0 0.0
    %3205 = vmatprep.subr.mxu0 0.0
    %3206 = vmatpush2.msra.mxu0 0.0
    %3207 = vmatprep.subr.mxu0 0.0
    %3208 = vmatpush2.msra.mxu0 0.0
    %3209 = vmatprep.subr.mxu0 0.0
    %3210 = vmatpush2.msra.mxu0 0.0
    %3211 = vmatprep.subr.mxu0 0.0
    %3212 = vmatpush2.msra.mxu0 0.0
    %3213 = vmatprep.subr.mxu0 0.0
    %3214 = vmatpush2.msra.mxu0 0.0
    %3215 = vmatprep.mubr.f32.mxu0 0.0
    %3216 = vmatmul.mubr.f32.gmra.mxu0 %v3149
    %v3217 = vpop.f32.mrf.mxu0
    %v3218 = vadd.f32 %v777, %v3217
    %v3219 = vpop.f32.mrf.mxu0
    %v3220 = vadd.f32 %v781, %v3219
    %3221 = vdwg.mxu0
    %3222 = vmatprep.subr.mxu0 0.0
    %3223 = vmatpush1.msra.mxu0 %v771
    %3224 = vmatprep.subr.mxu0 0.0
    %3225 = vmatpush1.msra.mxu0 %v768
    %3226 = vmatprep.subr.mxu0 0.0
    %3227 = vmatpush1.msra.mxu0 %v765
    %3228 = vmatprep.subr.mxu0 0.0
    %3229 = vmatpush1.msra.mxu0 %v762
    %3230 = vmatprep.subr.mxu0 0.0
    %3231 = vmatpush1.msra.mxu0 %v759
    %3232 = vmatprep.subr.mxu0 0.0
    %3233 = vmatpush1.msra.mxu0 %v756
    %3234 = vmatprep.subr.mxu0 0.0
    %3235 = vmatpush1.msra.mxu0 %v753
    %3236 = vmatprep.subr.mxu0 0.0
    %3237 = vmatpush1.msra.mxu0 %v750
    %3238 = vmatprep.subr.mxu0 0.0
    %3239 = vmatpush1.msra.mxu0 %v747
    %3240 = vmatprep.subr.mxu0 0.0
    %3241 = vmatpush1.msra.mxu0 %v744
    %3242 = vmatprep.subr.mxu0 0.0
    %3243 = vmatpush1.msra.mxu0 %v741
    %3244 = vmatprep.subr.mxu0 0.0
    %3245 = vmatpush1.msra.mxu0 %v738
    %3246 = vmatprep.subr.mxu0 0.0
    %3247 = vmatpush1.msra.mxu0 %v735
    %3248 = vmatprep.subr.mxu0 0.0
    %3249 = vmatpush1.msra.mxu0 %v732
    %3250 = vmatprep.subr.mxu0 0.0
    %3251 = vmatpush1.msra.mxu0 %v729
    %3252 = vmatprep.subr.mxu0 0.0
    %3253 = vmatpush1.msra.mxu0 %v726
    %3254 = vmatprep.subr.mxu0 0.0
    %3255 = vmatpush2.msra.mxu0 0.0
    %3256 = vmatprep.subr.mxu0 0.0
    %3257 = vmatpush2.msra.mxu0 0.0
    %3258 = vmatprep.subr.mxu0 0.0
    %3259 = vmatpush2.msra.mxu0 0.0
    %3260 = vmatprep.subr.mxu0 0.0
    %3261 = vmatpush2.msra.mxu0 0.0
    %3262 = vmatprep.subr.mxu0 0.0
    %3263 = vmatpush2.msra.mxu0 0.0
    %3264 = vmatprep.subr.mxu0 0.0
    %3265 = vmatpush2.msra.mxu0 0.0
    %3266 = vmatprep.subr.mxu0 0.0
    %3267 = vmatpush2.msra.mxu0 0.0
    %3268 = vmatprep.subr.mxu0 0.0
    %3269 = vmatpush2.msra.mxu0 0.0
    %3270 = vmatprep.subr.mxu0 0.0
    %3271 = vmatpush2.msra.mxu0 0.0
    %3272 = vmatprep.subr.mxu0 0.0
    %3273 = vmatpush2.msra.mxu0 0.0
    %3274 = vmatprep.subr.mxu0 0.0
    %3275 = vmatpush2.msra.mxu0 0.0
    %3276 = vmatprep.subr.mxu0 0.0
    %3277 = vmatpush2.msra.mxu0 0.0
    %3278 = vmatprep.subr.mxu0 0.0
    %3279 = vmatpush2.msra.mxu0 0.0
    %3280 = vmatprep.subr.mxu0 0.0
    %3281 = vmatpush2.msra.mxu0 0.0
    %3282 = vmatprep.subr.mxu0 0.0
    %3283 = vmatpush2.msra.mxu0 0.0
    %3284 = vmatprep.subr.mxu0 0.0
    %3285 = vmatpush2.msra.mxu0 0.0
    %3286 = vmatprep.mubr.f32.mxu0 0.0
    %3287 = vmatmul.mubr.f32.gmra.mxu0 %v3149
    %v3288 = vpop.f32.mrf.mxu0
    %v3289 = vadd.f32 %v785, %v3288
    %v3290 = vpop.f32.mrf.mxu0
    %3291 = vdwg.mxu0
    %v3293 = vrot.slane %v3218, 2
    %v3294 = vrot.slane %v3218, 3
    %v3295 = vrot.slane %v3218, 4
    %v3296 = vrot.slane %v3218, 5
    %v3297 = vrot.slane %v3218, 6
    %v3298 = vrot.slane %v3218, 7
    %v3299 = vrot.slane %v3218, 1
    %v3308 = vadd.f32 %v573, %v3293
    %v3309 = vadd.f32 %v579, %v3294
    %v3310 = vadd.f32 %v585, %v3295
    %v3311 = vadd.f32 %v591, %v3296
    %v3312 = vadd.f32 %v597, %v3297
    %v3313 = vadd.f32 %v603, %v3298
    %v3314 = vadd.f32 %v609, %v3218
    %v3315 = vadd.f32 %v615, %v3299
    %v3316 = vxor.u32 %v3308, 2147483648
    %v3317 = vxor.u32 %v3309, 2147483648
    %v3318 = vxor.u32 %v3310, 2147483648
    %v3319 = vxor.u32 %v3311, 2147483648
    %v3320 = vxor.u32 %v3312, 2147483648
    %v3321 = vxor.u32 %v3313, 2147483648
    %v3322 = vxor.u32 %v3314, 2147483648
    %v3323 = vxor.u32 %v3315, 2147483648
    %v3324 = vmul.f32 %v3316, 1.442695
    %v3325 = vpow.pop %v3324
    %v3326 = vmul.f32 %v3317, 1.442695
    %v3327 = vpow.pop %v3326
    %v3328 = vmul.f32 %v3318, 1.442695
    %v3329 = vpow.pop %v3328
    %v3330 = vmul.f32 %v3319, 1.442695
    %v3331 = vpow.pop %v3330
    %v3332 = vmul.f32 %v3320, 1.442695
    %v3333 = vpow.pop %v3332
    %v3334 = vmul.f32 %v3321, 1.442695
    %v3335 = vpow.pop %v3334
    %v3336 = vmul.f32 %v3322, 1.442695
    %v3337 = vpow.pop %v3336
    %v3338 = vmul.f32 %v3323, 1.442695
    %v3339 = vpow.pop %v3338
    %v3340 = vadd.f32 %v3325, 1.0
    %v3341 = vadd.f32 %v3327, 1.0
    %v3342 = vadd.f32 %v3329, 1.0
    %v3343 = vadd.f32 %v3331, 1.0
    %v3344 = vadd.f32 %v3333, 1.0
    %v3345 = vadd.f32 %v3335, 1.0
    %v3346 = vadd.f32 %v3337, 1.0
    %v3347 = vadd.f32 %v3339, 1.0
    %v3348 = vrcp.pop %v3340
    %v3349 = vmul.f32 1.0, %v3348
    %v3350 = vrcp.pop %v3341
    %v3351 = vmul.f32 1.0, %v3350
    %v3352 = vrcp.pop %v3342
    %v3353 = vmul.f32 1.0, %v3352
    %v3354 = vrcp.pop %v3343
    %v3355 = vmul.f32 1.0, %v3354
    %v3356 = vrcp.pop %v3344
    %v3357 = vmul.f32 1.0, %v3356
    %v3358 = vrcp.pop %v3345
    %v3359 = vmul.f32 1.0, %v3358
    %v3360 = vrcp.pop %v3346
    %v3361 = vmul.f32 1.0, %v3360
    %v3362 = vrcp.pop %v3347
    %v3363 = vmul.f32 1.0, %v3362
    %v3365 = vrot.slane %v3220, 2
    %v3366 = vrot.slane %v3220, 3
    %v3367 = vrot.slane %v3220, 4
    %v3368 = vrot.slane %v3220, 5
    %v3369 = vrot.slane %v3220, 6
    %v3370 = vrot.slane %v3220, 7
    %v3371 = vrot.slane %v3220, 1
    %v3380 = vadd.f32 %v575, %v3365
    %v3381 = vadd.f32 %v581, %v3366
    %v3382 = vadd.f32 %v587, %v3367
    %v3383 = vadd.f32 %v593, %v3368
    %v3384 = vadd.f32 %v599, %v3369
    %v3385 = vadd.f32 %v605, %v3370
    %v3386 = vadd.f32 %v611, %v3220
    %v3387 = vadd.f32 %v617, %v3371
    %v3388 = vxor.u32 %v3380, 2147483648
    %v3389 = vxor.u32 %v3381, 2147483648
    %v3390 = vxor.u32 %v3382, 2147483648
    %v3391 = vxor.u32 %v3383, 2147483648
    %v3392 = vxor.u32 %v3384, 2147483648
    %v3393 = vxor.u32 %v3385, 2147483648
    %v3394 = vxor.u32 %v3386, 2147483648
    %v3395 = vxor.u32 %v3387, 2147483648
    %v3396 = vmul.f32 %v3388, 1.442695
    %v3397 = vpow.pop %v3396
    %v3398 = vmul.f32 %v3389, 1.442695
    %v3399 = vpow.pop %v3398
    %v3400 = vmul.f32 %v3390, 1.442695
    %v3401 = vpow.pop %v3400
    %v3402 = vmul.f32 %v3391, 1.442695
    %v3403 = vpow.pop %v3402
    %v3404 = vmul.f32 %v3392, 1.442695
    %v3405 = vpow.pop %v3404
    %v3406 = vmul.f32 %v3393, 1.442695
    %v3407 = vpow.pop %v3406
    %v3408 = vmul.f32 %v3394, 1.442695
    %v3409 = vpow.pop %v3408
    %v3410 = vmul.f32 %v3395, 1.442695
    %v3411 = vpow.pop %v3410
    %v3412 = vadd.f32 %v3397, 1.0
    %v3413 = vadd.f32 %v3399, 1.0
    %v3414 = vadd.f32 %v3401, 1.0
    %v3415 = vadd.f32 %v3403, 1.0
    %v3416 = vadd.f32 %v3405, 1.0
    %v3417 = vadd.f32 %v3407, 1.0
    %v3418 = vadd.f32 %v3409, 1.0
    %v3419 = vadd.f32 %v3411, 1.0
    %v3420 = vrcp.pop %v3412
    %v3421 = vmul.f32 1.0, %v3420
    %v3422 = vrcp.pop %v3413
    %v3423 = vmul.f32 1.0, %v3422
    %v3424 = vrcp.pop %v3414
    %v3425 = vmul.f32 1.0, %v3424
    %v3426 = vrcp.pop %v3415
    %v3427 = vmul.f32 1.0, %v3426
    %v3428 = vrcp.pop %v3416
    %v3429 = vmul.f32 1.0, %v3428
    %v3430 = vrcp.pop %v3417
    %v3431 = vmul.f32 1.0, %v3430
    %v3432 = vrcp.pop %v3418
    %v3433 = vmul.f32 1.0, %v3432
    %v3434 = vrcp.pop %v3419
    %v3435 = vmul.f32 1.0, %v3434
    %v3437 = vrot.slane %v3289, 2
    %v3438 = vrot.slane %v3289, 3
    %v3439 = vrot.slane %v3289, 4
    %v3440 = vrot.slane %v3289, 5
    %v3441 = vrot.slane %v3289, 6
    %v3442 = vrot.slane %v3289, 7
    %v3443 = vrot.slane %v3289, 1
    %v3452 = vmul.f32 %v3349, %v3437
    %v3453 = vmul.f32 %v3351, %v3438
    %v3454 = vmul.f32 %v3353, %v3439
    %v3455 = vmul.f32 %v3355, %v3440
    %v3456 = vmul.f32 %v3357, %v3441
    %v3457 = vmul.f32 %v3359, %v3442
    %v3458 = vmul.f32 %v3361, %v3289
    %v3459 = vmul.f32 %v3363, %v3443
    %v3460 = vadd.f32 %v686, %v3452
    %v3461 = vadd.f32 %v691, %v3453
    %v3462 = vadd.f32 %v696, %v3454
    %v3463 = vadd.f32 %v701, %v3455
    %v3464 = vadd.f32 %v706, %v3456
    %v3465 = vadd.f32 %v711, %v3457
    %v3466 = vadd.f32 %v716, %v3458
    %v3467 = vadd.f32 %v721, %v3459
    %v3468 = vtanh.pop %v3460
    %v3469 = vtanh.pop %v3461
    %v3470 = vtanh.pop %v3462
    %v3471 = vtanh.pop %v3463
    %v3472 = vtanh.pop %v3464
    %v3473 = vtanh.pop %v3465
    %v3474 = vtanh.pop %v3466
    %v3475 = vtanh.pop %v3467
    %v3476 = vsub.f32 1.0, %v3421
    %v3477 = vsub.f32 1.0, %v3423
    %v3478 = vsub.f32 1.0, %v3425
    %v3479 = vsub.f32 1.0, %v3427
    %v3480 = vsub.f32 1.0, %v3429
    %v3481 = vsub.f32 1.0, %v3431
    %v3482 = vsub.f32 1.0, %v3433
    %v3483 = vsub.f32 1.0, %v3435
    %v3484 = vmul.f32 %v3476, %v3468
    %v3485 = vmul.f32 %v3477, %v3469
    %v3486 = vmul.f32 %v3478, %v3470
    %v3487 = vmul.f32 %v3479, %v3471
    %v3488 = vmul.f32 %v3480, %v3472
    %v3489 = vmul.f32 %v3481, %v3473
    %v3490 = vmul.f32 %v3482, %v3474
    %v3491 = vmul.f32 %v3483, %v3475
    %v3492 = vrot.slane %v3120, 7
    %v3493 = vrot.slane %v3121, 7
    %v3494 = vrot.slane %v3122, 7
    %v3495 = vrot.slane %v3123, 7
    %v3496 = vrot.slane %v3124, 7
    %v3497 = vrot.slane %v3125, 7
    %v3498 = vrot.slane %v3127, 7
    %v3507 = vmul.f32 %v3421, %v3492
    %v3508 = vmul.f32 %v3423, %v3493
    %v3509 = vmul.f32 %v3425, %v3494
    %v3510 = vmul.f32 %v3427, %v3495
    %v3511 = vmul.f32 %v3429, %v3496
    %v3512 = vmul.f32 %v3431, %v3497
    %v3513 = vmul.f32 %v3433, %v3146
    %v3514 = vmul.f32 %v3435, %v3498
    %v3515 = vadd.f32 %v3484, %v3507
    %v3516 = vadd.f32 %v3485, %v3508
    %v3517 = vadd.f32 %v3486, %v3509
    %v3518 = vadd.f32 %v3487, %v3510
    %v3519 = vadd.f32 %v3488, %v3511
    %v3520 = vadd.f32 %v3489, %v3512
    %v3521 = vadd.f32 %v3490, %v3513
    %v3522 = vadd.f32 %v3491, %v3514
    %v3531 = vrot.slane %v3515, 6
    %v3532 = vrot.slane %v3516, 5
    %v3533 = vsel %vm1155, %v3532, %v3531
    %v3534 = vrot.slane %v3517, 4
    %v3535 = vsel %vm1158, %v3534, %v3533
    %v3536 = vrot.slane %v3518, 3
    %v3537 = vsel %vm1161, %v3536, %v3535
    %v3538 = vrot.slane %v3519, 2
    %v3539 = vsel %vm1164, %v3538, %v3537
    %v3540 = vrot.slane %v3520, 1
    %v3541 = vsel %vm1167, %v3540, %v3539
    %v3542 = vsel %vm1170, %v3521, %v3541
    %v3543 = vrot.slane %v3522, 7
    %v3544 = vsel %vm1173, %v3543, %v3542
    %3546 = vmatprep.subr.mxu0 %v770
    %3547 = vmatpush1.msra.mxu0 %v769
    %3548 = vmatprep.subr.mxu0 %v767
    %3549 = vmatpush1.msra.mxu0 %v766
    %3550 = vmatprep.subr.mxu0 %v764
    %3551 = vmatpush1.msra.mxu0 %v763
    %3552 = vmatprep.subr.mxu0 %v761
    %3553 = vmatpush1.msra.mxu0 %v760
    %3554 = vmatprep.subr.mxu0 %v758
    %3555 = vmatpush1.msra.mxu0 %v757
    %3556 = vmatprep.subr.mxu0 %v755
    %3557 = vmatpush1.msra.mxu0 %v754
    %3558 = vmatprep.subr.mxu0 %v752
    %3559 = vmatpush1.msra.mxu0 %v751
    %3560 = vmatprep.subr.mxu0 %v749
    %3561 = vmatpush1.msra.mxu0 %v748
    %3562 = vmatprep.subr.mxu0 %v746
    %3563 = vmatpush1.msra.mxu0 %v745
    %3564 = vmatprep.subr.mxu0 %v743
    %3565 = vmatpush1.msra.mxu0 %v742
    %3566 = vmatprep.subr.mxu0 %v740
    %3567 = vmatpush1.msra.mxu0 %v739
    %3568 = vmatprep.subr.mxu0 %v737
    %3569 = vmatpush1.msra.mxu0 %v736
    %3570 = vmatprep.subr.mxu0 %v734
    %3571 = vmatpush1.msra.mxu0 %v733
    %3572 = vmatprep.subr.mxu0 %v731
    %3573 = vmatpush1.msra.mxu0 %v730
    %3574 = vmatprep.subr.mxu0 %v728
    %3575 = vmatpush1.msra.mxu0 %v727
    %3576 = vmatprep.subr.mxu0 %v725
    %3577 = vmatpush1.msra.mxu0 %v724
    %3578 = vmatprep.subr.mxu0 0.0
    %3579 = vmatpush2.msra.mxu0 0.0
    %3580 = vmatprep.subr.mxu0 0.0
    %3581 = vmatpush2.msra.mxu0 0.0
    %3582 = vmatprep.subr.mxu0 0.0
    %3583 = vmatpush2.msra.mxu0 0.0
    %3584 = vmatprep.subr.mxu0 0.0
    %3585 = vmatpush2.msra.mxu0 0.0
    %3586 = vmatprep.subr.mxu0 0.0
    %3587 = vmatpush2.msra.mxu0 0.0
    %3588 = vmatprep.subr.mxu0 0.0
    %3589 = vmatpush2.msra.mxu0 0.0
    %3590 = vmatprep.subr.mxu0 0.0
    %3591 = vmatpush2.msra.mxu0 0.0
    %3592 = vmatprep.subr.mxu0 0.0
    %3593 = vmatpush2.msra.mxu0 0.0
    %3594 = vmatprep.subr.mxu0 0.0
    %3595 = vmatpush2.msra.mxu0 0.0
    %3596 = vmatprep.subr.mxu0 0.0
    %3597 = vmatpush2.msra.mxu0 0.0
    %3598 = vmatprep.subr.mxu0 0.0
    %3599 = vmatpush2.msra.mxu0 0.0
    %3600 = vmatprep.subr.mxu0 0.0
    %3601 = vmatpush2.msra.mxu0 0.0
    %3602 = vmatprep.subr.mxu0 0.0
    %3603 = vmatpush2.msra.mxu0 0.0
    %3604 = vmatprep.subr.mxu0 0.0
    %3605 = vmatpush2.msra.mxu0 0.0
    %3606 = vmatprep.subr.mxu0 0.0
    %3607 = vmatpush2.msra.mxu0 0.0
    %3608 = vmatprep.subr.mxu0 0.0
    %3609 = vmatpush2.msra.mxu0 0.0
    %3610 = vmatprep.mubr.f32.mxu0 0.0
    %3611 = vmatmul.mubr.f32.gmra.mxu0 %v3544
    %v3612 = vpop.f32.mrf.mxu0
    %v3613 = vadd.f32 %v777, %v3612
    %v3614 = vpop.f32.mrf.mxu0
    %v3615 = vadd.f32 %v781, %v3614
    %3616 = vdwg.mxu0
    %3617 = vmatprep.subr.mxu0 0.0
    %3618 = vmatpush1.msra.mxu0 %v771
    %3619 = vmatprep.subr.mxu0 0.0
    %3620 = vmatpush1.msra.mxu0 %v768
    %3621 = vmatprep.subr.mxu0 0.0
    %3622 = vmatpush1.msra.mxu0 %v765
    %3623 = vmatprep.subr.mxu0 0.0
    %3624 = vmatpush1.msra.mxu0 %v762
    %3625 = vmatprep.subr.mxu0 0.0
    %3626 = vmatpush1.msra.mxu0 %v759
    %3627 = vmatprep.subr.mxu0 0.0
    %3628 = vmatpush1.msra.mxu0 %v756
    %3629 = vmatprep.subr.mxu0 0.0
    %3630 = vmatpush1.msra.mxu0 %v753
    %3631 = vmatprep.subr.mxu0 0.0
    %3632 = vmatpush1.msra.mxu0 %v750
    %3633 = vmatprep.subr.mxu0 0.0
    %3634 = vmatpush1.msra.mxu0 %v747
    %3635 = vmatprep.subr.mxu0 0.0
    %3636 = vmatpush1.msra.mxu0 %v744
    %3637 = vmatprep.subr.mxu0 0.0
    %3638 = vmatpush1.msra.mxu0 %v741
    %3639 = vmatprep.subr.mxu0 0.0
    %3640 = vmatpush1.msra.mxu0 %v738
    %3641 = vmatprep.subr.mxu0 0.0
    %3642 = vmatpush1.msra.mxu0 %v735
    %3643 = vmatprep.subr.mxu0 0.0
    %3644 = vmatpush1.msra.mxu0 %v732
    %3645 = vmatprep.subr.mxu0 0.0
    %3646 = vmatpush1.msra.mxu0 %v729
    %3647 = vmatprep.subr.mxu0 0.0
    %3648 = vmatpush1.msra.mxu0 %v726
    %3649 = vmatprep.subr.mxu0 0.0
    %3650 = vmatpush2.msra.mxu0 0.0
    %3651 = vmatprep.subr.mxu0 0.0
    %3652 = vmatpush2.msra.mxu0 0.0
    %3653 = vmatprep.subr.mxu0 0.0
    %3654 = vmatpush2.msra.mxu0 0.0
    %3655 = vmatprep.subr.mxu0 0.0
    %3656 = vmatpush2.msra.mxu0 0.0
    %3657 = vmatprep.subr.mxu0 0.0
    %3658 = vmatpush2.msra.mxu0 0.0
    %3659 = vmatprep.subr.mxu0 0.0
    %3660 = vmatpush2.msra.mxu0 0.0
    %3661 = vmatprep.subr.mxu0 0.0
    %3662 = vmatpush2.msra.mxu0 0.0
    %3663 = vmatprep.subr.mxu0 0.0
    %3664 = vmatpush2.msra.mxu0 0.0
    %3665 = vmatprep.subr.mxu0 0.0
    %3666 = vmatpush2.msra.mxu0 0.0
    %3667 = vmatprep.subr.mxu0 0.0
    %3668 = vmatpush2.msra.mxu0 0.0
    %3669 = vmatprep.subr.mxu0 0.0
    %3670 = vmatpush2.msra.mxu0 0.0
    %3671 = vmatprep.subr.mxu0 0.0
    %3672 = vmatpush2.msra.mxu0 0.0
    %3673 = vmatprep.subr.mxu0 0.0
    %3674 = vmatpush2.msra.mxu0 0.0
    %3675 = vmatprep.subr.mxu0 0.0
    %3676 = vmatpush2.msra.mxu0 0.0
    %3677 = vmatprep.subr.mxu0 0.0
    %3678 = vmatpush2.msra.mxu0 0.0
    %3679 = vmatprep.subr.mxu0 0.0
    %3680 = vmatpush2.msra.mxu0 0.0
    %3681 = vmatprep.mubr.f32.mxu0 0.0
    %3682 = vmatmul.mubr.f32.gmra.mxu0 %v3544
    %v3683 = vpop.f32.mrf.mxu0
    %v3684 = vadd.f32 %v785, %v3683
    %v3685 = vpop.f32.mrf.mxu0
    %3686 = vdwg.mxu0
    %v3688 = vrot.slane %v3613, 1
    %v3689 = vrot.slane %v3613, 2
    %v3690 = vrot.slane %v3613, 3
    %v3691 = vrot.slane %v3613, 4
    %v3692 = vrot.slane %v3613, 5
    %v3693 = vrot.slane %v3613, 6
    %v3694 = vrot.slane %v3613, 7
    %v3703 = vadd.f32 %v573, %v3688
    %v3704 = vadd.f32 %v579, %v3689
    %v3705 = vadd.f32 %v585, %v3690
    %v3706 = vadd.f32 %v591, %v3691
    %v3707 = vadd.f32 %v597, %v3692
    %v3708 = vadd.f32 %v603, %v3693
    %v3709 = vadd.f32 %v609, %v3694
    %v3710 = vadd.f32 %v615, %v3613
    %v3711 = vxor.u32 %v3703, 2147483648
    %v3712 = vxor.u32 %v3704, 2147483648
    %v3713 = vxor.u32 %v3705, 2147483648
    %v3714 = vxor.u32 %v3706, 2147483648
    %v3715 = vxor.u32 %v3707, 2147483648
    %v3716 = vxor.u32 %v3708, 2147483648
    %v3717 = vxor.u32 %v3709, 2147483648
    %v3718 = vxor.u32 %v3710, 2147483648
    %v3719 = vmul.f32 %v3711, 1.442695
    %v3720 = vpow.pop %v3719
    %v3721 = vmul.f32 %v3712, 1.442695
    %v3722 = vpow.pop %v3721
    %v3723 = vmul.f32 %v3713, 1.442695
    %v3724 = vpow.pop %v3723
    %v3725 = vmul.f32 %v3714, 1.442695
    %v3726 = vpow.pop %v3725
    %v3727 = vmul.f32 %v3715, 1.442695
    %v3728 = vpow.pop %v3727
    %v3729 = vmul.f32 %v3716, 1.442695
    %v3730 = vpow.pop %v3729
    %v3731 = vmul.f32 %v3717, 1.442695
    %v3732 = vpow.pop %v3731
    %v3733 = vmul.f32 %v3718, 1.442695
    %v3734 = vpow.pop %v3733
    %v3735 = vadd.f32 %v3720, 1.0
    %v3736 = vadd.f32 %v3722, 1.0
    %v3737 = vadd.f32 %v3724, 1.0
    %v3738 = vadd.f32 %v3726, 1.0
    %v3739 = vadd.f32 %v3728, 1.0
    %v3740 = vadd.f32 %v3730, 1.0
    %v3741 = vadd.f32 %v3732, 1.0
    %v3742 = vadd.f32 %v3734, 1.0
    %v3743 = vrcp.pop %v3735
    %v3744 = vmul.f32 1.0, %v3743
    %v3745 = vrcp.pop %v3736
    %v3746 = vmul.f32 1.0, %v3745
    %v3747 = vrcp.pop %v3737
    %v3748 = vmul.f32 1.0, %v3747
    %v3749 = vrcp.pop %v3738
    %v3750 = vmul.f32 1.0, %v3749
    %v3751 = vrcp.pop %v3739
    %v3752 = vmul.f32 1.0, %v3751
    %v3753 = vrcp.pop %v3740
    %v3754 = vmul.f32 1.0, %v3753
    %v3755 = vrcp.pop %v3741
    %v3756 = vmul.f32 1.0, %v3755
    %v3757 = vrcp.pop %v3742
    %v3758 = vmul.f32 1.0, %v3757
    %v3760 = vrot.slane %v3615, 1
    %v3761 = vrot.slane %v3615, 2
    %v3762 = vrot.slane %v3615, 3
    %v3763 = vrot.slane %v3615, 4
    %v3764 = vrot.slane %v3615, 5
    %v3765 = vrot.slane %v3615, 6
    %v3766 = vrot.slane %v3615, 7
    %v3775 = vadd.f32 %v575, %v3760
    %v3776 = vadd.f32 %v581, %v3761
    %v3777 = vadd.f32 %v587, %v3762
    %v3778 = vadd.f32 %v593, %v3763
    %v3779 = vadd.f32 %v599, %v3764
    %v3780 = vadd.f32 %v605, %v3765
    %v3781 = vadd.f32 %v611, %v3766
    %v3782 = vadd.f32 %v617, %v3615
    %v3783 = vxor.u32 %v3775, 2147483648
    %v3784 = vxor.u32 %v3776, 2147483648
    %v3785 = vxor.u32 %v3777, 2147483648
    %v3786 = vxor.u32 %v3778, 2147483648
    %v3787 = vxor.u32 %v3779, 2147483648
    %v3788 = vxor.u32 %v3780, 2147483648
    %v3789 = vxor.u32 %v3781, 2147483648
    %v3790 = vxor.u32 %v3782, 2147483648
    %v3791 = vmul.f32 %v3783, 1.442695
    %v3792 = vpow.pop %v3791
    %v3793 = vmul.f32 %v3784, 1.442695
    %v3794 = vpow.pop %v3793
    %v3795 = vmul.f32 %v3785, 1.442695
    %v3796 = vpow.pop %v3795
    %v3797 = vmul.f32 %v3786, 1.442695
    %v3798 = vpow.pop %v3797
    %v3799 = vmul.f32 %v3787, 1.442695
    %v3800 = vpow.pop %v3799
    %v3801 = vmul.f32 %v3788, 1.442695
    %v3802 = vpow.pop %v3801
    %v3803 = vmul.f32 %v3789, 1.442695
    %v3804 = vpow.pop %v3803
    %v3805 = vmul.f32 %v3790, 1.442695
    %v3806 = vpow.pop %v3805
    %v3807 = vadd.f32 %v3792, 1.0
    %v3808 = vadd.f32 %v3794, 1.0
    %v3809 = vadd.f32 %v3796, 1.0
    %v3810 = vadd.f32 %v3798, 1.0
    %v3811 = vadd.f32 %v3800, 1.0
    %v3812 = vadd.f32 %v3802, 1.0
    %v3813 = vadd.f32 %v3804, 1.0
    %v3814 = vadd.f32 %v3806, 1.0
    %v3815 = vrcp.pop %v3807
    %v3816 = vmul.f32 1.0, %v3815
    %v3817 = vrcp.pop %v3808
    %v3818 = vmul.f32 1.0, %v3817
    %v3819 = vrcp.pop %v3809
    %v3820 = vmul.f32 1.0, %v3819
    %v3821 = vrcp.pop %v3810
    %v3822 = vmul.f32 1.0, %v3821
    %v3823 = vrcp.pop %v3811
    %v3824 = vmul.f32 1.0, %v3823
    %v3825 = vrcp.pop %v3812
    %v3826 = vmul.f32 1.0, %v3825
    %v3827 = vrcp.pop %v3813
    %v3828 = vmul.f32 1.0, %v3827
    %v3829 = vrcp.pop %v3814
    %v3830 = vmul.f32 1.0, %v3829
    %v3832 = vrot.slane %v3684, 1
    %v3833 = vrot.slane %v3684, 2
    %v3834 = vrot.slane %v3684, 3
    %v3835 = vrot.slane %v3684, 4
    %v3836 = vrot.slane %v3684, 5
    %v3837 = vrot.slane %v3684, 6
    %v3838 = vrot.slane %v3684, 7
    %v3847 = vmul.f32 %v3744, %v3832
    %v3848 = vmul.f32 %v3746, %v3833
    %v3849 = vmul.f32 %v3748, %v3834
    %v3850 = vmul.f32 %v3750, %v3835
    %v3851 = vmul.f32 %v3752, %v3836
    %v3852 = vmul.f32 %v3754, %v3837
    %v3853 = vmul.f32 %v3756, %v3838
    %v3854 = vmul.f32 %v3758, %v3684
    %v3855 = vadd.f32 %v686, %v3847
    %v3856 = vadd.f32 %v691, %v3848
    %v3857 = vadd.f32 %v696, %v3849
    %v3858 = vadd.f32 %v701, %v3850
    %v3859 = vadd.f32 %v706, %v3851
    %v3860 = vadd.f32 %v711, %v3852
    %v3861 = vadd.f32 %v716, %v3853
    %v3862 = vadd.f32 %v721, %v3854
    %v3863 = vtanh.pop %v3855
    %v3864 = vtanh.pop %v3856
    %v3865 = vtanh.pop %v3857
    %v3866 = vtanh.pop %v3858
    %v3867 = vtanh.pop %v3859
    %v3868 = vtanh.pop %v3860
    %v3869 = vtanh.pop %v3861
    %v3870 = vtanh.pop %v3862
    %v3871 = vsub.f32 1.0, %v3816
    %v3872 = vsub.f32 1.0, %v3818
    %v3873 = vsub.f32 1.0, %v3820
    %v3874 = vsub.f32 1.0, %v3822
    %v3875 = vsub.f32 1.0, %v3824
    %v3876 = vsub.f32 1.0, %v3826
    %v3877 = vsub.f32 1.0, %v3828
    %v3878 = vsub.f32 1.0, %v3830
    %v3879 = vmul.f32 %v3871, %v3863
    %v3880 = vmul.f32 %v3872, %v3864
    %v3881 = vmul.f32 %v3873, %v3865
    %v3882 = vmul.f32 %v3874, %v3866
    %v3883 = vmul.f32 %v3875, %v3867
    %v3884 = vmul.f32 %v3876, %v3868
    %v3885 = vmul.f32 %v3877, %v3869
    %v3886 = vmul.f32 %v3878, %v3870
    %v3887 = vrot.slane %v3515, 7
    %v3888 = vrot.slane %v3516, 7
    %v3889 = vrot.slane %v3517, 7
    %v3890 = vrot.slane %v3518, 7
    %v3891 = vrot.slane %v3519, 7
    %v3892 = vrot.slane %v3520, 7
    %v3893 = vrot.slane %v3521, 7
    %v3902 = vmul.f32 %v3816, %v3887
    %v3903 = vmul.f32 %v3818, %v3888
    %v3904 = vmul.f32 %v3820, %v3889
    %v3905 = vmul.f32 %v3822, %v3890
    %v3906 = vmul.f32 %v3824, %v3891
    %v3907 = vmul.f32 %v3826, %v3892
    %v3908 = vmul.f32 %v3828, %v3893
    %v3909 = vmul.f32 %v3830, %v3543
    %v3910 = vadd.f32 %v3879, %v3902
    %v3911 = vadd.f32 %v3880, %v3903
    %v3912 = vadd.f32 %v3881, %v3904
    %v3913 = vadd.f32 %v3882, %v3905
    %v3914 = vadd.f32 %v3883, %v3906
    %v3915 = vadd.f32 %v3884, %v3907
    %v3916 = vadd.f32 %v3885, %v3908
    %v3917 = vadd.f32 %v3886, %v3909
    %v3918 = vld [vmem:[%s6] sm:$0xff]
    %v3919 = vld [vmem:[%s6 + $0x8] sm:$0xff]
    %v3920 = vld [vmem:[%s6 + $0x10] sm:$0xff]
    %v3921 = vld [vmem:[%s6 + $0x18] sm:$0xff]
    %v3922 = vld [vmem:[%s6 + $0x20] sm:$0xff]
    %v3923 = vld [vmem:[%s6 + $0x28] sm:$0xff]
    %v3924 = vld [vmem:[%s6 + $0x30] sm:$0xff]
    %v3925 = vld [vmem:[%s6 + $0x38] sm:$0xff]
    %v3926 = vld [vmem:[%s6 + $0x40] sm:$0xff]
    %v3927 = vld [vmem:[%s6 + $0x48] sm:$0xff]
    %v3928 = vld [vmem:[%s6 + $0x50] sm:$0xff]
    %v3929 = vld [vmem:[%s6 + $0x58] sm:$0xff]
    %v3930 = vld [vmem:[%s6 + $0x60] sm:$0xff]
    %v3931 = vld [vmem:[%s6 + $0x68] sm:$0xff]
    %v3932 = vld [vmem:[%s6 + $0x70] sm:$0xff]
    %v3933 = vld [vmem:[%s6 + $0x78] sm:$0xff]
    %v3934 = vld [vmem:[%s7] sm:$0x1]
    %v3936 = vlaneseq
    %v3937 = vshrl.u32 %v3936, 7
    %v3938 = vsub.s32 0, %v3937
    %v3939 = vrot.slane %v3934, %v3938
    %v3949 = vrot.slane %v3910, 7
    %v3950 = vrot.slane %v3911, 6
    %v3951 = vsel %vm1155, %v3950, %v3949
    %v3952 = vrot.slane %v3912, 5
    %v3953 = vsel %vm1158, %v3952, %v3951
    %v3954 = vrot.slane %v3913, 4
    %v3955 = vsel %vm1161, %v3954, %v3953
    %v3956 = vrot.slane %v3914, 3
    %v3957 = vsel %vm1164, %v3956, %v3955
    %v3958 = vrot.slane %v3915, 2
    %v3959 = vsel %vm1167, %v3958, %v3957
    %v3960 = vrot.slane %v3916, 1
    %v3961 = vsel %vm1170, %v3960, %v3959
    %v3962 = vsel %vm1173, %v3917, %v3961
    %3964 = vmatprep.subr.mxu0 0.0
    %3965 = vmatpush1.msra.mxu0 %v3933
    %3966 = vmatprep.subr.mxu0 0.0
    %3967 = vmatpush1.msra.mxu0 %v3932
    %3968 = vmatprep.subr.mxu0 0.0
    %3969 = vmatpush1.msra.mxu0 %v3931
    %3970 = vmatprep.subr.mxu0 0.0
    %3971 = vmatpush1.msra.mxu0 %v3930
    %3972 = vmatprep.subr.mxu0 0.0
    %3973 = vmatpush1.msra.mxu0 %v3929
    %3974 = vmatprep.subr.mxu0 0.0
    %3975 = vmatpush1.msra.mxu0 %v3928
    %3976 = vmatprep.subr.mxu0 0.0
    %3977 = vmatpush1.msra.mxu0 %v3927
    %3978 = vmatprep.subr.mxu0 0.0
    %3979 = vmatpush1.msra.mxu0 %v3926
    %3980 = vmatprep.subr.mxu0 0.0
    %3981 = vmatpush1.msra.mxu0 %v3925
    %3982 = vmatprep.subr.mxu0 0.0
    %3983 = vmatpush1.msra.mxu0 %v3924
    %3984 = vmatprep.subr.mxu0 0.0
    %3985 = vmatpush1.msra.mxu0 %v3923
    %3986 = vmatprep.subr.mxu0 0.0
    %3987 = vmatpush1.msra.mxu0 %v3922
    %3988 = vmatprep.subr.mxu0 0.0
    %3989 = vmatpush1.msra.mxu0 %v3921
    %3990 = vmatprep.subr.mxu0 0.0
    %3991 = vmatpush1.msra.mxu0 %v3920
    %3992 = vmatprep.subr.mxu0 0.0
    %3993 = vmatpush1.msra.mxu0 %v3919
    %3994 = vmatprep.subr.mxu0 0.0
    %3995 = vmatpush1.msra.mxu0 %v3918
    %3996 = vmatprep.subr.mxu0 0.0
    %3997 = vmatpush2.msra.mxu0 0.0
    %3998 = vmatprep.subr.mxu0 0.0
    %3999 = vmatpush2.msra.mxu0 0.0
    %4000 = vmatprep.subr.mxu0 0.0
    %4001 = vmatpush2.msra.mxu0 0.0
    %4002 = vmatprep.subr.mxu0 0.0
    %4003 = vmatpush2.msra.mxu0 0.0
    %4004 = vmatprep.subr.mxu0 0.0
    %4005 = vmatpush2.msra.mxu0 0.0
    %4006 = vmatprep.subr.mxu0 0.0
    %4007 = vmatpush2.msra.mxu0 0.0
    %4008 = vmatprep.subr.mxu0 0.0
    %4009 = vmatpush2.msra.mxu0 0.0
    %4010 = vmatprep.subr.mxu0 0.0
    %4011 = vmatpush2.msra.mxu0 0.0
    %4012 = vmatprep.subr.mxu0 0.0
    %4013 = vmatpush2.msra.mxu0 0.0
    %4014 = vmatprep.subr.mxu0 0.0
    %4015 = vmatpush2.msra.mxu0 0.0
    %4016 = vmatprep.subr.mxu0 0.0
    %4017 = vmatpush2.msra.mxu0 0.0
    %4018 = vmatprep.subr.mxu0 0.0
    %4019 = vmatpush2.msra.mxu0 0.0
    %4020 = vmatprep.subr.mxu0 0.0
    %4021 = vmatpush2.msra.mxu0 0.0
    %4022 = vmatprep.subr.mxu0 0.0
    %4023 = vmatpush2.msra.mxu0 0.0
    %4024 = vmatprep.subr.mxu0 0.0
    %4025 = vmatpush2.msra.mxu0 0.0
    %4026 = vmatprep.subr.mxu0 0.0
    %4027 = vmatpush2.msra.mxu0 0.0
    %4028 = vmatprep.mubr.f32.mxu0 0.0
    %4029 = vmatmul.mubr.f32.gmra.mxu0 %v3962
    %v4030 = vpop.f32.mrf.mxu0
    %v4031 = vadd.f32 %v3939, %v4030
    %v4032 = vpop.f32.mrf.mxu0
    %4033 = vdwg.mxu0
    %4034 = vst [vmem:[#allocation5] sm:$0xff] %v4031
    // Predicated region
    $region38: #{tpu_custom_call.1} parent=1 // pred_check
      _
    $region39: #{tpu_custom_call.1} parent=1 // pred_check_branch
      %4036 = sbr.rel (0) target = $region41
    $region40: #{tpu_custom_call.1} parent=1 // pred_region
      %s4038 = ssub.s32 128, 128
      %4039 = vsyncadd [#allocation4], %s4038
      %s4041 = sshll.u32 [#allocation5], 4
      %s4042 = int_to_ptr.vmem [resolvable:$true] %s4041
      %4044 = dma.vmem_to_hbm [thread:$0]  %s4042, 128, %s8, [#allocation4]
    $region41: #{tpu_custom_call.1} parent=1 // pred_fallthru
      _
    // Predicated region
    $region42: #{tpu_custom_call.1} parent=1 // pred_check
      _
    $region43: #{tpu_custom_call.1} parent=1 // pred_check_branch
      %4046 = sbr.rel (0) target = $region45
    $region44: #{tpu_custom_call.1} parent=1 // pred_region
      %4047 = dma.done [#allocation4], 128
    $region45: #{tpu_custom_call.1} parent=1 // pred_fallthru
      _
    %4048 = vsyncpa [#allocation3], 1
    %4049 = vsyncpa [#allocation4], 1

</llo_original>
